<compile_context>
chip_gen: v5e
topology: v5e:2x2
jax: 0.10.0
libtpu: 0.0.40
codegen_flags: <defaults>
</compile_context>

<pallas_src>
import functools

import jax
import jax.numpy as jnp
from jax.experimental import pallas as pl
from jax.experimental.pallas import tpu as pltpu

LANE = 128


def _round_up(x, m):
    return (x + m - 1) // m * m


def _pick_vmem_limit():
    """Generation-aware scoped-VMEM cap (~3/4 of physical, <= 100 MiB)."""
    cap = 64 * 1024 * 1024                       # conservative fallback (v7x)
    try:
        cap = int(getattr(pltpu.get_tpu_info(), "vmem_capacity_bytes", cap))
    except Exception:
        pass
    return int(min(cap * 3 // 4, 100 * 1024 * 1024))


# ----------------------------------------------------------------------------
# Fused Pallas kernel: (pad-to-match + channel concat) -> conv3x3+BN+ReLU
#                      -> [Dropout: identity in eval] -> conv3x3+BN+ReLU
# One grid step = one batch image. All intermediates stay in VMEM.
# ----------------------------------------------------------------------------
def _up_fused_kernel(x1_ref, x2_ref, w1_ref, b1_ref, w2_ref, b2_ref, o_ref,
                     xcat_ref, hpad_ref, patches_ref,
                     *, pad_top, pad_left, compute_dtype):
    # x1_ref : (1, H1u, W1u, C1)        upsampled low-res features
    # x2_ref : (1, H,   W,   C2)        skip connection
    # w1_ref : (9*(C1+C2), Cmid_pad)    conv1 weights, taps packed into K,
    #                                   BN1 scale folded in, Cout lane-padded
    # b1_ref : (1, Cmid_pad)            folded BN1 bias (zero-padded, f32)
    # w2_ref : (9*Cmid_pad, Cout_pad)   conv2 weights (same packing/padding)
    # b2_ref : (1, Cout_pad)            folded BN2 bias (zero-padded, f32)
    # o_ref  : (1, H, W, Cout_pad)      lane-dense output
    # xcat_ref   : (H+2, W+2, C1+C2)    VMEM scratch: halo-padded concat input
    # hpad_ref   : (H+2, W+2, Cmid_pad) VMEM scratch: halo-padded conv1 output
    # patches_ref: (H*W, 9*Cin) or dummy; K-packed taps (only when Cin < 128)
    H, W = o_ref.shape[1], o_ref.shape[2]
    H1u, W1u = x1_ref.shape[1], x1_ref.shape[2]
    C1, C2 = x1_ref.shape[3], x2_ref.shape[3]
    Cin = C1 + C2
    Cmid_pad = hpad_ref.shape[2]
    Cout_pad = o_ref.shape[3]

    def zero_halo_border(ref, c):
        # Only the 1-pixel conv halo needs zeros; it is never written by the
        # data stores below.  O(H+W) stores per step instead of O(H*W).
        ref[0:1, :, :] = jnp.zeros((1, W + 2, c), ref.dtype)
        ref[H + 1:H + 2, :, :] = jnp.zeros((1, W + 2, c), ref.dtype)
        ref[:, 0:1, :] = jnp.zeros((H + 2, 1, c), ref.dtype)
        ref[:, W + 1:W + 2, :] = jnp.zeros((H + 2, 1, c), ref.dtype)

    zero_halo_border(xcat_ref, Cin)
    zero_halo_border(hpad_ref, Cmid_pad)

    # Build concat([x2, pad(up(x1))], channel) directly in the halo scratch --
    # no wrapper-side jnp.pad / jnp.concatenate HBM traffic.
    xcat_ref[1:1 + H, 1:1 + W, :C2] = x2_ref[0]
    if (H1u < H) or (W1u < W):
        # F.pad gap around the upsampled map (only when shapes differ).
        xcat_ref[1:1 + H, 1:1 + W, C2:] = jnp.zeros((H, W, C1), xcat_ref.dtype)
    xcat_ref[1 + pad_top:1 + pad_top + H1u,
             1 + pad_left:1 + pad_left + W1u, C2:] = x1_ref[0]

    def conv3x3(src_ref, cin, w_ref, bias):
        """3x3 / pad=1 conv as MXU matmul(s); folded-BN bias + ReLU epilogue."""
        if cin < LANE:
            # Small contraction: pack the 9 taps along K (K = 9*cin) so a
            # single matmul still fills the MXU.  Taps go straight into a
            # preallocated VMEM scratch (no jnp.concatenate copy).
            for dy in range(3):
                for dx in range(3):
                    t = dy * 3 + dx
                    tap = src_ref[dy:dy + H, dx:dx + W, :].reshape(H * W, cin)
                    patches_ref[:, t * cin:(t + 1) * cin] = tap.astype(
                        patches_ref.dtype)
            acc = jnp.dot(patches_ref[...], w_ref[...],
                          preferred_element_type=jnp.float32)
        else:
            # Large contraction: per-tap accumulation -- never materialise
            # the (H*W, 9*cin) patch matrix (does not fit VMEM at production
            # sizes); MXU utilisation is unchanged (K = cin >= 128).
            acc = jnp.zeros((H * W, w_ref.shape[1]), jnp.float32)
            for dy in range(3):
                for dx in range(3):
                    t = dy * 3 + dx
                    tap = src_ref[dy:dy + H, dx:dx + W, :].reshape(H * W, cin)
                    acc = acc + jnp.dot(tap.astype(compute_dtype),
                                        w_ref[t * cin:(t + 1) * cin, :],
                                        preferred_element_type=jnp.float32)
        return jnp.maximum(acc + bias, 0.0)          # folded BN bias + ReLU

    h1 = conv3x3(xcat_ref, Cin, w1_ref, b1_ref[...])        # (H*W, Cmid_pad)
    # TODO(synk): Dropout(p=0.2) -> identity (eval mode only).
    hpad_ref[1:1 + H, 1:1 + W, :] = h1.reshape(H, W, Cmid_pad)

    y = conv3x3(hpad_ref, Cmid_pad, w2_ref, b2_ref[...])    # (H*W, Cout_pad)
    o_ref[0] = y.reshape(H, W, Cout_pad).astype(o_ref.dtype)


# ----------------------------------------------------------------------------
# Wrapper-side helpers (plain JAX, small tensors only)
# ----------------------------------------------------------------------------
def _interp_matrix(n_in, n_out):
    """Dense 1-D linear-interp matrix for Upsample(align_corners=True)."""
    denom = max(n_out - 1, 1)
    src = jnp.arange(n_out, dtype=jnp.float32) * ((n_in - 1) / denom)
    idx = jnp.arange(n_in, dtype=jnp.float32)
    # hat weights: w[o, i] = max(0, 1 - |src_o - i|)  (exact linear interp)
    return jnp.maximum(0.0, 1.0 - jnp.abs(src[:, None] - idx[None, :]))


def bilinear_upsample_x2_nhwc(x):
    """nn.Upsample(scale_factor=2, mode='bilinear', align_corners=True), NHWC.

    Gather-free: separable interpolation as two small dense matmuls.
    """
    _, h, w, _ = x.shape
    uy = _interp_matrix(h, 2 * h)                      # (2H, H)
    ux = _interp_matrix(w, 2 * w)                      # (2W, W)
    x = jnp.einsum('oh,nhwc->nowc', uy, x)
    x = jnp.einsum('vw,nowc->novc', ux, x)
    return x


def _fold_bn_into_conv(w_hwio, gamma, beta, mean, var, eps=1e-5):
    """Fold eval-mode BatchNorm into the preceding bias-free conv weights."""
    scale = gamma / jnp.sqrt(var + eps)
    bias = beta - mean * scale
    return w_hwio * scale[None, None, None, :], bias


def _prepare_packed_weights(params, compute_dtype, lane=LANE):
    w1, b1 = _fold_bn_into_conv(params["w1"], params["bn1_gamma"],
                                params["bn1_beta"], params["bn1_mean"],
                                params["bn1_var"])
    w2, b2 = _fold_bn_into_conv(params["w2"], params["bn2_gamma"],
                                params["bn2_beta"], params["bn2_mean"],
                                params["bn2_var"])
    cin, cmid = w1.shape[2], w1.shape[3]
    cout = w2.shape[3]
    cmid_pad = _round_up(cmid, lane)
    cout_pad = _round_up(cout, lane)

    # conv1: (3,3,Cin,Cmid) -> taps packed into K -> (9*Cin, Cmid_pad)
    w1p = jnp.pad(w1.reshape(9 * cin, cmid),
                  ((0, 0), (0, cmid_pad - cmid))).astype(compute_dtype)
    b1p = jnp.pad(b1, (0, cmid_pad - cmid)).reshape(1, cmid_pad)

    # conv2: pad the *input* channel axis to Cmid_pad first so the packed K
    # layout matches the lane-padded intermediate, then lane-pad Cout.
    w2 = jnp.pad(w2, ((0, 0), (0, 0), (0, cmid_pad - cmid), (0, 0)))
    w2p = jnp.pad(w2.reshape(9 * cmid_pad, cout),
                  ((0, 0), (0, cout_pad - cout))).astype(compute_dtype)
    b2p = jnp.pad(b2, (0, cout_pad - cout)).reshape(1, cout_pad)
    return w1p, b1p, w2p, b2p, cmid_pad, cout_pad


def up_forward(x1_nchw, x2_nchw, params, *, compute_dtype=jnp.bfloat16):
    # One NCHW <-> NHWC transpose pair at the module boundary (channels map to
    # the TPU lane axis).  TODO(synk): keep the whole model NHWC end-to-end to
    # drop these boundary transposes and store the output in bf16.
    x1 = jnp.transpose(x1_nchw, (0, 2, 3, 1))
    x2 = jnp.transpose(x2_nchw, (0, 2, 3, 1))

    x1u = bilinear_upsample_x2_nhwc(x1)

    n, h, w, c2 = x2.shape
    _, h1u, w1u, c1 = x1u.shape
    diff_y, diff_x = h - h1u, w - w1u
    pad_top, pad_left = diff_y // 2, diff_x // 2        # F.pad placement

    w1p, b1p, w2p, b2p, cmid_pad, cout_pad = _prepare_packed_weights(
        params, compute_dtype)
    cin = c1 + c2
    cout = params["w2"].shape[3]

    # K-packed patches scratch only exists when conv1's contraction is small.
    patches_shape = (h * w, 9 * cin) if cin < LANE else (8, LANE)

    kernel = functools.partial(_up_fused_kernel,
                               pad_top=pad_top, pad_left=pad_left,
                               compute_dtype=compute_dtype)

    out_pad = pl.pallas_call(
        kernel,
        out_shape=jax.ShapeDtypeStruct((n, h, w, cout_pad), jnp.float32),
        grid=(n,),
        in_specs=[
            pl.BlockSpec((1, h1u, w1u, c1), lambda i: (i, 0, 0, 0)),
            pl.BlockSpec((1, h, w, c2), lambda i: (i, 0, 0, 0)),
            pl.BlockSpec((9 * cin, cmid_pad), lambda i: (0, 0)),
            pl.BlockSpec((1, cmid_pad), lambda i: (0, 0)),
            pl.BlockSpec((9 * cmid_pad, cout_pad), lambda i: (0, 0)),
            pl.BlockSpec((1, cout_pad), lambda i: (0, 0)),
        ],
        out_specs=pl.BlockSpec((1, h, w, cout_pad), lambda i: (i, 0, 0, 0)),
        scratch_shapes=[
            pltpu.VMEM((h + 2, w + 2, cin), jnp.float32),
            pltpu.VMEM((h + 2, w + 2, cmid_pad), jnp.float32),
            pltpu.VMEM(patches_shape, compute_dtype),
        ],
        compiler_params=pltpu.CompilerParams(
            dimension_semantics=("parallel",),
            vmem_limit_bytes=_pick_vmem_limit(),
        ),
    )(x1u, x2, w1p, b1p, w2p, b2p)

    # Drop the lane padding; back to NCHW for the module contract.
    y = out_pad[..., :cout]
    return jnp.transpose(y, (0, 3, 1, 2))


# ----------------------------------------------------------------------------
# Deterministic parameter construction (shapes from the module __init__)
# ----------------------------------------------------------------------------
def make_params(key, in_channels, out_channels):
    mid_channels = in_channels // 2        # DoubleConv(..., in_channels // 2)
    ks = jax.random.split(key, 10)
    return {
        # conv1: Conv2d(in_channels, mid_channels, 3, padding=1, bias=False)
        "w1": 0.1 * jax.random.normal(ks[0], (3, 3, in_channels, mid_channels),
                                      jnp.float32),
        "bn1_gamma": 1.0 + 0.05 * jax.random.normal(ks[1], (mid_channels,), jnp.float32),
        "bn1_beta": 0.05 * jax.random.normal(ks[2], (mid_channels,), jnp.float32),
        "bn1_mean": 0.05 * jax.random.normal(ks[3], (mid_channels,), jnp.float32),
        "bn1_var": 1.0 + 0.1 * jnp.abs(jax.random.normal(ks[4], (mid_channels,), jnp.float32)),
        # conv2: Conv2d(mid_channels, out_channels, 3, padding=1, bias=False)
        "w2": 0.1 * jax.random.normal(ks[5], (3, 3, mid_channels, out_channels),
                                      jnp.float32),
        "bn2_gamma": 1.0 + 0.05 * jax.random.normal(ks[6], (out_channels,), jnp.float32),
        "bn2_beta": 0.05 * jax.random.normal(ks[7], (out_channels,), jnp.float32),
        "bn2_mean": 0.05 * jax.random.normal(ks[8], (out_channels,), jnp.float32),
        "bn2_var": 1.0 + 0.1 * jnp.abs(jax.random.normal(ks[9], (out_channels,), jnp.float32)),
    }


if __name__ == "__main__":
    key = jax.random.PRNGKey(0)
    k_x1, k_x2, k_p = jax.random.split(key, 3)

    # Up(in_channels=8, out_channels=4, bilinear=True)
    in_channels, out_channels = 8, 4
    N = 2
    # x1: low-res feature map (in_channels//2 ch), x2: skip connection.
    x1 = jax.random.normal(k_x1, (N, in_channels // 2, 8, 8), jnp.float32)
    x2 = jax.random.normal(k_x2, (N, in_channels // 2, 16, 16), jnp.float32)

    params = make_params(k_p, in_channels, out_channels)

    fwd = jax.jit(functools.partial(up_forward, params=params))
    out = fwd(x1, x2)
    jax.block_until_ready(out)

    assert out.shape == (N, out_channels, 16, 16), out.shape
    print("KERNEL_OK")
</pallas_src>

<mosaic_0001>
module attributes {stable_mosaic.version = 11 : i64} {
  func.func @_up_fused_kernel(%arg0: i32, %arg1: memref<1x16x16x4xf32, #tpu.memory_space<vmem>>, %arg2: memref<1x16x16x4xf32, #tpu.memory_space<vmem>>, %arg3: memref<72x128xbf16, #tpu.memory_space<vmem>>, %arg4: memref<1x128xf32, #tpu.memory_space<vmem>>, %arg5: memref<1152x128xbf16, #tpu.memory_space<vmem>>, %arg6: memref<1x128xf32, #tpu.memory_space<vmem>>, %arg7: memref<1x16x16x128xf32, #tpu.memory_space<vmem>>, %arg8: memref<18x18x8xf32, #tpu.memory_space<vmem>>, %arg9: memref<18x18x128xf32, #tpu.memory_space<vmem>>, %arg10: memref<256x72xbf16, #tpu.memory_space<vmem>>) attributes {dimension_semantics = [#tpu.dimension_semantics<parallel>], iteration_bounds = array<i64: 2>, scalar_prefetch = 0 : i64, scratch_operands = 3 : i64, tpu.core_type = #tpu.core_type<tc>, window_params = [{transform_indices = @transform_0, window_bounds = array<i64: 1, 16, 16, 4>}, {transform_indices = @transform_1, window_bounds = array<i64: 1, 16, 16, 4>}, {pipeline_mode = #tpu.pipeline_mode<synchronous>, transform_indices = @transform_2, window_bounds = array<i64: 72, 128>}, {pipeline_mode = #tpu.pipeline_mode<synchronous>, transform_indices = @transform_3, window_bounds = array<i64: 1, 128>}, {pipeline_mode = #tpu.pipeline_mode<synchronous>, transform_indices = @transform_4, window_bounds = array<i64: 1152, 128>}, {pipeline_mode = #tpu.pipeline_mode<synchronous>, transform_indices = @transform_5, window_bounds = array<i64: 1, 128>}, {transform_indices = @transform_6, window_bounds = array<i64: 1, 16, 16, 128>}]} {
    %cst = arith.constant 0.000000e+00 : f32
    %0 = vector.broadcast %cst : f32 to vector<1x18x8xf32>
    %c0 = arith.constant 0 : index
    %c0_0 = arith.constant 0 : index
    %c0_1 = arith.constant 0 : index
    %1 = vector.load %arg8[%c0, %c0_0, %c0_1] : memref<18x18x8xf32, #tpu.memory_space<vmem>>, vector<1x18x8xf32>
    tpu.vector_store %arg8[%c0, %c0_0, %c0_1], %0 {strides = array<i32>} : memref<18x18x8xf32, #tpu.memory_space<vmem>>, vector<1x18x8xf32>,
    %cst_2 = arith.constant 0.000000e+00 : f32
    %2 = vector.broadcast %cst_2 : f32 to vector<1x18x8xf32>
    %c17 = arith.constant 17 : index
    %c0_3 = arith.constant 0 : index
    %c0_4 = arith.constant 0 : index
    %3 = vector.load %arg8[%c17, %c0_3, %c0_4] : memref<18x18x8xf32, #tpu.memory_space<vmem>>, vector<1x18x8xf32>
    tpu.vector_store %arg8[%c17, %c0_3, %c0_4], %2 {strides = array<i32>} : memref<18x18x8xf32, #tpu.memory_space<vmem>>, vector<1x18x8xf32>,
    %cst_5 = arith.constant 0.000000e+00 : f32
    %4 = vector.broadcast %cst_5 : f32 to vector<18x1x8xf32>
    %c0_6 = arith.constant 0 : index
    %c0_7 = arith.constant 0 : index
    %c0_8 = arith.constant 0 : index
    %5 = vector.load %arg8[%c0_6, %c0_7, %c0_8] : memref<18x18x8xf32, #tpu.memory_space<vmem>>, vector<18x1x8xf32>
    tpu.vector_store %arg8[%c0_6, %c0_7, %c0_8], %4 {strides = array<i32>} : memref<18x18x8xf32, #tpu.memory_space<vmem>>, vector<18x1x8xf32>,
    %cst_9 = arith.constant 0.000000e+00 : f32
    %6 = vector.broadcast %cst_9 : f32 to vector<18x1x8xf32>
    %c0_10 = arith.constant 0 : index
    %c17_11 = arith.constant 17 : index
    %c0_12 = arith.constant 0 : index
    %7 = vector.load %arg8[%c0_10, %c17_11, %c0_12] : memref<18x18x8xf32, #tpu.memory_space<vmem>>, vector<18x1x8xf32>
    tpu.vector_store %arg8[%c0_10, %c17_11, %c0_12], %6 {strides = array<i32>} : memref<18x18x8xf32, #tpu.memory_space<vmem>>, vector<18x1x8xf32>,
    %cst_13 = arith.constant 0.000000e+00 : f32
    %8 = vector.broadcast %cst_13 : f32 to vector<1x18x128xf32>
    %c0_14 = arith.constant 0 : index
    %c0_15 = arith.constant 0 : index
    %c0_16 = arith.constant 0 : index
    %9 = vector.load %arg9[%c0_14, %c0_15, %c0_16] : memref<18x18x128xf32, #tpu.memory_space<vmem>>, vector<1x18x128xf32>
    tpu.vector_store %arg9[%c0_14, %c0_15, %c0_16], %8 {strides = array<i32>} : memref<18x18x128xf32, #tpu.memory_space<vmem>>, vector<1x18x128xf32>,
    %cst_17 = arith.constant 0.000000e+00 : f32
    %10 = vector.broadcast %cst_17 : f32 to vector<1x18x128xf32>
    %c17_18 = arith.constant 17 : index
    %c0_19 = arith.constant 0 : index
    %c0_20 = arith.constant 0 : index
    %11 = vector.load %arg9[%c17_18, %c0_19, %c0_20] : memref<18x18x128xf32, #tpu.memory_space<vmem>>, vector<1x18x128xf32>
    tpu.vector_store %arg9[%c17_18, %c0_19, %c0_20], %10 {strides = array<i32>} : memref<18x18x128xf32, #tpu.memory_space<vmem>>, vector<1x18x128xf32>,
    %cst_21 = arith.constant 0.000000e+00 : f32
    %12 = vector.broadcast %cst_21 : f32 to vector<18x1x128xf32>
    %c0_22 = arith.constant 0 : index
    %c0_23 = arith.constant 0 : index
    %c0_24 = arith.constant 0 : index
    %13 = vector.load %arg9[%c0_22, %c0_23, %c0_24] : memref<18x18x128xf32, #tpu.memory_space<vmem>>, vector<18x1x128xf32>
    tpu.vector_store %arg9[%c0_22, %c0_23, %c0_24], %12 {strides = array<i32>} : memref<18x18x128xf32, #tpu.memory_space<vmem>>, vector<18x1x128xf32>,
    %cst_25 = arith.constant 0.000000e+00 : f32
    %14 = vector.broadcast %cst_25 : f32 to vector<18x1x128xf32>
    %c0_26 = arith.constant 0 : index
    %c17_27 = arith.constant 17 : index
    %c0_28 = arith.constant 0 : index
    %15 = vector.load %arg9[%c0_26, %c17_27, %c0_28] : memref<18x18x128xf32, #tpu.memory_space<vmem>>, vector<18x1x128xf32>
    tpu.vector_store %arg9[%c0_26, %c17_27, %c0_28], %14 {strides = array<i32>} : memref<18x18x128xf32, #tpu.memory_space<vmem>>, vector<18x1x128xf32>,
    %c0_29 = arith.constant 0 : index
    %c0_30 = arith.constant 0 : index
    %c0_31 = arith.constant 0 : index
    %c0_32 = arith.constant 0 : index
    %16 = vector.load %arg2[%c0_29, %c0_30, %c0_31, %c0_32] : memref<1x16x16x4xf32, #tpu.memory_space<vmem>>, vector<1x16x16x4xf32>
    %17 = vector.shape_cast %16 : vector<1x16x16x4xf32> to vector<16x16x4xf32>
    %c1 = arith.constant 1 : index
    %c1_33 = arith.constant 1 : index
    %c0_34 = arith.constant 0 : index
    %18 = vector.load %arg8[%c1, %c1_33, %c0_34] : memref<18x18x8xf32, #tpu.memory_space<vmem>>, vector<16x16x4xf32>
    tpu.vector_store %arg8[%c1, %c1_33, %c0_34], %17 {strides = array<i32>} : memref<18x18x8xf32, #tpu.memory_space<vmem>>, vector<16x16x4xf32>,
    %c0_35 = arith.constant 0 : index
    %c0_36 = arith.constant 0 : index
    %c0_37 = arith.constant 0 : index
    %c0_38 = arith.constant 0 : index
    %19 = vector.load %arg1[%c0_35, %c0_36, %c0_37, %c0_38] : memref<1x16x16x4xf32, #tpu.memory_space<vmem>>, vector<1x16x16x4xf32>
    %20 = vector.shape_cast %19 : vector<1x16x16x4xf32> to vector<16x16x4xf32>
    %c1_39 = arith.constant 1 : index
    %c1_40 = arith.constant 1 : index
    %c4 = arith.constant 4 : index
    %21 = vector.load %arg8[%c1_39, %c1_40, %c4] : memref<18x18x8xf32, #tpu.memory_space<vmem>>, vector<16x16x4xf32>
    tpu.vector_store %arg8[%c1_39, %c1_40, %c4], %20 {strides = array<i32>} : memref<18x18x8xf32, #tpu.memory_space<vmem>>, vector<16x16x4xf32>,
    %c0_41 = arith.constant 0 : index
    %c0_42 = arith.constant 0 : index
    %22 = vector.load %arg4[%c0_41, %c0_42] : memref<1x128xf32, #tpu.memory_space<vmem>>, vector<1x128xf32>
    %c0_43 = arith.constant 0 : index
    %c0_44 = arith.constant 0 : index
    %c0_45 = arith.constant 0 : index
    %23 = vector.load %arg8[%c0_43, %c0_44, %c0_45] : memref<18x18x8xf32, #tpu.memory_space<vmem>>, vector<16x16x8xf32>
    %24 = vector.shape_cast %23 : vector<16x16x8xf32> to vector<256x8xf32>
    %25 = arith.truncf %24 : vector<256x8xf32> to vector<256x8xbf16>
    %c0_46 = arith.constant 0 : index
    %c0_47 = arith.constant 0 : index
    %26 = vector.load %arg10[%c0_46, %c0_47] : memref<256x72xbf16, #tpu.memory_space<vmem>>, vector<256x8xbf16>
    tpu.vector_store %arg10[%c0_46, %c0_47], %25 {strides = array<i32>} : memref<256x72xbf16, #tpu.memory_space<vmem>>, vector<256x8xbf16>,
    %c0_48 = arith.constant 0 : index
    %c1_49 = arith.constant 1 : index
    %c0_50 = arith.constant 0 : index
    %27 = vector.load %arg8[%c0_48, %c1_49, %c0_50] : memref<18x18x8xf32, #tpu.memory_space<vmem>>, vector<16x16x8xf32>
    %28 = vector.shape_cast %27 : vector<16x16x8xf32> to vector<256x8xf32>
    %29 = arith.truncf %28 : vector<256x8xf32> to vector<256x8xbf16>
    %c0_51 = arith.constant 0 : index
    %c8 = arith.constant 8 : index
    %30 = vector.load %arg10[%c0_51, %c8] : memref<256x72xbf16, #tpu.memory_space<vmem>>, vector<256x8xbf16>
    tpu.vector_store %arg10[%c0_51, %c8], %29 {strides = array<i32>} : memref<256x72xbf16, #tpu.memory_space<vmem>>, vector<256x8xbf16>,
    %c0_52 = arith.constant 0 : index
    %c2 = arith.constant 2 : index
    %c0_53 = arith.constant 0 : index
    %31 = vector.load %arg8[%c0_52, %c2, %c0_53] : memref<18x18x8xf32, #tpu.memory_space<vmem>>, vector<16x16x8xf32>
    %32 = vector.shape_cast %31 : vector<16x16x8xf32> to vector<256x8xf32>
    %33 = arith.truncf %32 : vector<256x8xf32> to vector<256x8xbf16>
    %c0_54 = arith.constant 0 : index
    %c16 = arith.constant 16 : index
    %34 = vector.load %arg10[%c0_54, %c16] : memref<256x72xbf16, #tpu.memory_space<vmem>>, vector<256x8xbf16>
    tpu.vector_store %arg10[%c0_54, %c16], %33 {strides = array<i32>} : memref<256x72xbf16, #tpu.memory_space<vmem>>, vector<256x8xbf16>,
    %c1_55 = arith.constant 1 : index
    %c0_56 = arith.constant 0 : index
    %c0_57 = arith.constant 0 : index
    %35 = vector.load %arg8[%c1_55, %c0_56, %c0_57] : memref<18x18x8xf32, #tpu.memory_space<vmem>>, vector<16x16x8xf32>
    %36 = vector.shape_cast %35 : vector<16x16x8xf32> to vector<256x8xf32>
    %37 = arith.truncf %36 : vector<256x8xf32> to vector<256x8xbf16>
    %c0_58 = arith.constant 0 : index
    %c24 = arith.constant 24 : index
    %38 = vector.load %arg10[%c0_58, %c24] : memref<256x72xbf16, #tpu.memory_space<vmem>>, vector<256x8xbf16>
    tpu.vector_store %arg10[%c0_58, %c24], %37 {strides = array<i32>} : memref<256x72xbf16, #tpu.memory_space<vmem>>, vector<256x8xbf16>,
    %c1_59 = arith.constant 1 : index
    %c1_60 = arith.constant 1 : index
    %c0_61 = arith.constant 0 : index
    %39 = vector.load %arg8[%c1_59, %c1_60, %c0_61] : memref<18x18x8xf32, #tpu.memory_space<vmem>>, vector<16x16x8xf32>
    %40 = vector.shape_cast %39 : vector<16x16x8xf32> to vector<256x8xf32>
    %41 = arith.truncf %40 : vector<256x8xf32> to vector<256x8xbf16>
    %c0_62 = arith.constant 0 : index
    %c32 = arith.constant 32 : index
    %42 = vector.load %arg10[%c0_62, %c32] : memref<256x72xbf16, #tpu.memory_space<vmem>>, vector<256x8xbf16>
    tpu.vector_store %arg10[%c0_62, %c32], %41 {strides = array<i32>} : memref<256x72xbf16, #tpu.memory_space<vmem>>, vector<256x8xbf16>,
    %c1_63 = arith.constant 1 : index
    %c2_64 = arith.constant 2 : index
    %c0_65 = arith.constant 0 : index
    %43 = vector.load %arg8[%c1_63, %c2_64, %c0_65] : memref<18x18x8xf32, #tpu.memory_space<vmem>>, vector<16x16x8xf32>
    %44 = vector.shape_cast %43 : vector<16x16x8xf32> to vector<256x8xf32>
    %45 = arith.truncf %44 : vector<256x8xf32> to vector<256x8xbf16>
    %c0_66 = arith.constant 0 : index
    %c40 = arith.constant 40 : index
    %46 = vector.load %arg10[%c0_66, %c40] : memref<256x72xbf16, #tpu.memory_space<vmem>>, vector<256x8xbf16>
    tpu.vector_store %arg10[%c0_66, %c40], %45 {strides = array<i32>} : memref<256x72xbf16, #tpu.memory_space<vmem>>, vector<256x8xbf16>,
    %c2_67 = arith.constant 2 : index
    %c0_68 = arith.constant 0 : index
    %c0_69 = arith.constant 0 : index
    %47 = vector.load %arg8[%c2_67, %c0_68, %c0_69] : memref<18x18x8xf32, #tpu.memory_space<vmem>>, vector<16x16x8xf32>
    %48 = vector.shape_cast %47 : vector<16x16x8xf32> to vector<256x8xf32>
    %49 = arith.truncf %48 : vector<256x8xf32> to vector<256x8xbf16>
    %c0_70 = arith.constant 0 : index
    %c48 = arith.constant 48 : index
    %50 = vector.load %arg10[%c0_70, %c48] : memref<256x72xbf16, #tpu.memory_space<vmem>>, vector<256x8xbf16>
    tpu.vector_store %arg10[%c0_70, %c48], %49 {strides = array<i32>} : memref<256x72xbf16, #tpu.memory_space<vmem>>, vector<256x8xbf16>,
    %c2_71 = arith.constant 2 : index
    %c1_72 = arith.constant 1 : index
    %c0_73 = arith.constant 0 : index
    %51 = vector.load %arg8[%c2_71, %c1_72, %c0_73] : memref<18x18x8xf32, #tpu.memory_space<vmem>>, vector<16x16x8xf32>
    %52 = vector.shape_cast %51 : vector<16x16x8xf32> to vector<256x8xf32>
    %53 = arith.truncf %52 : vector<256x8xf32> to vector<256x8xbf16>
    %c0_74 = arith.constant 0 : index
    %c56 = arith.constant 56 : index
    %54 = vector.load %arg10[%c0_74, %c56] : memref<256x72xbf16, #tpu.memory_space<vmem>>, vector<256x8xbf16>
    tpu.vector_store %arg10[%c0_74, %c56], %53 {strides = array<i32>} : memref<256x72xbf16, #tpu.memory_space<vmem>>, vector<256x8xbf16>,
    %c2_75 = arith.constant 2 : index
    %c2_76 = arith.constant 2 : index
    %c0_77 = arith.constant 0 : index
    %55 = vector.load %arg8[%c2_75, %c2_76, %c0_77] : memref<18x18x8xf32, #tpu.memory_space<vmem>>, vector<16x16x8xf32>
    %56 = vector.shape_cast %55 : vector<16x16x8xf32> to vector<256x8xf32>
    %57 = arith.truncf %56 : vector<256x8xf32> to vector<256x8xbf16>
    %c0_78 = arith.constant 0 : index
    %c64 = arith.constant 64 : index
    %58 = vector.load %arg10[%c0_78, %c64] : memref<256x72xbf16, #tpu.memory_space<vmem>>, vector<256x8xbf16>
    tpu.vector_store %arg10[%c0_78, %c64], %57 {strides = array<i32>} : memref<256x72xbf16, #tpu.memory_space<vmem>>, vector<256x8xbf16>,
    %c0_79 = arith.constant 0 : index
    %c0_80 = arith.constant 0 : index
    %59 = vector.load %arg10[%c0_79, %c0_80] : memref<256x72xbf16, #tpu.memory_space<vmem>>, vector<256x72xbf16>
    %c0_81 = arith.constant 0 : index
    %c0_82 = arith.constant 0 : index
    %60 = vector.load %arg3[%c0_81, %c0_82] : memref<72x128xbf16, #tpu.memory_space<vmem>>, vector<72x128xbf16>
    %cst_83 = arith.constant dense<0.000000e+00> : vector<256x128xf32>
    %61 = tpu.matmul %59, %60, %cst_83 {dimension_numbers = #tpu.dot_dimension_numbers<[1], [0], [0], [1], [0, 0, 1, 1], [], []>} : vector<256x72xbf16>, vector<72x128xbf16>, vector<256x128xf32> -> vector<256x128xf32>
    %62 = vector.broadcast %22 : vector<1x128xf32> to vector<256x128xf32>
    %63 = arith.addf %61, %62 : vector<256x128xf32>
    %cst_84 = arith.constant 0.000000e+00 : f32
    %64 = vector.broadcast %cst_84 : f32 to vector<256x128xf32>
    %65 = arith.maximumf %63, %64 : vector<256x128xf32>
    %66 = vector.shape_cast %65 : vector<256x128xf32> to vector<16x16x128xf32>
    %c1_85 = arith.constant 1 : index
    %c1_86 = arith.constant 1 : index
    %c0_87 = arith.constant 0 : index
    %67 = vector.load %arg9[%c1_85, %c1_86, %c0_87] : memref<18x18x128xf32, #tpu.memory_space<vmem>>, vector<16x16x128xf32>
    tpu.vector_store %arg9[%c1_85, %c1_86, %c0_87], %66 {strides = array<i32>} : memref<18x18x128xf32, #tpu.memory_space<vmem>>, vector<16x16x128xf32>,
    %c0_88 = arith.constant 0 : index
    %c0_89 = arith.constant 0 : index
    %68 = vector.load %arg6[%c0_88, %c0_89] : memref<1x128xf32, #tpu.memory_space<vmem>>, vector<1x128xf32>
    %cst_90 = arith.constant 0.000000e+00 : f32
    %69 = vector.broadcast %cst_90 : f32 to vector<256x128xf32>
    %c0_91 = arith.constant 0 : index
    %c0_92 = arith.constant 0 : index
    %c0_93 = arith.constant 0 : index
    %70 = vector.load %arg9[%c0_91, %c0_92, %c0_93] : memref<18x18x128xf32, #tpu.memory_space<vmem>>, vector<16x16x128xf32>
    %71 = vector.shape_cast %70 : vector<16x16x128xf32> to vector<256x128xf32>
    %72 = arith.truncf %71 : vector<256x128xf32> to vector<256x128xbf16>
    %c0_94 = arith.constant 0 : index
    %c0_95 = arith.constant 0 : index
    %73 = vector.load %arg5[%c0_94, %c0_95] : memref<1152x128xbf16, #tpu.memory_space<vmem>>, vector<128x128xbf16>
    %cst_96 = arith.constant dense<0.000000e+00> : vector<256x128xf32>
    %74 = tpu.matmul %72, %73, %cst_96 {dimension_numbers = #tpu.dot_dimension_numbers<[1], [0], [0], [1], [0, 0, 1, 1], [], []>} : vector<256x128xbf16>, vector<128x128xbf16>, vector<256x128xf32> -> vector<256x128xf32>
    %75 = arith.addf %69, %74 : vector<256x128xf32>
    %c0_97 = arith.constant 0 : index
    %c1_98 = arith.constant 1 : index
    %c0_99 = arith.constant 0 : index
    %76 = vector.load %arg9[%c0_97, %c1_98, %c0_99] : memref<18x18x128xf32, #tpu.memory_space<vmem>>, vector<16x16x128xf32>
    %77 = vector.shape_cast %76 : vector<16x16x128xf32> to vector<256x128xf32>
    %78 = arith.truncf %77 : vector<256x128xf32> to vector<256x128xbf16>
    %c128 = arith.constant 128 : index
    %c0_100 = arith.constant 0 : index
    %79 = vector.load %arg5[%c128, %c0_100] : memref<1152x128xbf16, #tpu.memory_space<vmem>>, vector<128x128xbf16>
    %cst_101 = arith.constant dense<0.000000e+00> : vector<256x128xf32>
    %80 = tpu.matmul %78, %79, %cst_101 {dimension_numbers = #tpu.dot_dimension_numbers<[1], [0], [0], [1], [0, 0, 1, 1], [], []>} : vector<256x128xbf16>, vector<128x128xbf16>, vector<256x128xf32> -> vector<256x128xf32>
    %81 = arith.addf %75, %80 : vector<256x128xf32>
    %c0_102 = arith.constant 0 : index
    %c2_103 = arith.constant 2 : index
    %c0_104 = arith.constant 0 : index
    %82 = vector.load %arg9[%c0_102, %c2_103, %c0_104] : memref<18x18x128xf32, #tpu.memory_space<vmem>>, vector<16x16x128xf32>
    %83 = vector.shape_cast %82 : vector<16x16x128xf32> to vector<256x128xf32>
    %84 = arith.truncf %83 : vector<256x128xf32> to vector<256x128xbf16>
    %c256 = arith.constant 256 : index
    %c0_105 = arith.constant 0 : index
    %85 = vector.load %arg5[%c256, %c0_105] : memref<1152x128xbf16, #tpu.memory_space<vmem>>, vector<128x128xbf16>
    %cst_106 = arith.constant dense<0.000000e+00> : vector<256x128xf32>
    %86 = tpu.matmul %84, %85, %cst_106 {dimension_numbers = #tpu.dot_dimension_numbers<[1], [0], [0], [1], [0, 0, 1, 1], [], []>} : vector<256x128xbf16>, vector<128x128xbf16>, vector<256x128xf32> -> vector<256x128xf32>
    %87 = arith.addf %81, %86 : vector<256x128xf32>
    %c1_107 = arith.constant 1 : index
    %c0_108 = arith.constant 0 : index
    %c0_109 = arith.constant 0 : index
    %88 = vector.load %arg9[%c1_107, %c0_108, %c0_109] : memref<18x18x128xf32, #tpu.memory_space<vmem>>, vector<16x16x128xf32>
    %89 = vector.shape_cast %88 : vector<16x16x128xf32> to vector<256x128xf32>
    %90 = arith.truncf %89 : vector<256x128xf32> to vector<256x128xbf16>
    %c384 = arith.constant 384 : index
    %c0_110 = arith.constant 0 : index
    %91 = vector.load %arg5[%c384, %c0_110] : memref<1152x128xbf16, #tpu.memory_space<vmem>>, vector<128x128xbf16>
    %cst_111 = arith.constant dense<0.000000e+00> : vector<256x128xf32>
    %92 = tpu.matmul %90, %91, %cst_111 {dimension_numbers = #tpu.dot_dimension_numbers<[1], [0], [0], [1], [0, 0, 1, 1], [], []>} : vector<256x128xbf16>, vector<128x128xbf16>, vector<256x128xf32> -> vector<256x128xf32>
    %93 = arith.addf %87, %92 : vector<256x128xf32>
    %c1_112 = arith.constant 1 : index
    %c1_113 = arith.constant 1 : index
    %c0_114 = arith.constant 0 : index
    %94 = vector.load %arg9[%c1_112, %c1_113, %c0_114] : memref<18x18x128xf32, #tpu.memory_space<vmem>>, vector<16x16x128xf32>
    %95 = vector.shape_cast %94 : vector<16x16x128xf32> to vector<256x128xf32>
    %96 = arith.truncf %95 : vector<256x128xf32> to vector<256x128xbf16>
    %c512 = arith.constant 512 : index
    %c0_115 = arith.constant 0 : index
    %97 = vector.load %arg5[%c512, %c0_115] : memref<1152x128xbf16, #tpu.memory_space<vmem>>, vector<128x128xbf16>
    %cst_116 = arith.constant dense<0.000000e+00> : vector<256x128xf32>
    %98 = tpu.matmul %96, %97, %cst_116 {dimension_numbers = #tpu.dot_dimension_numbers<[1], [0], [0], [1], [0, 0, 1, 1], [], []>} : vector<256x128xbf16>, vector<128x128xbf16>, vector<256x128xf32> -> vector<256x128xf32>
    %99 = arith.addf %93, %98 : vector<256x128xf32>
    %c1_117 = arith.constant 1 : index
    %c2_118 = arith.constant 2 : index
    %c0_119 = arith.constant 0 : index
    %100 = vector.load %arg9[%c1_117, %c2_118, %c0_119] : memref<18x18x128xf32, #tpu.memory_space<vmem>>, vector<16x16x128xf32>
    %101 = vector.shape_cast %100 : vector<16x16x128xf32> to vector<256x128xf32>
    %102 = arith.truncf %101 : vector<256x128xf32> to vector<256x128xbf16>
    %c640 = arith.constant 640 : index
    %c0_120 = arith.constant 0 : index
    %103 = vector.load %arg5[%c640, %c0_120] : memref<1152x128xbf16, #tpu.memory_space<vmem>>, vector<128x128xbf16>
    %cst_121 = arith.constant dense<0.000000e+00> : vector<256x128xf32>
    %104 = tpu.matmul %102, %103, %cst_121 {dimension_numbers = #tpu.dot_dimension_numbers<[1], [0], [0], [1], [0, 0, 1, 1], [], []>} : vector<256x128xbf16>, vector<128x128xbf16>, vector<256x128xf32> -> vector<256x128xf32>
    %105 = arith.addf %99, %104 : vector<256x128xf32>
    %c2_122 = arith.constant 2 : index
    %c0_123 = arith.constant 0 : index
    %c0_124 = arith.constant 0 : index
    %106 = vector.load %arg9[%c2_122, %c0_123, %c0_124] : memref<18x18x128xf32, #tpu.memory_space<vmem>>, vector<16x16x128xf32>
    %107 = vector.shape_cast %106 : vector<16x16x128xf32> to vector<256x128xf32>
    %108 = arith.truncf %107 : vector<256x128xf32> to vector<256x128xbf16>
    %c768 = arith.constant 768 : index
    %c0_125 = arith.constant 0 : index
    %109 = vector.load %arg5[%c768, %c0_125] : memref<1152x128xbf16, #tpu.memory_space<vmem>>, vector<128x128xbf16>
    %cst_126 = arith.constant dense<0.000000e+00> : vector<256x128xf32>
    %110 = tpu.matmul %108, %109, %cst_126 {dimension_numbers = #tpu.dot_dimension_numbers<[1], [0], [0], [1], [0, 0, 1, 1], [], []>} : vector<256x128xbf16>, vector<128x128xbf16>, vector<256x128xf32> -> vector<256x128xf32>
    %111 = arith.addf %105, %110 : vector<256x128xf32>
    %c2_127 = arith.constant 2 : index
    %c1_128 = arith.constant 1 : index
    %c0_129 = arith.constant 0 : index
    %112 = vector.load %arg9[%c2_127, %c1_128, %c0_129] : memref<18x18x128xf32, #tpu.memory_space<vmem>>, vector<16x16x128xf32>
    %113 = vector.shape_cast %112 : vector<16x16x128xf32> to vector<256x128xf32>
    %114 = arith.truncf %113 : vector<256x128xf32> to vector<256x128xbf16>
    %c896 = arith.constant 896 : index
    %c0_130 = arith.constant 0 : index
    %115 = vector.load %arg5[%c896, %c0_130] : memref<1152x128xbf16, #tpu.memory_space<vmem>>, vector<128x128xbf16>
    %cst_131 = arith.constant dense<0.000000e+00> : vector<256x128xf32>
    %116 = tpu.matmul %114, %115, %cst_131 {dimension_numbers = #tpu.dot_dimension_numbers<[1], [0], [0], [1], [0, 0, 1, 1], [], []>} : vector<256x128xbf16>, vector<128x128xbf16>, vector<256x128xf32> -> vector<256x128xf32>
    %117 = arith.addf %111, %116 : vector<256x128xf32>
    %c2_132 = arith.constant 2 : index
    %c2_133 = arith.constant 2 : index
    %c0_134 = arith.constant 0 : index
    %118 = vector.load %arg9[%c2_132, %c2_133, %c0_134] : memref<18x18x128xf32, #tpu.memory_space<vmem>>, vector<16x16x128xf32>
    %119 = vector.shape_cast %118 : vector<16x16x128xf32> to vector<256x128xf32>
    %120 = arith.truncf %119 : vector<256x128xf32> to vector<256x128xbf16>
    %c1024 = arith.constant 1024 : index
    %c0_135 = arith.constant 0 : index
    %121 = vector.load %arg5[%c1024, %c0_135] : memref<1152x128xbf16, #tpu.memory_space<vmem>>, vector<128x128xbf16>
    %cst_136 = arith.constant dense<0.000000e+00> : vector<256x128xf32>
    %122 = tpu.matmul %120, %121, %cst_136 {dimension_numbers = #tpu.dot_dimension_numbers<[1], [0], [0], [1], [0, 0, 1, 1], [], []>} : vector<256x128xbf16>, vector<128x128xbf16>, vector<256x128xf32> -> vector<256x128xf32>
    %123 = arith.addf %117, %122 : vector<256x128xf32>
    %124 = vector.broadcast %68 : vector<1x128xf32> to vector<256x128xf32>
    %125 = arith.addf %123, %124 : vector<256x128xf32>
    %cst_137 = arith.constant 0.000000e+00 : f32
    %126 = vector.broadcast %cst_137 : f32 to vector<256x128xf32>
    %127 = arith.maximumf %125, %126 : vector<256x128xf32>
    %128 = vector.shape_cast %127 : vector<256x128xf32> to vector<16x16x128xf32>
    %c0_138 = arith.constant 0 : index
    %c0_139 = arith.constant 0 : index
    %c0_140 = arith.constant 0 : index
    %c0_141 = arith.constant 0 : index
    %129 = vector.load %arg7[%c0_138, %c0_139, %c0_140, %c0_141] : memref<1x16x16x128xf32, #tpu.memory_space<vmem>>, vector<1x16x16x128xf32>
    %130 = vector.shape_cast %129 : vector<1x16x16x128xf32> to vector<16x16x128xf32>
    %131 = vector.shape_cast %128 : vector<16x16x128xf32> to vector<1x16x16x128xf32>
    tpu.vector_store %arg7[%c0_138, %c0_139, %c0_140, %c0_141], %131 {strides = array<i32>} : memref<1x16x16x128xf32, #tpu.memory_space<vmem>>, vector<1x16x16x128xf32>,
    return
  }
  func.func @transform_0(%arg0: i32) -> (i32, i32, i32, i32) {
    %c0_i32 = arith.constant 0 : i32
    %c0_i32_0 = arith.constant 0 : i32
    %c0_i32_1 = arith.constant 0 : i32
    %c0_i32_2 = arith.constant 0 : i32
    return %arg0, %c0_i32, %c0_i32_0, %c0_i32_1 : i32, i32, i32, i32
  }
  func.func @transform_1(%arg0: i32) -> (i32, i32, i32, i32) {
    %c0_i32 = arith.constant 0 : i32
    %c0_i32_0 = arith.constant 0 : i32
    %c0_i32_1 = arith.constant 0 : i32
    %c0_i32_2 = arith.constant 0 : i32
    return %arg0, %c0_i32, %c0_i32_0, %c0_i32_1 : i32, i32, i32, i32
  }
  func.func @transform_2(%arg0: i32) -> (i32, i32) {
    %c0_i32 = arith.constant 0 : i32
    %c0_i32_0 = arith.constant 0 : i32
    %c0_i32_1 = arith.constant 0 : i32
    return %c0_i32, %c0_i32_0 : i32, i32
  }
  func.func @transform_3(%arg0: i32) -> (i32, i32) {
    %c0_i32 = arith.constant 0 : i32
    %c0_i32_0 = arith.constant 0 : i32
    %c0_i32_1 = arith.constant 0 : i32
    return %c0_i32, %c0_i32_0 : i32, i32
  }
  func.func @transform_4(%arg0: i32) -> (i32, i32) {
    %c0_i32 = arith.constant 0 : i32
    %c0_i32_0 = arith.constant 0 : i32
    %c0_i32_1 = arith.constant 0 : i32
    return %c0_i32, %c0_i32_0 : i32, i32
  }
  func.func @transform_5(%arg0: i32) -> (i32, i32) {
    %c0_i32 = arith.constant 0 : i32
    %c0_i32_0 = arith.constant 0 : i32
    %c0_i32_1 = arith.constant 0 : i32
    return %c0_i32, %c0_i32_0 : i32, i32
  }
  func.func @transform_6(%arg0: i32) -> (i32, i32, i32, i32) {
    %c0_i32 = arith.constant 0 : i32
    %c0_i32_0 = arith.constant 0 : i32
    %c0_i32_1 = arith.constant 0 : i32
    %c0_i32_2 = arith.constant 0 : i32
    return %arg0, %c0_i32, %c0_i32_0, %c0_i32_1 : i32, i32, i32, i32
  }
}

</mosaic_0001>

<llo_original>
// kernel: up_forward.1
$region0: #{up_forward.1}
  #allocation0 [shape = 'u32[]', space=smem, size = 0x4, offset = 0x4, fixed_abs, tag = 'smem constant byte address 0x4 - core index']
  #allocation1 [shape = 'u32[72,128]{1,0:T(1,128)}', space=vmem, size = 0x9000, scoped, tag = 'internal scratch']
  #allocation2 [shape = 'f32[18,18,8]{2,1,0:T(8,128)}', space=vmem, size = 0x36000, scoped, tag = 'scratch operand']
  #allocation3 [shape = 'f32[18,18,128]{2,1,0:T(8,128)}', space=vmem, size = 0x36000, scoped, tag = 'scratch operand']
  #allocation4 [shape = 'bf16[256,72]{1,0:T(8,128)(2,1)}', space=vmem, size = 0x10000, scoped, tag = 'scratch operand']
  %s0 = inlined_call_operand.vmem [shape: f32[2,16,16,4], index: 0, kind: input, shape index: {}]
  %s1 = inlined_call_operand.vmem [shape: f32[2,16,16,4], index: 1, kind: input, shape index: {}]
  %s2 = inlined_call_operand.vmem [shape: bf16[72,128], index: 2, kind: input, shape index: {}]
  %s3 = inlined_call_operand.vmem [shape: f32[1,128], index: 3, kind: input, shape index: {}]
  %s4 = inlined_call_operand.vmem [shape: bf16[1152,128], index: 4, kind: input, shape index: {}]
  %s5 = inlined_call_operand.vmem [shape: f32[1,128], index: 5, kind: input, shape index: {}]
  %s6 = inlined_call_operand.vmem [shape: f32[2,16,16,128], index: 6, kind: output, shape index: {}]
  %s7 = sld [smem:[#allocation0]]
  $region57: #{up_forward.1} parent=0
    _
  %s9 = ssub.s32 1, %s7
  %s10 = scalar_select 0, %s9, %s7
  loop: start=0, step=1, limit=4
  $region2: #{up_forward.1} parent=0 // loop_pre_header
    _
  $region3: #{up_forward.1} parent=0 // loop_header
    %s12 = sphi 0, %s16
    %p13 = scmp.ge.s32.totalorder %s12, 4
    %s22 = sphi 0, %s24
    %s25 = sphi 0, %s22
    %s26 = sphi 0, %s25
    %s42 = sphi 0, %s26
    %s48 = sphi 0, %s50
    %s51 = sphi 0, %s48
    %s52 = sphi 0, %s51
    %s68 = sphi 0, %s52
    %s72 = sphi 0, %s72
    %s74 = sphi 0, %s72
    %s75 = sphi 0, %s74
    %s89 = sphi 0, %s75
    %s93 = sphi 0, %s93
    %s95 = sphi 0, %s93
    %s96 = sphi 0, %s95
    %s110 = sphi 0, %s96
    %s114 = sphi 0, %s114
    %s116 = sphi 0, %s114
    %s117 = sphi 0, %s116
    %s131 = sphi 0, %s117
    %s135 = sphi 0, %s135
    %s137 = sphi 0, %s135
    %s138 = sphi 0, %s137
    %s152 = sphi 0, %s138
    %s158 = sphi 0, %s160
    %s161 = sphi 0, %s158
    %s162 = sphi 0, %s161
    %s178 = sphi 0, %s162
  $region4: #{up_forward.1} parent=0 // loop_header_branch
    %15 = sbr.rel (%p13) target = $region8
  $region5: #{up_forward.1} parent=0 // loop_body
    %s17 = ssub.s32 %s12, 1
    %s18 = ssub.s32 %s12, 2
    %s19 = sadd.s32 %s12, 1
    %s20 = ssub.s32 %s12, %s19
    %p21 = scmp.eq.s32.totalorder %s20, 0
    %s23 = sadd.s32 %s22, 1
    %s24 = scalar_select %p21, %s22, %s23
    %p27 = pneg %p21
    %p28 = scmp.eq.s32.totalorder %s12, 1
    %p29 = por %p27, %p28
    %p30 = scmp.ne.s32.totalorder %s22, %s25
    %p31 = scmp.eq.s32.totalorder %s12, 0
    %p32 = por %p30, %p31
    %p33 = scmp.ne.s32.totalorder %s22, %s25
    %p34 = scmp.eq.s32.totalorder %s17, 1
    %p35 = por %p33, %p34
    %p36 = scmp.ne.s32.totalorder %s25, %s26
    %p37 = scmp.eq.s32.totalorder %s17, 0
    %p38 = por %p36, %p37
    %p39 = scmp.ne.s32.totalorder %s25, %s26
    %p40 = scmp.eq.s32.totalorder %s18, 1
    %p41 = por %p39, %p40
    %p43 = scmp.ne.s32.totalorder %s26, %s42
    %p44 = scmp.eq.s32.totalorder %s18, 0
    %p45 = por %p43, %p44
    %s46 = ssub.s32 %s12, %s19
    %p47 = scmp.eq.s32.totalorder %s46, 0
    %s49 = sadd.s32 %s48, 1
    %s50 = scalar_select %p47, %s48, %s49
    %p53 = pneg %p47
    %p54 = scmp.eq.s32.totalorder %s12, 1
    %p55 = por %p53, %p54
    %p56 = scmp.ne.s32.totalorder %s48, %s51
    %p57 = scmp.eq.s32.totalorder %s12, 0
    %p58 = por %p56, %p57
    %p59 = scmp.ne.s32.totalorder %s48, %s51
    %p60 = scmp.eq.s32.totalorder %s17, 1
    %p61 = por %p59, %p60
    %p62 = scmp.ne.s32.totalorder %s51, %s52
    %p63 = scmp.eq.s32.totalorder %s17, 0
    %p64 = por %p62, %p63
    %p65 = scmp.ne.s32.totalorder %s51, %s52
    %p66 = scmp.eq.s32.totalorder %s18, 1
    %p67 = por %p65, %p66
    %p69 = scmp.ne.s32.totalorder %s52, %s68
    %p70 = scmp.eq.s32.totalorder %s18, 0
    %p71 = por %p69, %p70
    %s73 = sadd.s32 %s72, 1
    %p76 = scmp.eq.s32.totalorder %s12, 1
    %p77 = scmp.ne.s32.totalorder %s72, %s74
    %p78 = scmp.eq.s32.totalorder %s12, 0
    %p79 = por %p77, %p78
    %p80 = scmp.ne.s32.totalorder %s72, %s74
    %p81 = scmp.eq.s32.totalorder %s17, 1
    %p82 = por %p80, %p81
    %p83 = scmp.ne.s32.totalorder %s74, %s75
    %p84 = scmp.eq.s32.totalorder %s17, 0
    %p85 = por %p83, %p84
    %p86 = scmp.ne.s32.totalorder %s74, %s75
    %p87 = scmp.eq.s32.totalorder %s18, 1
    %p88 = por %p86, %p87
    %p90 = scmp.ne.s32.totalorder %s75, %s89
    %p91 = scmp.eq.s32.totalorder %s18, 0
    %p92 = por %p90, %p91
    %s94 = sadd.s32 %s93, 1
    %p97 = scmp.eq.s32.totalorder %s12, 1
    %p98 = scmp.ne.s32.totalorder %s93, %s95
    %p99 = scmp.eq.s32.totalorder %s12, 0
    %p100 = por %p98, %p99
    %p101 = scmp.ne.s32.totalorder %s93, %s95
    %p102 = scmp.eq.s32.totalorder %s17, 1
    %p103 = por %p101, %p102
    %p104 = scmp.ne.s32.totalorder %s95, %s96
    %p105 = scmp.eq.s32.totalorder %s17, 0
    %p106 = por %p104, %p105
    %p107 = scmp.ne.s32.totalorder %s95, %s96
    %p108 = scmp.eq.s32.totalorder %s18, 1
    %p109 = por %p107, %p108
    %p111 = scmp.ne.s32.totalorder %s96, %s110
    %p112 = scmp.eq.s32.totalorder %s18, 0
    %p113 = por %p111, %p112
    %s115 = sadd.s32 %s114, 1
    %p118 = scmp.eq.s32.totalorder %s12, 1
    %p119 = scmp.ne.s32.totalorder %s114, %s116
    %p120 = scmp.eq.s32.totalorder %s12, 0
    %p121 = por %p119, %p120
    %p122 = scmp.ne.s32.totalorder %s114, %s116
    %p123 = scmp.eq.s32.totalorder %s17, 1
    %p124 = por %p122, %p123
    %p125 = scmp.ne.s32.totalorder %s116, %s117
    %p126 = scmp.eq.s32.totalorder %s17, 0
    %p127 = por %p125, %p126
    %p128 = scmp.ne.s32.totalorder %s116, %s117
    %p129 = scmp.eq.s32.totalorder %s18, 1
    %p130 = por %p128, %p129
    %p132 = scmp.ne.s32.totalorder %s117, %s131
    %p133 = scmp.eq.s32.totalorder %s18, 0
    %p134 = por %p132, %p133
    %s136 = sadd.s32 %s135, 1
    %p139 = scmp.eq.s32.totalorder %s12, 1
    %p140 = scmp.ne.s32.totalorder %s135, %s137
    %p141 = scmp.eq.s32.totalorder %s12, 0
    %p142 = por %p140, %p141
    %p143 = scmp.ne.s32.totalorder %s135, %s137
    %p144 = scmp.eq.s32.totalorder %s17, 1
    %p145 = por %p143, %p144
    %p146 = scmp.ne.s32.totalorder %s137, %s138
    %p147 = scmp.eq.s32.totalorder %s17, 0
    %p148 = por %p146, %p147
    %p149 = scmp.ne.s32.totalorder %s137, %s138
    %p150 = scmp.eq.s32.totalorder %s18, 1
    %p151 = por %p149, %p150
    %p153 = scmp.ne.s32.totalorder %s138, %s152
    %p154 = scmp.eq.s32.totalorder %s18, 0
    %p155 = por %p153, %p154
    %s156 = ssub.s32 %s12, %s19
    %p157 = scmp.eq.s32.totalorder %s156, 0
    %s159 = sadd.s32 %s158, 1
    %s160 = scalar_select %p157, %s158, %s159
    %p163 = pneg %p157
    %p164 = scmp.eq.s32.totalorder %s12, 1
    %p165 = por %p163, %p164
    %p166 = scmp.ne.s32.totalorder %s158, %s161
    %p167 = scmp.eq.s32.totalorder %s12, 0
    %p168 = por %p166, %p167
    %p169 = scmp.ne.s32.totalorder %s158, %s161
    %p170 = scmp.eq.s32.totalorder %s17, 1
    %p171 = por %p169, %p170
    %p172 = scmp.ne.s32.totalorder %s161, %s162
    %p173 = scmp.eq.s32.totalorder %s17, 0
    %p174 = por %p172, %p173
    %p175 = scmp.ne.s32.totalorder %s161, %s162
    %p176 = scmp.eq.s32.totalorder %s18, 1
    %p177 = por %p175, %p176
    %p179 = scmp.ne.s32.totalorder %s162, %s178
    %p180 = scmp.eq.s32.totalorder %s18, 0
    %p181 = por %p179, %p180
    %p182 = scmp.le.s32.totalorder 1, %s12
    %p183 = scmp.lt.s32.totalorder %s12, 3
    %p184 = pnand %p182, %p183
    %p185 = pneg %p184
    // Predicated region
    $region9: #{up_forward.1} parent=5 // pred_check
      _
    $region10: #{up_forward.1} parent=5 // pred_check_branch
      %187 = sbr.rel (%p184) target = $region12
    $region11: #{up_forward.1} parent=5 // pred_region
      %s188 = ssub.s32 %s12, 1
      // Predicated region
      $region13: #{up_forward.1} parent=11 // pred_check
        %p189 = pneg %p85
      $region14: #{up_forward.1} parent=11 // pred_check_branch
        %191 = sbr.rel (%p189) target = $region16
      $region15: #{up_forward.1} parent=11 // pred_region
        _
      $region16: #{up_forward.1} parent=11 // pred_fallthru
        _
      // Predicated region
      $region17: #{up_forward.1} parent=11 // pred_check
        %p192 = pneg %p106
      $region18: #{up_forward.1} parent=11 // pred_check_branch
        %194 = sbr.rel (%p192) target = $region20
      $region19: #{up_forward.1} parent=11 // pred_region
        _
      $region20: #{up_forward.1} parent=11 // pred_fallthru
        _
      // Predicated region
      $region21: #{up_forward.1} parent=11 // pred_check
        %p195 = pneg %p127
      $region22: #{up_forward.1} parent=11 // pred_check_branch
        %197 = sbr.rel (%p195) target = $region24
      $region23: #{up_forward.1} parent=11 // pred_region
        _
      $region24: #{up_forward.1} parent=11 // pred_fallthru
        _
      // Predicated region
      $region25: #{up_forward.1} parent=11 // pred_check
        %p198 = pneg %p148
      $region26: #{up_forward.1} parent=11 // pred_check_branch
        %200 = sbr.rel (%p198) target = $region28
      $region27: #{up_forward.1} parent=11 // pred_region
        _
      $region28: #{up_forward.1} parent=11 // pred_fallthru
        _
    $region12: #{up_forward.1} parent=5 // pred_fallthru
      _
    %p201 = scmp.lt.s32.totalorder %s12, 2
    // Predicated region
    $region29: #{up_forward.1} parent=5 // pred_check
      %p202 = pneg %p201
    $region30: #{up_forward.1} parent=5 // pred_check_branch
      %204 = sbr.rel (%p202) target = $region32
    $region31: #{up_forward.1} parent=5 // pred_region
      // Predicated region
      $region33: #{up_forward.1} parent=31 // pred_check
        %p205 = pneg %p32
      $region34: #{up_forward.1} parent=31 // pred_check_branch
        %207 = sbr.rel (%p205) target = $region36
      $region35: #{up_forward.1} parent=31 // pred_region
        %p208 = scmp.lt.s32.totalorder %s12, 1
        %s209 = scalar_select %p208, %s12, 1
        %s210 = smul.addr %s209, 32
        %s211 = smul.addr %s210, 8
        %s212 = scalar_lea.vmem %s0, %s211
      $region36: #{up_forward.1} parent=31 // pred_fallthru
        _
      // Predicated region
      $region37: #{up_forward.1} parent=31 // pred_check
        %p213 = pneg %p58
      $region38: #{up_forward.1} parent=31 // pred_check_branch
        %215 = sbr.rel (%p213) target = $region40
      $region39: #{up_forward.1} parent=31 // pred_region
        %p216 = scmp.lt.s32.totalorder %s12, 1
        %s217 = scalar_select %p216, %s12, 1
        %s218 = smul.addr %s217, 32
        %s219 = smul.addr %s218, 8
        %s220 = scalar_lea.vmem %s1, %s219
      $region40: #{up_forward.1} parent=31 // pred_fallthru
        _
    $region32: #{up_forward.1} parent=5 // pred_fallthru
      _
    %p221 = scmp.le.s32.totalorder 1, %s12
    %p222 = scmp.lt.s32.totalorder %s12, 3
    %p223 = pnand %p221, %p222
    %p224 = pneg %p223
    // Predicated region
    $region41: #{up_forward.1} parent=5 // pred_check
      _
    $region42: #{up_forward.1} parent=5 // pred_check_branch
      %226 = sbr.rel (%p223) target = $region44
    $region43: #{up_forward.1} parent=5 // pred_region
      %s227 = ssub.s32 %s12, 1
      %p228 = scmp.lt.s32.totalorder %s17, 1
      %s229 = scalar_select %p228, %s17, 1
      %s230 = smul.addr %s229, 32
      %s231 = smul.addr %s230, 8
      %s232 = scalar_lea.vmem %s0, %s231
      %p233 = pneg %p38
      %p234 = pneg %p35
      %p235 = scmp.lt.s32.totalorder %s17, 1
      %s236 = scalar_select %p235, %s17, 1
      %s237 = smul.addr %s236, 32
      %s238 = smul.addr %s237, 8
      %s239 = scalar_lea.vmem %s1, %s238
      %p240 = pneg %p64
      %p241 = pneg %p61
      %p242 = pneg %p85
      %p243 = pneg %p82
      %p244 = pneg %p106
      %p245 = pneg %p103
      %p246 = pneg %p127
      %p247 = pneg %p124
      %p248 = pneg %p148
      %p249 = pneg %p145
      %p250 = pneg %p174
      %p251 = pneg %p171
      %p252 = scmp.lt.s32.totalorder %s17, 1
      %s253 = scalar_select %p252, %s17, 1
      %s254 = smul.addr %s253, 32
      %s255 = smul.addr %s254, 8
      %s256 = scalar_lea.vmem %s6, %s255
      %p257 = scmp.lt.s32.totalorder %s17, 1
      %s258 = scalar_select %p257, %s17, 1
      %s259 = smul.addr %s258, 32
      %s260 = smul.addr %s259, 8
      %s261 = scalar_lea.vmem %s0, %s260
      %p262 = scmp.lt.s32.totalorder %s17, 1
      %s263 = scalar_select %p262, %s17, 1
      %s264 = smul.addr %s263, 32
      %s265 = smul.addr %s264, 8
      %s266 = scalar_lea.vmem %s1, %s265
      %p267 = scmp.lt.s32.totalorder %s17, 1
      %s268 = scalar_select %p267, %s17, 1
      %s269 = smul.addr %s268, 32
      %s270 = smul.addr %s269, 8
      %s271 = scalar_lea.vmem %s6, %s270
      %vm273 = vcmask 64512
      %274 = vst.msk [vmem:[#allocation2] sm:$0xff] %vm273, 0.0
      %275 = vst.msk [vmem:[#allocation2 + $0x8] sm:$0xff] %vm273, 0.0
      %vm276 = vcmask 58368
      %277 = vst.msk [vmem:[#allocation2 + $0x10] sm:$0x3] %vm276, 0.0
      %s278 = scalar_lea.vmem [#allocation2], 408
      %279 = vst.msk [vmem:[%s278] sm:$0xff] %vm273, 0.0
      %280 = vst.msk [vmem:[%s278 + $0x8] sm:$0xff] %vm273, 0.0
      %281 = vst.msk [vmem:[%s278 + $0x10] sm:$0x3] %vm276, 0.0
      %vm282 = vcmask 57344
      %283 = vst.msk [vmem:[#allocation2] sm:$0x1] %vm282, 0.0
      %284 = vst.msk [vmem:[#allocation2 + $0x18] sm:$0x1] %vm282, 0.0
      %285 = vst.msk [vmem:[#allocation2 + $0x30] sm:$0x1] %vm282, 0.0
      %286 = vst.msk [vmem:[#allocation2 + $0x48] sm:$0x1] %vm282, 0.0
      %287 = vst.msk [vmem:[#allocation2 + $0x60] sm:$0x1] %vm282, 0.0
      %288 = vst.msk [vmem:[#allocation2 + $0x78] sm:$0x1] %vm282, 0.0
      %289 = vst.msk [vmem:[#allocation2 + $0x90] sm:$0x1] %vm282, 0.0
      %290 = vst.msk [vmem:[#allocation2 + $0xa8] sm:$0x1] %vm282, 0.0
      %291 = vst.msk [vmem:[#allocation2 + $0xc0] sm:$0x1] %vm282, 0.0
      %292 = vst.msk [vmem:[#allocation2 + $0xd8] sm:$0x1] %vm282, 0.0
      %293 = vst.msk [vmem:[#allocation2 + $0xf0] sm:$0x1] %vm282, 0.0
      %294 = vst.msk [vmem:[#allocation2 + $0x108] sm:$0x1] %vm282, 0.0
      %295 = vst.msk [vmem:[#allocation2 + $0x120] sm:$0x1] %vm282, 0.0
      %296 = vst.msk [vmem:[#allocation2 + $0x138] sm:$0x1] %vm282, 0.0
      %297 = vst.msk [vmem:[#allocation2 + $0x150] sm:$0x1] %vm282, 0.0
      %298 = vst.msk [vmem:[#allocation2 + $0x168] sm:$0x1] %vm282, 0.0
      %299 = vst.msk [vmem:[#allocation2 + $0x180] sm:$0x1] %vm282, 0.0
      %300 = vst.msk [vmem:[#allocation2 + $0x198] sm:$0x1] %vm282, 0.0
      %301 = vst.msk [vmem:[#allocation2 + $0x11] sm:$0x1] %vm282, 0.0
      %302 = vst.msk [vmem:[#allocation2 + $0x29] sm:$0x1] %vm282, 0.0
      %303 = vst.msk [vmem:[#allocation2 + $0x41] sm:$0x1] %vm282, 0.0
      %304 = vst.msk [vmem:[#allocation2 + $0x59] sm:$0x1] %vm282, 0.0
      %305 = vst.msk [vmem:[#allocation2 + $0x71] sm:$0x1] %vm282, 0.0
      %306 = vst.msk [vmem:[#allocation2 + $0x89] sm:$0x1] %vm282, 0.0
      %307 = vst.msk [vmem:[#allocation2 + $0xa1] sm:$0x1] %vm282, 0.0
      %308 = vst.msk [vmem:[#allocation2 + $0xb9] sm:$0x1] %vm282, 0.0
      %309 = vst.msk [vmem:[#allocation2 + $0xd1] sm:$0x1] %vm282, 0.0
      %310 = vst.msk [vmem:[#allocation2 + $0xe9] sm:$0x1] %vm282, 0.0
      %311 = vst.msk [vmem:[#allocation2 + $0x101] sm:$0x1] %vm282, 0.0
      %312 = vst.msk [vmem:[#allocation2 + $0x119] sm:$0x1] %vm282, 0.0
      %313 = vst.msk [vmem:[#allocation2 + $0x131] sm:$0x1] %vm282, 0.0
      %314 = vst.msk [vmem:[#allocation2 + $0x149] sm:$0x1] %vm282, 0.0
      %315 = vst.msk [vmem:[#allocation2 + $0x161] sm:$0x1] %vm282, 0.0
      %316 = vst.msk [vmem:[#allocation2 + $0x179] sm:$0x1] %vm282, 0.0
      %317 = vst.msk [vmem:[#allocation2 + $0x191] sm:$0x1] %vm282, 0.0
      %318 = vst.msk [vmem:[#allocation2 + $0x1a9] sm:$0x1] %vm282, 0.0
      %319 = vst [vmem:[#allocation3] sm:$0xff] 0.0
      %320 = vst [vmem:[#allocation3 + $0x8] sm:$0xff] 0.0
      %321 = vst [vmem:[#allocation3 + $0x10] sm:$0x3] 0.0
      %s322 = scalar_lea.vmem [#allocation3], 408
      %323 = vst [vmem:[%s322] sm:$0xff] 0.0
      %324 = vst [vmem:[%s322 + $0x8] sm:$0xff] 0.0
      %325 = vst [vmem:[%s322 + $0x10] sm:$0x3] 0.0
      %326 = vst [vmem:[#allocation3] sm:$0x1] 0.0
      %327 = vst [vmem:[#allocation3 + $0x18] sm:$0x1] 0.0
      %328 = vst [vmem:[#allocation3 + $0x30] sm:$0x1] 0.0
      %329 = vst [vmem:[#allocation3 + $0x48] sm:$0x1] 0.0
      %330 = vst [vmem:[#allocation3 + $0x60] sm:$0x1] 0.0
      %331 = vst [vmem:[#allocation3 + $0x78] sm:$0x1] 0.0
      %332 = vst [vmem:[#allocation3 + $0x90] sm:$0x1] 0.0
      %333 = vst [vmem:[#allocation3 + $0xa8] sm:$0x1] 0.0
      %334 = vst [vmem:[#allocation3 + $0xc0] sm:$0x1] 0.0
      %335 = vst [vmem:[#allocation3 + $0xd8] sm:$0x1] 0.0
      %336 = vst [vmem:[#allocation3 + $0xf0] sm:$0x1] 0.0
      %337 = vst [vmem:[#allocation3 + $0x108] sm:$0x1] 0.0
      %338 = vst [vmem:[#allocation3 + $0x120] sm:$0x1] 0.0
      %339 = vst [vmem:[#allocation3 + $0x138] sm:$0x1] 0.0
      %340 = vst [vmem:[#allocation3 + $0x150] sm:$0x1] 0.0
      %341 = vst [vmem:[#allocation3 + $0x168] sm:$0x1] 0.0
      %342 = vst [vmem:[#allocation3 + $0x180] sm:$0x1] 0.0
      %343 = vst [vmem:[#allocation3 + $0x198] sm:$0x1] 0.0
      %344 = vst [vmem:[#allocation3 + $0x11] sm:$0x1] 0.0
      %345 = vst [vmem:[#allocation3 + $0x29] sm:$0x1] 0.0
      %346 = vst [vmem:[#allocation3 + $0x41] sm:$0x1] 0.0
      %347 = vst [vmem:[#allocation3 + $0x59] sm:$0x1] 0.0
      %348 = vst [vmem:[#allocation3 + $0x71] sm:$0x1] 0.0
      %349 = vst [vmem:[#allocation3 + $0x89] sm:$0x1] 0.0
      %350 = vst [vmem:[#allocation3 + $0xa1] sm:$0x1] 0.0
      %351 = vst [vmem:[#allocation3 + $0xb9] sm:$0x1] 0.0
      %352 = vst [vmem:[#allocation3 + $0xd1] sm:$0x1] 0.0
      %353 = vst [vmem:[#allocation3 + $0xe9] sm:$0x1] 0.0
      %354 = vst [vmem:[#allocation3 + $0x101] sm:$0x1] 0.0
      %355 = vst [vmem:[#allocation3 + $0x119] sm:$0x1] 0.0
      %356 = vst [vmem:[#allocation3 + $0x131] sm:$0x1] 0.0
      %357 = vst [vmem:[#allocation3 + $0x149] sm:$0x1] 0.0
      %358 = vst [vmem:[#allocation3 + $0x161] sm:$0x1] 0.0
      %359 = vst [vmem:[#allocation3 + $0x179] sm:$0x1] 0.0
      %360 = vst [vmem:[#allocation3 + $0x191] sm:$0x1] 0.0
      %361 = vst [vmem:[#allocation3 + $0x1a9] sm:$0x1] 0.0
      %v362 = vld [vmem:[%s266] sm:$0xff]
      %v363 = vld [vmem:[%s266 + $0x8] sm:$0xff]
      %v364 = vld [vmem:[%s266 + $0x10] sm:$0xff]
      %v365 = vld [vmem:[%s266 + $0x18] sm:$0xff]
      %v366 = vld [vmem:[%s266 + $0x20] sm:$0xff]
      %v367 = vld [vmem:[%s266 + $0x28] sm:$0xff]
      %v368 = vld [vmem:[%s266 + $0x30] sm:$0xff]
      %v369 = vld [vmem:[%s266 + $0x38] sm:$0xff]
      %v370 = vld [vmem:[%s266 + $0x40] sm:$0xff]
      %v371 = vld [vmem:[%s266 + $0x48] sm:$0xff]
      %v372 = vld [vmem:[%s266 + $0x50] sm:$0xff]
      %v373 = vld [vmem:[%s266 + $0x58] sm:$0xff]
      %v374 = vld [vmem:[%s266 + $0x60] sm:$0xff]
      %v375 = vld [vmem:[%s266 + $0x68] sm:$0xff]
      %v376 = vld [vmem:[%s266 + $0x70] sm:$0xff]
      %v377 = vld [vmem:[%s266 + $0x78] sm:$0xff]
      %v378 = vld [vmem:[%s266 + $0x80] sm:$0xff]
      %v379 = vld [vmem:[%s266 + $0x88] sm:$0xff]
      %v380 = vld [vmem:[%s266 + $0x90] sm:$0xff]
      %v381 = vld [vmem:[%s266 + $0x98] sm:$0xff]
      %v382 = vld [vmem:[%s266 + $0xa0] sm:$0xff]
      %v383 = vld [vmem:[%s266 + $0xa8] sm:$0xff]
      %v384 = vld [vmem:[%s266 + $0xb0] sm:$0xff]
      %v385 = vld [vmem:[%s266 + $0xb8] sm:$0xff]
      %v386 = vld [vmem:[%s266 + $0xc0] sm:$0xff]
      %v387 = vld [vmem:[%s266 + $0xc8] sm:$0xff]
      %v388 = vld [vmem:[%s266 + $0xd0] sm:$0xff]
      %v389 = vld [vmem:[%s266 + $0xd8] sm:$0xff]
      %v390 = vld [vmem:[%s266 + $0xe0] sm:$0xff]
      %v391 = vld [vmem:[%s266 + $0xe8] sm:$0xff]
      %v392 = vld [vmem:[%s266 + $0xf0] sm:$0xff]
      %v393 = vld [vmem:[%s266 + $0xf8] sm:$0xff]
      %s394 = scalar_lea.vmem [#allocation2], 24
      %vm395 = vcmask 31744
      %396 = vst.msk [vmem:[%s394 + $0x1] sm:$0xff] %vm395, %v362
      %397 = vst.msk [vmem:[%s394 + $0x9] sm:$0xff] %vm395, %v363
      %398 = vst.msk [vmem:[%s394 + $0x19] sm:$0xff] %vm395, %v364
      %399 = vst.msk [vmem:[%s394 + $0x21] sm:$0xff] %vm395, %v365
      %400 = vst.msk [vmem:[%s394 + $0x31] sm:$0xff] %vm395, %v366
      %401 = vst.msk [vmem:[%s394 + $0x39] sm:$0xff] %vm395, %v367
      %402 = vst.msk [vmem:[%s394 + $0x49] sm:$0xff] %vm395, %v368
      %403 = vst.msk [vmem:[%s394 + $0x51] sm:$0xff] %vm395, %v369
      %404 = vst.msk [vmem:[%s394 + $0x61] sm:$0xff] %vm395, %v370
      %405 = vst.msk [vmem:[%s394 + $0x69] sm:$0xff] %vm395, %v371
      %406 = vst.msk [vmem:[%s394 + $0x79] sm:$0xff] %vm395, %v372
      %407 = vst.msk [vmem:[%s394 + $0x81] sm:$0xff] %vm395, %v373
      %408 = vst.msk [vmem:[%s394 + $0x91] sm:$0xff] %vm395, %v374
      %409 = vst.msk [vmem:[%s394 + $0x99] sm:$0xff] %vm395, %v375
      %410 = vst.msk [vmem:[%s394 + $0xa9] sm:$0xff] %vm395, %v376
      %411 = vst.msk [vmem:[%s394 + $0xb1] sm:$0xff] %vm395, %v377
      %412 = vst.msk [vmem:[%s394 + $0xc1] sm:$0xff] %vm395, %v378
      %413 = vst.msk [vmem:[%s394 + $0xc9] sm:$0xff] %vm395, %v379
      %414 = vst.msk [vmem:[%s394 + $0xd9] sm:$0xff] %vm395, %v380
      %415 = vst.msk [vmem:[%s394 + $0xe1] sm:$0xff] %vm395, %v381
      %416 = vst.msk [vmem:[%s394 + $0xf1] sm:$0xff] %vm395, %v382
      %417 = vst.msk [vmem:[%s394 + $0xf9] sm:$0xff] %vm395, %v383
      %418 = vst.msk [vmem:[%s394 + $0x109] sm:$0xff] %vm395, %v384
      %419 = vst.msk [vmem:[%s394 + $0x111] sm:$0xff] %vm395, %v385
      %420 = vst.msk [vmem:[%s394 + $0x121] sm:$0xff] %vm395, %v386
      %421 = vst.msk [vmem:[%s394 + $0x129] sm:$0xff] %vm395, %v387
      %422 = vst.msk [vmem:[%s394 + $0x139] sm:$0xff] %vm395, %v388
      %423 = vst.msk [vmem:[%s394 + $0x141] sm:$0xff] %vm395, %v389
      %424 = vst.msk [vmem:[%s394 + $0x151] sm:$0xff] %vm395, %v390
      %425 = vst.msk [vmem:[%s394 + $0x159] sm:$0xff] %vm395, %v391
      %426 = vst.msk [vmem:[%s394 + $0x169] sm:$0xff] %vm395, %v392
      %427 = vst.msk [vmem:[%s394 + $0x171] sm:$0xff] %vm395, %v393
      %v428 = vld [vmem:[%s261] sm:$0xff]
      %v429 = vld [vmem:[%s261 + $0x8] sm:$0xff]
      %v430 = vld [vmem:[%s261 + $0x10] sm:$0xff]
      %v431 = vld [vmem:[%s261 + $0x18] sm:$0xff]
      %v432 = vld [vmem:[%s261 + $0x20] sm:$0xff]
      %v433 = vld [vmem:[%s261 + $0x28] sm:$0xff]
      %v434 = vld [vmem:[%s261 + $0x30] sm:$0xff]
      %v435 = vld [vmem:[%s261 + $0x38] sm:$0xff]
      %v436 = vld [vmem:[%s261 + $0x40] sm:$0xff]
      %v437 = vld [vmem:[%s261 + $0x48] sm:$0xff]
      %v438 = vld [vmem:[%s261 + $0x50] sm:$0xff]
      %v439 = vld [vmem:[%s261 + $0x58] sm:$0xff]
      %v440 = vld [vmem:[%s261 + $0x60] sm:$0xff]
      %v441 = vld [vmem:[%s261 + $0x68] sm:$0xff]
      %v442 = vld [vmem:[%s261 + $0x70] sm:$0xff]
      %v443 = vld [vmem:[%s261 + $0x78] sm:$0xff]
      %v444 = vld [vmem:[%s261 + $0x80] sm:$0xff]
      %v445 = vld [vmem:[%s261 + $0x88] sm:$0xff]
      %v446 = vld [vmem:[%s261 + $0x90] sm:$0xff]
      %v447 = vld [vmem:[%s261 + $0x98] sm:$0xff]
      %v448 = vld [vmem:[%s261 + $0xa0] sm:$0xff]
      %v449 = vld [vmem:[%s261 + $0xa8] sm:$0xff]
      %v450 = vld [vmem:[%s261 + $0xb0] sm:$0xff]
      %v451 = vld [vmem:[%s261 + $0xb8] sm:$0xff]
      %v452 = vld [vmem:[%s261 + $0xc0] sm:$0xff]
      %v453 = vld [vmem:[%s261 + $0xc8] sm:$0xff]
      %v454 = vld [vmem:[%s261 + $0xd0] sm:$0xff]
      %v455 = vld [vmem:[%s261 + $0xd8] sm:$0xff]
      %v456 = vld [vmem:[%s261 + $0xe0] sm:$0xff]
      %v457 = vld [vmem:[%s261 + $0xe8] sm:$0xff]
      %v458 = vld [vmem:[%s261 + $0xf0] sm:$0xff]
      %v459 = vld [vmem:[%s261 + $0xf8] sm:$0xff]
      %492 = vrot.lane.b32.xlu0 %v428, 4
      %v493 = vpop.permute.xlu0 %492
      %494 = vrot.lane.b32.xlu0 %v429, 4
      %v495 = vpop.permute.xlu0 %494
      %496 = vrot.lane.b32.xlu0 %v430, 4
      %v497 = vpop.permute.xlu0 %496
      %498 = vrot.lane.b32.xlu0 %v431, 4
      %v499 = vpop.permute.xlu0 %498
      %500 = vrot.lane.b32.xlu0 %v432, 4
      %v501 = vpop.permute.xlu0 %500
      %502 = vrot.lane.b32.xlu0 %v433, 4
      %v503 = vpop.permute.xlu0 %502
      %504 = vrot.lane.b32.xlu0 %v434, 4
      %v505 = vpop.permute.xlu0 %504
      %506 = vrot.lane.b32.xlu0 %v435, 4
      %v507 = vpop.permute.xlu0 %506
      %508 = vrot.lane.b32.xlu0 %v436, 4
      %v509 = vpop.permute.xlu0 %508
      %510 = vrot.lane.b32.xlu0 %v437, 4
      %v511 = vpop.permute.xlu0 %510
      %512 = vrot.lane.b32.xlu0 %v438, 4
      %v513 = vpop.permute.xlu0 %512
      %514 = vrot.lane.b32.xlu0 %v439, 4
      %v515 = vpop.permute.xlu0 %514
      %516 = vrot.lane.b32.xlu0 %v440, 4
      %v517 = vpop.permute.xlu0 %516
      %518 = vrot.lane.b32.xlu0 %v441, 4
      %v519 = vpop.permute.xlu0 %518
      %520 = vrot.lane.b32.xlu0 %v442, 4
      %v521 = vpop.permute.xlu0 %520
      %522 = vrot.lane.b32.xlu0 %v443, 4
      %v523 = vpop.permute.xlu0 %522
      %524 = vrot.lane.b32.xlu0 %v444, 4
      %v525 = vpop.permute.xlu0 %524
      %526 = vrot.lane.b32.xlu0 %v445, 4
      %v527 = vpop.permute.xlu0 %526
      %528 = vrot.lane.b32.xlu0 %v446, 4
      %v529 = vpop.permute.xlu0 %528
      %530 = vrot.lane.b32.xlu0 %v447, 4
      %v531 = vpop.permute.xlu0 %530
      %532 = vrot.lane.b32.xlu0 %v448, 4
      %v533 = vpop.permute.xlu0 %532
      %534 = vrot.lane.b32.xlu0 %v449, 4
      %v535 = vpop.permute.xlu0 %534
      %536 = vrot.lane.b32.xlu0 %v450, 4
      %v537 = vpop.permute.xlu0 %536
      %538 = vrot.lane.b32.xlu0 %v451, 4
      %v539 = vpop.permute.xlu0 %538
      %540 = vrot.lane.b32.xlu0 %v452, 4
      %v541 = vpop.permute.xlu0 %540
      %542 = vrot.lane.b32.xlu0 %v453, 4
      %v543 = vpop.permute.xlu0 %542
      %544 = vrot.lane.b32.xlu0 %v454, 4
      %v545 = vpop.permute.xlu0 %544
      %546 = vrot.lane.b32.xlu0 %v455, 4
      %v547 = vpop.permute.xlu0 %546
      %548 = vrot.lane.b32.xlu0 %v456, 4
      %v549 = vpop.permute.xlu0 %548
      %550 = vrot.lane.b32.xlu0 %v457, 4
      %v551 = vpop.permute.xlu0 %550
      %552 = vrot.lane.b32.xlu0 %v458, 4
      %v553 = vpop.permute.xlu0 %552
      %554 = vrot.lane.b32.xlu0 %v459, 4
      %v555 = vpop.permute.xlu0 %554
      %vm588 = vcmask 64544
      %589 = vst.msk [vmem:[%s394 + $0x1] sm:$0xff] %vm588, %v493
      %590 = vst.msk [vmem:[%s394 + $0x9] sm:$0xff] %vm588, %v495
      %591 = vst.msk [vmem:[%s394 + $0x19] sm:$0xff] %vm588, %v497
      %592 = vst.msk [vmem:[%s394 + $0x21] sm:$0xff] %vm588, %v499
      %593 = vst.msk [vmem:[%s394 + $0x31] sm:$0xff] %vm588, %v501
      %594 = vst.msk [vmem:[%s394 + $0x39] sm:$0xff] %vm588, %v503
      %595 = vst.msk [vmem:[%s394 + $0x49] sm:$0xff] %vm588, %v505
      %596 = vst.msk [vmem:[%s394 + $0x51] sm:$0xff] %vm588, %v507
      %597 = vst.msk [vmem:[%s394 + $0x61] sm:$0xff] %vm588, %v509
      %598 = vst.msk [vmem:[%s394 + $0x69] sm:$0xff] %vm588, %v511
      %599 = vst.msk [vmem:[%s394 + $0x79] sm:$0xff] %vm588, %v513
      %600 = vst.msk [vmem:[%s394 + $0x81] sm:$0xff] %vm588, %v515
      %601 = vst.msk [vmem:[%s394 + $0x91] sm:$0xff] %vm588, %v517
      %602 = vst.msk [vmem:[%s394 + $0x99] sm:$0xff] %vm588, %v519
      %603 = vst.msk [vmem:[%s394 + $0xa9] sm:$0xff] %vm588, %v521
      %604 = vst.msk [vmem:[%s394 + $0xb1] sm:$0xff] %vm588, %v523
      %605 = vst.msk [vmem:[%s394 + $0xc1] sm:$0xff] %vm588, %v525
      %606 = vst.msk [vmem:[%s394 + $0xc9] sm:$0xff] %vm588, %v527
      %607 = vst.msk [vmem:[%s394 + $0xd9] sm:$0xff] %vm588, %v529
      %608 = vst.msk [vmem:[%s394 + $0xe1] sm:$0xff] %vm588, %v531
      %609 = vst.msk [vmem:[%s394 + $0xf1] sm:$0xff] %vm588, %v533
      %610 = vst.msk [vmem:[%s394 + $0xf9] sm:$0xff] %vm588, %v535
      %611 = vst.msk [vmem:[%s394 + $0x109] sm:$0xff] %vm588, %v537
      %612 = vst.msk [vmem:[%s394 + $0x111] sm:$0xff] %vm588, %v539
      %613 = vst.msk [vmem:[%s394 + $0x121] sm:$0xff] %vm588, %v541
      %614 = vst.msk [vmem:[%s394 + $0x129] sm:$0xff] %vm588, %v543
      %615 = vst.msk [vmem:[%s394 + $0x139] sm:$0xff] %vm588, %v545
      %616 = vst.msk [vmem:[%s394 + $0x141] sm:$0xff] %vm588, %v547
      %617 = vst.msk [vmem:[%s394 + $0x151] sm:$0xff] %vm588, %v549
      %618 = vst.msk [vmem:[%s394 + $0x159] sm:$0xff] %vm588, %v551
      %619 = vst.msk [vmem:[%s394 + $0x169] sm:$0xff] %vm588, %v553
      %620 = vst.msk [vmem:[%s394 + $0x171] sm:$0xff] %vm588, %v555
      %v621 = vld [vmem:[%s3] sm:$0x1]
      %v622 = vld [vmem:[#allocation2] sm:$0xff]
      %v623 = vld [vmem:[#allocation2 + $0x8] sm:$0xff]
      %v624 = vld [vmem:[#allocation2 + $0x18] sm:$0xff]
      %v625 = vld [vmem:[#allocation2 + $0x20] sm:$0xff]
      %v626 = vld [vmem:[#allocation2 + $0x30] sm:$0xff]
      %v627 = vld [vmem:[#allocation2 + $0x38] sm:$0xff]
      %v628 = vld [vmem:[#allocation2 + $0x48] sm:$0xff]
      %v629 = vld [vmem:[#allocation2 + $0x50] sm:$0xff]
      %v630 = vld [vmem:[#allocation2 + $0x60] sm:$0xff]
      %v631 = vld [vmem:[#allocation2 + $0x68] sm:$0xff]
      %v632 = vld [vmem:[#allocation2 + $0x78] sm:$0xff]
      %v633 = vld [vmem:[#allocation2 + $0x80] sm:$0xff]
      %v634 = vld [vmem:[#allocation2 + $0x90] sm:$0xff]
      %v635 = vld [vmem:[#allocation2 + $0x98] sm:$0xff]
      %v636 = vld [vmem:[#allocation2 + $0xa8] sm:$0xff]
      %v637 = vld [vmem:[#allocation2 + $0xb0] sm:$0xff]
      %v638 = vld [vmem:[#allocation2 + $0xc0] sm:$0xff]
      %v639 = vld [vmem:[#allocation2 + $0xc8] sm:$0xff]
      %v640 = vld [vmem:[#allocation2 + $0xd8] sm:$0xff]
      %v641 = vld [vmem:[#allocation2 + $0xe0] sm:$0xff]
      %v642 = vld [vmem:[#allocation2 + $0xf0] sm:$0xff]
      %v643 = vld [vmem:[#allocation2 + $0xf8] sm:$0xff]
      %v644 = vld [vmem:[#allocation2 + $0x108] sm:$0xff]
      %v645 = vld [vmem:[#allocation2 + $0x110] sm:$0xff]
      %v646 = vld [vmem:[#allocation2 + $0x120] sm:$0xff]
      %v647 = vld [vmem:[#allocation2 + $0x128] sm:$0xff]
      %v648 = vld [vmem:[#allocation2 + $0x138] sm:$0xff]
      %v649 = vld [vmem:[#allocation2 + $0x140] sm:$0xff]
      %v650 = vld [vmem:[#allocation2 + $0x150] sm:$0xff]
      %v651 = vld [vmem:[#allocation2 + $0x158] sm:$0xff]
      %v652 = vld [vmem:[#allocation2 + $0x168] sm:$0xff]
      %v653 = vld [vmem:[#allocation2 + $0x170] sm:$0xff]
      %v654 = vpack.c.bf16 %v622, %v622
      %v655 = vpack.c.bf16 %v623, %v623
      %v656 = vpack.c.bf16 %v624, %v624
      %v657 = vpack.c.bf16 %v625, %v625
      %v658 = vpack.c.bf16 %v626, %v626
      %v659 = vpack.c.bf16 %v627, %v627
      %v660 = vpack.c.bf16 %v628, %v628
      %v661 = vpack.c.bf16 %v629, %v629
      %v662 = vpack.c.bf16 %v630, %v630
      %v663 = vpack.c.bf16 %v631, %v631
      %v664 = vpack.c.bf16 %v632, %v632
      %v665 = vpack.c.bf16 %v633, %v633
      %v666 = vpack.c.bf16 %v634, %v634
      %v667 = vpack.c.bf16 %v635, %v635
      %v668 = vpack.c.bf16 %v636, %v636
      %v669 = vpack.c.bf16 %v637, %v637
      %v670 = vpack.c.bf16 %v638, %v638
      %v671 = vpack.c.bf16 %v639, %v639
      %v672 = vpack.c.bf16 %v640, %v640
      %v673 = vpack.c.bf16 %v641, %v641
      %v674 = vpack.c.bf16 %v642, %v642
      %v675 = vpack.c.bf16 %v643, %v643
      %v676 = vpack.c.bf16 %v644, %v644
      %v677 = vpack.c.bf16 %v645, %v645
      %v678 = vpack.c.bf16 %v646, %v646
      %v679 = vpack.c.bf16 %v647, %v647
      %v680 = vpack.c.bf16 %v648, %v648
      %v681 = vpack.c.bf16 %v649, %v649
      %v682 = vpack.c.bf16 %v650, %v650
      %v683 = vpack.c.bf16 %v651, %v651
      %v684 = vpack.c.bf16 %v652, %v652
      %v685 = vpack.c.bf16 %v653, %v653
      %vm686 = vcmask 60416
      %687 = vst.msk [vmem:[#allocation4] sm:$0xf] %vm686, %v654
      %688 = vst.msk [vmem:[#allocation4 + $0x4] sm:$0xf] %vm686, %v655
      %689 = vst.msk [vmem:[#allocation4 + $0x8] sm:$0xf] %vm686, %v656
      %690 = vst.msk [vmem:[#allocation4 + $0xc] sm:$0xf] %vm686, %v657
      %691 = vst.msk [vmem:[#allocation4 + $0x10] sm:$0xf] %vm686, %v658
      %692 = vst.msk [vmem:[#allocation4 + $0x14] sm:$0xf] %vm686, %v659
      %693 = vst.msk [vmem:[#allocation4 + $0x18] sm:$0xf] %vm686, %v660
      %694 = vst.msk [vmem:[#allocation4 + $0x1c] sm:$0xf] %vm686, %v661
      %695 = vst.msk [vmem:[#allocation4 + $0x20] sm:$0xf] %vm686, %v662
      %696 = vst.msk [vmem:[#allocation4 + $0x24] sm:$0xf] %vm686, %v663
      %697 = vst.msk [vmem:[#allocation4 + $0x28] sm:$0xf] %vm686, %v664
      %698 = vst.msk [vmem:[#allocation4 + $0x2c] sm:$0xf] %vm686, %v665
      %699 = vst.msk [vmem:[#allocation4 + $0x30] sm:$0xf] %vm686, %v666
      %700 = vst.msk [vmem:[#allocation4 + $0x34] sm:$0xf] %vm686, %v667
      %701 = vst.msk [vmem:[#allocation4 + $0x38] sm:$0xf] %vm686, %v668
      %702 = vst.msk [vmem:[#allocation4 + $0x3c] sm:$0xf] %vm686, %v669
      %703 = vst.msk [vmem:[#allocation4 + $0x40] sm:$0xf] %vm686, %v670
      %704 = vst.msk [vmem:[#allocation4 + $0x44] sm:$0xf] %vm686, %v671
      %705 = vst.msk [vmem:[#allocation4 + $0x48] sm:$0xf] %vm686, %v672
      %706 = vst.msk [vmem:[#allocation4 + $0x4c] sm:$0xf] %vm686, %v673
      %707 = vst.msk [vmem:[#allocation4 + $0x50] sm:$0xf] %vm686, %v674
      %708 = vst.msk [vmem:[#allocation4 + $0x54] sm:$0xf] %vm686, %v675
      %709 = vst.msk [vmem:[#allocation4 + $0x58] sm:$0xf] %vm686, %v676
      %710 = vst.msk [vmem:[#allocation4 + $0x5c] sm:$0xf] %vm686, %v677
      %711 = vst.msk [vmem:[#allocation4 + $0x60] sm:$0xf] %vm686, %v678
      %712 = vst.msk [vmem:[#allocation4 + $0x64] sm:$0xf] %vm686, %v679
      %713 = vst.msk [vmem:[#allocation4 + $0x68] sm:$0xf] %vm686, %v680
      %714 = vst.msk [vmem:[#allocation4 + $0x6c] sm:$0xf] %vm686, %v681
      %715 = vst.msk [vmem:[#allocation4 + $0x70] sm:$0xf] %vm686, %v682
      %716 = vst.msk [vmem:[#allocation4 + $0x74] sm:$0xf] %vm686, %v683
      %717 = vst.msk [vmem:[#allocation4 + $0x78] sm:$0xf] %vm686, %v684
      %718 = vst.msk [vmem:[#allocation4 + $0x7c] sm:$0xf] %vm686, %v685
      %v719 = vld [vmem:[#allocation2 + $0x1] sm:$0xff]
      %v720 = vld [vmem:[#allocation2 + $0x9] sm:$0xff]
      %v721 = vld [vmem:[#allocation2 + $0x19] sm:$0xff]
      %v722 = vld [vmem:[#allocation2 + $0x21] sm:$0xff]
      %v723 = vld [vmem:[#allocation2 + $0x31] sm:$0xff]
      %v724 = vld [vmem:[#allocation2 + $0x39] sm:$0xff]
      %v725 = vld [vmem:[#allocation2 + $0x49] sm:$0xff]
      %v726 = vld [vmem:[#allocation2 + $0x51] sm:$0xff]
      %v727 = vld [vmem:[#allocation2 + $0x61] sm:$0xff]
      %v728 = vld [vmem:[#allocation2 + $0x69] sm:$0xff]
      %v729 = vld [vmem:[#allocation2 + $0x79] sm:$0xff]
      %v730 = vld [vmem:[#allocation2 + $0x81] sm:$0xff]
      %v731 = vld [vmem:[#allocation2 + $0x91] sm:$0xff]
      %v732 = vld [vmem:[#allocation2 + $0x99] sm:$0xff]
      %v733 = vld [vmem:[#allocation2 + $0xa9] sm:$0xff]
      %v734 = vld [vmem:[#allocation2 + $0xb1] sm:$0xff]
      %v735 = vld [vmem:[#allocation2 + $0xc1] sm:$0xff]
      %v736 = vld [vmem:[#allocation2 + $0xc9] sm:$0xff]
      %v737 = vld [vmem:[#allocation2 + $0xd9] sm:$0xff]
      %v738 = vld [vmem:[#allocation2 + $0xe1] sm:$0xff]
      %v739 = vld [vmem:[#allocation2 + $0xf1] sm:$0xff]
      %v740 = vld [vmem:[#allocation2 + $0xf9] sm:$0xff]
      %v741 = vld [vmem:[#allocation2 + $0x109] sm:$0xff]
      %v742 = vld [vmem:[#allocation2 + $0x111] sm:$0xff]
      %v743 = vld [vmem:[#allocation2 + $0x121] sm:$0xff]
      %v744 = vld [vmem:[#allocation2 + $0x129] sm:$0xff]
      %v745 = vld [vmem:[#allocation2 + $0x139] sm:$0xff]
      %v746 = vld [vmem:[#allocation2 + $0x141] sm:$0xff]
      %v747 = vld [vmem:[#allocation2 + $0x151] sm:$0xff]
      %v748 = vld [vmem:[#allocation2 + $0x159] sm:$0xff]
      %v749 = vld [vmem:[#allocation2 + $0x169] sm:$0xff]
      %v750 = vld [vmem:[#allocation2 + $0x171] sm:$0xff]
      %v751 = vpack.c.bf16 %v719, %v719
      %v752 = vpack.c.bf16 %v720, %v720
      %v753 = vpack.c.bf16 %v721, %v721
      %v754 = vpack.c.bf16 %v722, %v722
      %v755 = vpack.c.bf16 %v723, %v723
      %v756 = vpack.c.bf16 %v724, %v724
      %v757 = vpack.c.bf16 %v725, %v725
      %v758 = vpack.c.bf16 %v726, %v726
      %v759 = vpack.c.bf16 %v727, %v727
      %v760 = vpack.c.bf16 %v728, %v728
      %v761 = vpack.c.bf16 %v729, %v729
      %v762 = vpack.c.bf16 %v730, %v730
      %v763 = vpack.c.bf16 %v731, %v731
      %v764 = vpack.c.bf16 %v732, %v732
      %v765 = vpack.c.bf16 %v733, %v733
      %v766 = vpack.c.bf16 %v734, %v734
      %v767 = vpack.c.bf16 %v735, %v735
      %v768 = vpack.c.bf16 %v736, %v736
      %v769 = vpack.c.bf16 %v737, %v737
      %v770 = vpack.c.bf16 %v738, %v738
      %v771 = vpack.c.bf16 %v739, %v739
      %v772 = vpack.c.bf16 %v740, %v740
      %v773 = vpack.c.bf16 %v741, %v741
      %v774 = vpack.c.bf16 %v742, %v742
      %v775 = vpack.c.bf16 %v743, %v743
      %v776 = vpack.c.bf16 %v744, %v744
      %v777 = vpack.c.bf16 %v745, %v745
      %v778 = vpack.c.bf16 %v746, %v746
      %v779 = vpack.c.bf16 %v747, %v747
      %v780 = vpack.c.bf16 %v748, %v748
      %v781 = vpack.c.bf16 %v749, %v749
      %v782 = vpack.c.bf16 %v750, %v750
      %815 = vrot.lane.b32.xlu0 %v751, 8
      %v816 = vpop.permute.xlu0 %815
      %817 = vrot.lane.b32.xlu0 %v752, 8
      %v818 = vpop.permute.xlu0 %817
      %819 = vrot.lane.b32.xlu0 %v753, 8
      %v820 = vpop.permute.xlu0 %819
      %821 = vrot.lane.b32.xlu0 %v754, 8
      %v822 = vpop.permute.xlu0 %821
      %823 = vrot.lane.b32.xlu0 %v755, 8
      %v824 = vpop.permute.xlu0 %823
      %825 = vrot.lane.b32.xlu0 %v756, 8
      %v826 = vpop.permute.xlu0 %825
      %827 = vrot.lane.b32.xlu0 %v757, 8
      %v828 = vpop.permute.xlu0 %827
      %829 = vrot.lane.b32.xlu0 %v758, 8
      %v830 = vpop.permute.xlu0 %829
      %831 = vrot.lane.b32.xlu0 %v759, 8
      %v832 = vpop.permute.xlu0 %831
      %833 = vrot.lane.b32.xlu0 %v760, 8
      %v834 = vpop.permute.xlu0 %833
      %835 = vrot.lane.b32.xlu0 %v761, 8
      %v836 = vpop.permute.xlu0 %835
      %837 = vrot.lane.b32.xlu0 %v762, 8
      %v838 = vpop.permute.xlu0 %837
      %839 = vrot.lane.b32.xlu0 %v763, 8
      %v840 = vpop.permute.xlu0 %839
      %841 = vrot.lane.b32.xlu0 %v764, 8
      %v842 = vpop.permute.xlu0 %841
      %843 = vrot.lane.b32.xlu0 %v765, 8
      %v844 = vpop.permute.xlu0 %843
      %845 = vrot.lane.b32.xlu0 %v766, 8
      %v846 = vpop.permute.xlu0 %845
      %847 = vrot.lane.b32.xlu0 %v767, 8
      %v848 = vpop.permute.xlu0 %847
      %849 = vrot.lane.b32.xlu0 %v768, 8
      %v850 = vpop.permute.xlu0 %849
      %851 = vrot.lane.b32.xlu0 %v769, 8
      %v852 = vpop.permute.xlu0 %851
      %853 = vrot.lane.b32.xlu0 %v770, 8
      %v854 = vpop.permute.xlu0 %853
      %855 = vrot.lane.b32.xlu0 %v771, 8
      %v856 = vpop.permute.xlu0 %855
      %857 = vrot.lane.b32.xlu0 %v772, 8
      %v858 = vpop.permute.xlu0 %857
      %859 = vrot.lane.b32.xlu0 %v773, 8
      %v860 = vpop.permute.xlu0 %859
      %861 = vrot.lane.b32.xlu0 %v774, 8
      %v862 = vpop.permute.xlu0 %861
      %863 = vrot.lane.b32.xlu0 %v775, 8
      %v864 = vpop.permute.xlu0 %863
      %865 = vrot.lane.b32.xlu0 %v776, 8
      %v866 = vpop.permute.xlu0 %865
      %867 = vrot.lane.b32.xlu0 %v777, 8
      %v868 = vpop.permute.xlu0 %867
      %869 = vrot.lane.b32.xlu0 %v778, 8
      %v870 = vpop.permute.xlu0 %869
      %871 = vrot.lane.b32.xlu0 %v779, 8
      %v872 = vpop.permute.xlu0 %871
      %873 = vrot.lane.b32.xlu0 %v780, 8
      %v874 = vpop.permute.xlu0 %873
      %875 = vrot.lane.b32.xlu0 %v781, 8
      %v876 = vpop.permute.xlu0 %875
      %877 = vrot.lane.b32.xlu0 %v782, 8
      %v878 = vpop.permute.xlu0 %877
      %vm911 = vcmask 126016
      %912 = vst.msk [vmem:[#allocation4] sm:$0xf] %vm911, %v816
      %913 = vst.msk [vmem:[#allocation4 + $0x4] sm:$0xf] %vm911, %v818
      %914 = vst.msk [vmem:[#allocation4 + $0x8] sm:$0xf] %vm911, %v820
      %915 = vst.msk [vmem:[#allocation4 + $0xc] sm:$0xf] %vm911, %v822
      %916 = vst.msk [vmem:[#allocation4 + $0x10] sm:$0xf] %vm911, %v824
      %917 = vst.msk [vmem:[#allocation4 + $0x14] sm:$0xf] %vm911, %v826
      %918 = vst.msk [vmem:[#allocation4 + $0x18] sm:$0xf] %vm911, %v828
      %919 = vst.msk [vmem:[#allocation4 + $0x1c] sm:$0xf] %vm911, %v830
      %920 = vst.msk [vmem:[#allocation4 + $0x20] sm:$0xf] %vm911, %v832
      %921 = vst.msk [vmem:[#allocation4 + $0x24] sm:$0xf] %vm911, %v834
      %922 = vst.msk [vmem:[#allocation4 + $0x28] sm:$0xf] %vm911, %v836
      %923 = vst.msk [vmem:[#allocation4 + $0x2c] sm:$0xf] %vm911, %v838
      %924 = vst.msk [vmem:[#allocation4 + $0x30] sm:$0xf] %vm911, %v840
      %925 = vst.msk [vmem:[#allocation4 + $0x34] sm:$0xf] %vm911, %v842
      %926 = vst.msk [vmem:[#allocation4 + $0x38] sm:$0xf] %vm911, %v844
      %927 = vst.msk [vmem:[#allocation4 + $0x3c] sm:$0xf] %vm911, %v846
      %928 = vst.msk [vmem:[#allocation4 + $0x40] sm:$0xf] %vm911, %v848
      %929 = vst.msk [vmem:[#allocation4 + $0x44] sm:$0xf] %vm911, %v850
      %930 = vst.msk [vmem:[#allocation4 + $0x48] sm:$0xf] %vm911, %v852
      %931 = vst.msk [vmem:[#allocation4 + $0x4c] sm:$0xf] %vm911, %v854
      %932 = vst.msk [vmem:[#allocation4 + $0x50] sm:$0xf] %vm911, %v856
      %933 = vst.msk [vmem:[#allocation4 + $0x54] sm:$0xf] %vm911, %v858
      %934 = vst.msk [vmem:[#allocation4 + $0x58] sm:$0xf] %vm911, %v860
      %935 = vst.msk [vmem:[#allocation4 + $0x5c] sm:$0xf] %vm911, %v862
      %936 = vst.msk [vmem:[#allocation4 + $0x60] sm:$0xf] %vm911, %v864
      %937 = vst.msk [vmem:[#allocation4 + $0x64] sm:$0xf] %vm911, %v866
      %938 = vst.msk [vmem:[#allocation4 + $0x68] sm:$0xf] %vm911, %v868
      %939 = vst.msk [vmem:[#allocation4 + $0x6c] sm:$0xf] %vm911, %v870
      %940 = vst.msk [vmem:[#allocation4 + $0x70] sm:$0xf] %vm911, %v872
      %941 = vst.msk [vmem:[#allocation4 + $0x74] sm:$0xf] %vm911, %v874
      %942 = vst.msk [vmem:[#allocation4 + $0x78] sm:$0xf] %vm911, %v876
      %943 = vst.msk [vmem:[#allocation4 + $0x7c] sm:$0xf] %vm911, %v878
      %v944 = vld [vmem:[#allocation2 + $0x2] sm:$0xff]
      %v945 = vld [vmem:[#allocation2 + $0xa] sm:$0xff]
      %v946 = vld [vmem:[#allocation2 + $0x1a] sm:$0xff]
      %v947 = vld [vmem:[#allocation2 + $0x22] sm:$0xff]
      %v948 = vld [vmem:[#allocation2 + $0x32] sm:$0xff]
      %v949 = vld [vmem:[#allocation2 + $0x3a] sm:$0xff]
      %v950 = vld [vmem:[#allocation2 + $0x4a] sm:$0xff]
      %v951 = vld [vmem:[#allocation2 + $0x52] sm:$0xff]
      %v952 = vld [vmem:[#allocation2 + $0x62] sm:$0xff]
      %v953 = vld [vmem:[#allocation2 + $0x6a] sm:$0xff]
      %v954 = vld [vmem:[#allocation2 + $0x7a] sm:$0xff]
      %v955 = vld [vmem:[#allocation2 + $0x82] sm:$0xff]
      %v956 = vld [vmem:[#allocation2 + $0x92] sm:$0xff]
      %v957 = vld [vmem:[#allocation2 + $0x9a] sm:$0xff]
      %v958 = vld [vmem:[#allocation2 + $0xaa] sm:$0xff]
      %v959 = vld [vmem:[#allocation2 + $0xb2] sm:$0xff]
      %v960 = vld [vmem:[#allocation2 + $0xc2] sm:$0xff]
      %v961 = vld [vmem:[#allocation2 + $0xca] sm:$0xff]
      %v962 = vld [vmem:[#allocation2 + $0xda] sm:$0xff]
      %v963 = vld [vmem:[#allocation2 + $0xe2] sm:$0xff]
      %v964 = vld [vmem:[#allocation2 + $0xf2] sm:$0xff]
      %v965 = vld [vmem:[#allocation2 + $0xfa] sm:$0xff]
      %v966 = vld [vmem:[#allocation2 + $0x10a] sm:$0xff]
      %v967 = vld [vmem:[#allocation2 + $0x112] sm:$0xff]
      %v968 = vld [vmem:[#allocation2 + $0x122] sm:$0xff]
      %v969 = vld [vmem:[#allocation2 + $0x12a] sm:$0xff]
      %v970 = vld [vmem:[#allocation2 + $0x13a] sm:$0xff]
      %v971 = vld [vmem:[#allocation2 + $0x142] sm:$0xff]
      %v972 = vld [vmem:[#allocation2 + $0x152] sm:$0xff]
      %v973 = vld [vmem:[#allocation2 + $0x15a] sm:$0xff]
      %v974 = vld [vmem:[#allocation2 + $0x16a] sm:$0xff]
      %v975 = vld [vmem:[#allocation2 + $0x172] sm:$0xff]
      %v976 = vpack.c.bf16 %v944, %v944
      %v977 = vpack.c.bf16 %v945, %v945
      %v978 = vpack.c.bf16 %v946, %v946
      %v979 = vpack.c.bf16 %v947, %v947
      %v980 = vpack.c.bf16 %v948, %v948
      %v981 = vpack.c.bf16 %v949, %v949
      %v982 = vpack.c.bf16 %v950, %v950
      %v983 = vpack.c.bf16 %v951, %v951
      %v984 = vpack.c.bf16 %v952, %v952
      %v985 = vpack.c.bf16 %v953, %v953
      %v986 = vpack.c.bf16 %v954, %v954
      %v987 = vpack.c.bf16 %v955, %v955
      %v988 = vpack.c.bf16 %v956, %v956
      %v989 = vpack.c.bf16 %v957, %v957
      %v990 = vpack.c.bf16 %v958, %v958
      %v991 = vpack.c.bf16 %v959, %v959
      %v992 = vpack.c.bf16 %v960, %v960
      %v993 = vpack.c.bf16 %v961, %v961
      %v994 = vpack.c.bf16 %v962, %v962
      %v995 = vpack.c.bf16 %v963, %v963
      %v996 = vpack.c.bf16 %v964, %v964
      %v997 = vpack.c.bf16 %v965, %v965
      %v998 = vpack.c.bf16 %v966, %v966
      %v999 = vpack.c.bf16 %v967, %v967
      %v1000 = vpack.c.bf16 %v968, %v968
      %v1001 = vpack.c.bf16 %v969, %v969
      %v1002 = vpack.c.bf16 %v970, %v970
      %v1003 = vpack.c.bf16 %v971, %v971
      %v1004 = vpack.c.bf16 %v972, %v972
      %v1005 = vpack.c.bf16 %v973, %v973
      %v1006 = vpack.c.bf16 %v974, %v974
      %v1007 = vpack.c.bf16 %v975, %v975
      %1040 = vrot.lane.b32.xlu0 %v976, 16
      %v1041 = vpop.permute.xlu0 %1040
      %1042 = vrot.lane.b32.xlu0 %v977, 16
      %v1043 = vpop.permute.xlu0 %1042
      %1044 = vrot.lane.b32.xlu0 %v978, 16
      %v1045 = vpop.permute.xlu0 %1044
      %1046 = vrot.lane.b32.xlu0 %v979, 16
      %v1047 = vpop.permute.xlu0 %1046
      %1048 = vrot.lane.b32.xlu0 %v980, 16
      %v1049 = vpop.permute.xlu0 %1048
      %1050 = vrot.lane.b32.xlu0 %v981, 16
      %v1051 = vpop.permute.xlu0 %1050
      %1052 = vrot.lane.b32.xlu0 %v982, 16
      %v1053 = vpop.permute.xlu0 %1052
      %1054 = vrot.lane.b32.xlu0 %v983, 16
      %v1055 = vpop.permute.xlu0 %1054
      %1056 = vrot.lane.b32.xlu0 %v984, 16
      %v1057 = vpop.permute.xlu0 %1056
      %1058 = vrot.lane.b32.xlu0 %v985, 16
      %v1059 = vpop.permute.xlu0 %1058
      %1060 = vrot.lane.b32.xlu0 %v986, 16
      %v1061 = vpop.permute.xlu0 %1060
      %1062 = vrot.lane.b32.xlu0 %v987, 16
      %v1063 = vpop.permute.xlu0 %1062
      %1064 = vrot.lane.b32.xlu0 %v988, 16
      %v1065 = vpop.permute.xlu0 %1064
      %1066 = vrot.lane.b32.xlu0 %v989, 16
      %v1067 = vpop.permute.xlu0 %1066
      %1068 = vrot.lane.b32.xlu0 %v990, 16
      %v1069 = vpop.permute.xlu0 %1068
      %1070 = vrot.lane.b32.xlu0 %v991, 16
      %v1071 = vpop.permute.xlu0 %1070
      %1072 = vrot.lane.b32.xlu0 %v992, 16
      %v1073 = vpop.permute.xlu0 %1072
      %1074 = vrot.lane.b32.xlu0 %v993, 16
      %v1075 = vpop.permute.xlu0 %1074
      %1076 = vrot.lane.b32.xlu0 %v994, 16
      %v1077 = vpop.permute.xlu0 %1076
      %1078 = vrot.lane.b32.xlu0 %v995, 16
      %v1079 = vpop.permute.xlu0 %1078
      %1080 = vrot.lane.b32.xlu0 %v996, 16
      %v1081 = vpop.permute.xlu0 %1080
      %1082 = vrot.lane.b32.xlu0 %v997, 16
      %v1083 = vpop.permute.xlu0 %1082
      %1084 = vrot.lane.b32.xlu0 %v998, 16
      %v1085 = vpop.permute.xlu0 %1084
      %1086 = vrot.lane.b32.xlu0 %v999, 16
      %v1087 = vpop.permute.xlu0 %1086
      %1088 = vrot.lane.b32.xlu0 %v1000, 16
      %v1089 = vpop.permute.xlu0 %1088
      %1090 = vrot.lane.b32.xlu0 %v1001, 16
      %v1091 = vpop.permute.xlu0 %1090
      %1092 = vrot.lane.b32.xlu0 %v1002, 16
      %v1093 = vpop.permute.xlu0 %1092
      %1094 = vrot.lane.b32.xlu0 %v1003, 16
      %v1095 = vpop.permute.xlu0 %1094
      %1096 = vrot.lane.b32.xlu0 %v1004, 16
      %v1097 = vpop.permute.xlu0 %1096
      %1098 = vrot.lane.b32.xlu0 %v1005, 16
      %v1099 = vpop.permute.xlu0 %1098
      %1100 = vrot.lane.b32.xlu0 %v1006, 16
      %v1101 = vpop.permute.xlu0 %1100
      %1102 = vrot.lane.b32.xlu0 %v1007, 16
      %v1103 = vpop.permute.xlu0 %1102
      %vm1136 = vcmask 191616
      %1137 = vst.msk [vmem:[#allocation4] sm:$0xf] %vm1136, %v1041
      %1138 = vst.msk [vmem:[#allocation4 + $0x4] sm:$0xf] %vm1136, %v1043
      %1139 = vst.msk [vmem:[#allocation4 + $0x8] sm:$0xf] %vm1136, %v1045
      %1140 = vst.msk [vmem:[#allocation4 + $0xc] sm:$0xf] %vm1136, %v1047
      %1141 = vst.msk [vmem:[#allocation4 + $0x10] sm:$0xf] %vm1136, %v1049
      %1142 = vst.msk [vmem:[#allocation4 + $0x14] sm:$0xf] %vm1136, %v1051
      %1143 = vst.msk [vmem:[#allocation4 + $0x18] sm:$0xf] %vm1136, %v1053
      %1144 = vst.msk [vmem:[#allocation4 + $0x1c] sm:$0xf] %vm1136, %v1055
      %1145 = vst.msk [vmem:[#allocation4 + $0x20] sm:$0xf] %vm1136, %v1057
      %1146 = vst.msk [vmem:[#allocation4 + $0x24] sm:$0xf] %vm1136, %v1059
      %1147 = vst.msk [vmem:[#allocation4 + $0x28] sm:$0xf] %vm1136, %v1061
      %1148 = vst.msk [vmem:[#allocation4 + $0x2c] sm:$0xf] %vm1136, %v1063
      %1149 = vst.msk [vmem:[#allocation4 + $0x30] sm:$0xf] %vm1136, %v1065
      %1150 = vst.msk [vmem:[#allocation4 + $0x34] sm:$0xf] %vm1136, %v1067
      %1151 = vst.msk [vmem:[#allocation4 + $0x38] sm:$0xf] %vm1136, %v1069
      %1152 = vst.msk [vmem:[#allocation4 + $0x3c] sm:$0xf] %vm1136, %v1071
      %1153 = vst.msk [vmem:[#allocation4 + $0x40] sm:$0xf] %vm1136, %v1073
      %1154 = vst.msk [vmem:[#allocation4 + $0x44] sm:$0xf] %vm1136, %v1075
      %1155 = vst.msk [vmem:[#allocation4 + $0x48] sm:$0xf] %vm1136, %v1077
      %1156 = vst.msk [vmem:[#allocation4 + $0x4c] sm:$0xf] %vm1136, %v1079
      %1157 = vst.msk [vmem:[#allocation4 + $0x50] sm:$0xf] %vm1136, %v1081
      %1158 = vst.msk [vmem:[#allocation4 + $0x54] sm:$0xf] %vm1136, %v1083
      %1159 = vst.msk [vmem:[#allocation4 + $0x58] sm:$0xf] %vm1136, %v1085
      %1160 = vst.msk [vmem:[#allocation4 + $0x5c] sm:$0xf] %vm1136, %v1087
      %1161 = vst.msk [vmem:[#allocation4 + $0x60] sm:$0xf] %vm1136, %v1089
      %1162 = vst.msk [vmem:[#allocation4 + $0x64] sm:$0xf] %vm1136, %v1091
      %1163 = vst.msk [vmem:[#allocation4 + $0x68] sm:$0xf] %vm1136, %v1093
      %1164 = vst.msk [vmem:[#allocation4 + $0x6c] sm:$0xf] %vm1136, %v1095
      %1165 = vst.msk [vmem:[#allocation4 + $0x70] sm:$0xf] %vm1136, %v1097
      %1166 = vst.msk [vmem:[#allocation4 + $0x74] sm:$0xf] %vm1136, %v1099
      %1167 = vst.msk [vmem:[#allocation4 + $0x78] sm:$0xf] %vm1136, %v1101
      %1168 = vst.msk [vmem:[#allocation4 + $0x7c] sm:$0xf] %vm1136, %v1103
      %v1169 = vld [vmem:[%s394] sm:$0xff]
      %v1170 = vld [vmem:[%s394 + $0x8] sm:$0xff]
      %v1171 = vld [vmem:[%s394 + $0x18] sm:$0xff]
      %v1172 = vld [vmem:[%s394 + $0x20] sm:$0xff]
      %v1173 = vld [vmem:[%s394 + $0x30] sm:$0xff]
      %v1174 = vld [vmem:[%s394 + $0x38] sm:$0xff]
      %v1175 = vld [vmem:[%s394 + $0x48] sm:$0xff]
      %v1176 = vld [vmem:[%s394 + $0x50] sm:$0xff]
      %v1177 = vld [vmem:[%s394 + $0x60] sm:$0xff]
      %v1178 = vld [vmem:[%s394 + $0x68] sm:$0xff]
      %v1179 = vld [vmem:[%s394 + $0x78] sm:$0xff]
      %v1180 = vld [vmem:[%s394 + $0x80] sm:$0xff]
      %v1181 = vld [vmem:[%s394 + $0x90] sm:$0xff]
      %v1182 = vld [vmem:[%s394 + $0x98] sm:$0xff]
      %v1183 = vld [vmem:[%s394 + $0xa8] sm:$0xff]
      %v1184 = vld [vmem:[%s394 + $0xb0] sm:$0xff]
      %v1185 = vld [vmem:[%s394 + $0xc0] sm:$0xff]
      %v1186 = vld [vmem:[%s394 + $0xc8] sm:$0xff]
      %v1187 = vld [vmem:[%s394 + $0xd8] sm:$0xff]
      %v1188 = vld [vmem:[%s394 + $0xe0] sm:$0xff]
      %v1189 = vld [vmem:[%s394 + $0xf0] sm:$0xff]
      %v1190 = vld [vmem:[%s394 + $0xf8] sm:$0xff]
      %v1191 = vld [vmem:[%s394 + $0x108] sm:$0xff]
      %v1192 = vld [vmem:[%s394 + $0x110] sm:$0xff]
      %v1193 = vld [vmem:[%s394 + $0x120] sm:$0xff]
      %v1194 = vld [vmem:[%s394 + $0x128] sm:$0xff]
      %v1195 = vld [vmem:[%s394 + $0x138] sm:$0xff]
      %v1196 = vld [vmem:[%s394 + $0x140] sm:$0xff]
      %v1197 = vld [vmem:[%s394 + $0x150] sm:$0xff]
      %v1198 = vld [vmem:[%s394 + $0x158] sm:$0xff]
      %v1199 = vld [vmem:[%s394 + $0x168] sm:$0xff]
      %v1200 = vld [vmem:[%s394 + $0x170] sm:$0xff]
      %v1201 = vpack.c.bf16 %v1169, %v1169
      %v1202 = vpack.c.bf16 %v1170, %v1170
      %v1203 = vpack.c.bf16 %v1171, %v1171
      %v1204 = vpack.c.bf16 %v1172, %v1172
      %v1205 = vpack.c.bf16 %v1173, %v1173
      %v1206 = vpack.c.bf16 %v1174, %v1174
      %v1207 = vpack.c.bf16 %v1175, %v1175
      %v1208 = vpack.c.bf16 %v1176, %v1176
      %v1209 = vpack.c.bf16 %v1177, %v1177
      %v1210 = vpack.c.bf16 %v1178, %v1178
      %v1211 = vpack.c.bf16 %v1179, %v1179
      %v1212 = vpack.c.bf16 %v1180, %v1180
      %v1213 = vpack.c.bf16 %v1181, %v1181
      %v1214 = vpack.c.bf16 %v1182, %v1182
      %v1215 = vpack.c.bf16 %v1183, %v1183
      %v1216 = vpack.c.bf16 %v1184, %v1184
      %v1217 = vpack.c.bf16 %v1185, %v1185
      %v1218 = vpack.c.bf16 %v1186, %v1186
      %v1219 = vpack.c.bf16 %v1187, %v1187
      %v1220 = vpack.c.bf16 %v1188, %v1188
      %v1221 = vpack.c.bf16 %v1189, %v1189
      %v1222 = vpack.c.bf16 %v1190, %v1190
      %v1223 = vpack.c.bf16 %v1191, %v1191
      %v1224 = vpack.c.bf16 %v1192, %v1192
      %v1225 = vpack.c.bf16 %v1193, %v1193
      %v1226 = vpack.c.bf16 %v1194, %v1194
      %v1227 = vpack.c.bf16 %v1195, %v1195
      %v1228 = vpack.c.bf16 %v1196, %v1196
      %v1229 = vpack.c.bf16 %v1197, %v1197
      %v1230 = vpack.c.bf16 %v1198, %v1198
      %v1231 = vpack.c.bf16 %v1199, %v1199
      %v1232 = vpack.c.bf16 %v1200, %v1200
      %1265 = vrot.lane.b32.xlu0 %v1201, 24
      %v1266 = vpop.permute.xlu0 %1265
      %1267 = vrot.lane.b32.xlu0 %v1202, 24
      %v1268 = vpop.permute.xlu0 %1267
      %1269 = vrot.lane.b32.xlu0 %v1203, 24
      %v1270 = vpop.permute.xlu0 %1269
      %1271 = vrot.lane.b32.xlu0 %v1204, 24
      %v1272 = vpop.permute.xlu0 %1271
      %1273 = vrot.lane.b32.xlu0 %v1205, 24
      %v1274 = vpop.permute.xlu0 %1273
      %1275 = vrot.lane.b32.xlu0 %v1206, 24
      %v1276 = vpop.permute.xlu0 %1275
      %1277 = vrot.lane.b32.xlu0 %v1207, 24
      %v1278 = vpop.permute.xlu0 %1277
      %1279 = vrot.lane.b32.xlu0 %v1208, 24
      %v1280 = vpop.permute.xlu0 %1279
      %1281 = vrot.lane.b32.xlu0 %v1209, 24
      %v1282 = vpop.permute.xlu0 %1281
      %1283 = vrot.lane.b32.xlu0 %v1210, 24
      %v1284 = vpop.permute.xlu0 %1283
      %1285 = vrot.lane.b32.xlu0 %v1211, 24
      %v1286 = vpop.permute.xlu0 %1285
      %1287 = vrot.lane.b32.xlu0 %v1212, 24
      %v1288 = vpop.permute.xlu0 %1287
      %1289 = vrot.lane.b32.xlu0 %v1213, 24
      %v1290 = vpop.permute.xlu0 %1289
      %1291 = vrot.lane.b32.xlu0 %v1214, 24
      %v1292 = vpop.permute.xlu0 %1291
      %1293 = vrot.lane.b32.xlu0 %v1215, 24
      %v1294 = vpop.permute.xlu0 %1293
      %1295 = vrot.lane.b32.xlu0 %v1216, 24
      %v1296 = vpop.permute.xlu0 %1295
      %1297 = vrot.lane.b32.xlu0 %v1217, 24
      %v1298 = vpop.permute.xlu0 %1297
      %1299 = vrot.lane.b32.xlu0 %v1218, 24
      %v1300 = vpop.permute.xlu0 %1299
      %1301 = vrot.lane.b32.xlu0 %v1219, 24
      %v1302 = vpop.permute.xlu0 %1301
      %1303 = vrot.lane.b32.xlu0 %v1220, 24
      %v1304 = vpop.permute.xlu0 %1303
      %1305 = vrot.lane.b32.xlu0 %v1221, 24
      %v1306 = vpop.permute.xlu0 %1305
      %1307 = vrot.lane.b32.xlu0 %v1222, 24
      %v1308 = vpop.permute.xlu0 %1307
      %1309 = vrot.lane.b32.xlu0 %v1223, 24
      %v1310 = vpop.permute.xlu0 %1309
      %1311 = vrot.lane.b32.xlu0 %v1224, 24
      %v1312 = vpop.permute.xlu0 %1311
      %1313 = vrot.lane.b32.xlu0 %v1225, 24
      %v1314 = vpop.permute.xlu0 %1313
      %1315 = vrot.lane.b32.xlu0 %v1226, 24
      %v1316 = vpop.permute.xlu0 %1315
      %1317 = vrot.lane.b32.xlu0 %v1227, 24
      %v1318 = vpop.permute.xlu0 %1317
      %1319 = vrot.lane.b32.xlu0 %v1228, 24
      %v1320 = vpop.permute.xlu0 %1319
      %1321 = vrot.lane.b32.xlu0 %v1229, 24
      %v1322 = vpop.permute.xlu0 %1321
      %1323 = vrot.lane.b32.xlu0 %v1230, 24
      %v1324 = vpop.permute.xlu0 %1323
      %1325 = vrot.lane.b32.xlu0 %v1231, 24
      %v1326 = vpop.permute.xlu0 %1325
      %1327 = vrot.lane.b32.xlu0 %v1232, 24
      %v1328 = vpop.permute.xlu0 %1327
      %vm1361 = vcmask 257216
      %1362 = vst.msk [vmem:[#allocation4] sm:$0xf] %vm1361, %v1266
      %1363 = vst.msk [vmem:[#allocation4 + $0x4] sm:$0xf] %vm1361, %v1268
      %1364 = vst.msk [vmem:[#allocation4 + $0x8] sm:$0xf] %vm1361, %v1270
      %1365 = vst.msk [vmem:[#allocation4 + $0xc] sm:$0xf] %vm1361, %v1272
      %1366 = vst.msk [vmem:[#allocation4 + $0x10] sm:$0xf] %vm1361, %v1274
      %1367 = vst.msk [vmem:[#allocation4 + $0x14] sm:$0xf] %vm1361, %v1276
      %1368 = vst.msk [vmem:[#allocation4 + $0x18] sm:$0xf] %vm1361, %v1278
      %1369 = vst.msk [vmem:[#allocation4 + $0x1c] sm:$0xf] %vm1361, %v1280
      %1370 = vst.msk [vmem:[#allocation4 + $0x20] sm:$0xf] %vm1361, %v1282
      %1371 = vst.msk [vmem:[#allocation4 + $0x24] sm:$0xf] %vm1361, %v1284
      %1372 = vst.msk [vmem:[#allocation4 + $0x28] sm:$0xf] %vm1361, %v1286
      %1373 = vst.msk [vmem:[#allocation4 + $0x2c] sm:$0xf] %vm1361, %v1288
      %1374 = vst.msk [vmem:[#allocation4 + $0x30] sm:$0xf] %vm1361, %v1290
      %1375 = vst.msk [vmem:[#allocation4 + $0x34] sm:$0xf] %vm1361, %v1292
      %1376 = vst.msk [vmem:[#allocation4 + $0x38] sm:$0xf] %vm1361, %v1294
      %1377 = vst.msk [vmem:[#allocation4 + $0x3c] sm:$0xf] %vm1361, %v1296
      %1378 = vst.msk [vmem:[#allocation4 + $0x40] sm:$0xf] %vm1361, %v1298
      %1379 = vst.msk [vmem:[#allocation4 + $0x44] sm:$0xf] %vm1361, %v1300
      %1380 = vst.msk [vmem:[#allocation4 + $0x48] sm:$0xf] %vm1361, %v1302
      %1381 = vst.msk [vmem:[#allocation4 + $0x4c] sm:$0xf] %vm1361, %v1304
      %1382 = vst.msk [vmem:[#allocation4 + $0x50] sm:$0xf] %vm1361, %v1306
      %1383 = vst.msk [vmem:[#allocation4 + $0x54] sm:$0xf] %vm1361, %v1308
      %1384 = vst.msk [vmem:[#allocation4 + $0x58] sm:$0xf] %vm1361, %v1310
      %1385 = vst.msk [vmem:[#allocation4 + $0x5c] sm:$0xf] %vm1361, %v1312
      %1386 = vst.msk [vmem:[#allocation4 + $0x60] sm:$0xf] %vm1361, %v1314
      %1387 = vst.msk [vmem:[#allocation4 + $0x64] sm:$0xf] %vm1361, %v1316
      %1388 = vst.msk [vmem:[#allocation4 + $0x68] sm:$0xf] %vm1361, %v1318
      %1389 = vst.msk [vmem:[#allocation4 + $0x6c] sm:$0xf] %vm1361, %v1320
      %1390 = vst.msk [vmem:[#allocation4 + $0x70] sm:$0xf] %vm1361, %v1322
      %1391 = vst.msk [vmem:[#allocation4 + $0x74] sm:$0xf] %vm1361, %v1324
      %1392 = vst.msk [vmem:[#allocation4 + $0x78] sm:$0xf] %vm1361, %v1326
      %1393 = vst.msk [vmem:[#allocation4 + $0x7c] sm:$0xf] %vm1361, %v1328
      %v1394 = vld [vmem:[%s394 + $0x1] sm:$0xff]
      %v1395 = vld [vmem:[%s394 + $0x9] sm:$0xff]
      %v1396 = vld [vmem:[%s394 + $0x19] sm:$0xff]
      %v1397 = vld [vmem:[%s394 + $0x21] sm:$0xff]
      %v1398 = vld [vmem:[%s394 + $0x31] sm:$0xff]
      %v1399 = vld [vmem:[%s394 + $0x39] sm:$0xff]
      %v1400 = vld [vmem:[%s394 + $0x49] sm:$0xff]
      %v1401 = vld [vmem:[%s394 + $0x51] sm:$0xff]
      %v1402 = vld [vmem:[%s394 + $0x61] sm:$0xff]
      %v1403 = vld [vmem:[%s394 + $0x69] sm:$0xff]
      %v1404 = vld [vmem:[%s394 + $0x79] sm:$0xff]
      %v1405 = vld [vmem:[%s394 + $0x81] sm:$0xff]
      %v1406 = vld [vmem:[%s394 + $0x91] sm:$0xff]
      %v1407 = vld [vmem:[%s394 + $0x99] sm:$0xff]
      %v1408 = vld [vmem:[%s394 + $0xa9] sm:$0xff]
      %v1409 = vld [vmem:[%s394 + $0xb1] sm:$0xff]
      %v1410 = vld [vmem:[%s394 + $0xc1] sm:$0xff]
      %v1411 = vld [vmem:[%s394 + $0xc9] sm:$0xff]
      %v1412 = vld [vmem:[%s394 + $0xd9] sm:$0xff]
      %v1413 = vld [vmem:[%s394 + $0xe1] sm:$0xff]
      %v1414 = vld [vmem:[%s394 + $0xf1] sm:$0xff]
      %v1415 = vld [vmem:[%s394 + $0xf9] sm:$0xff]
      %v1416 = vld [vmem:[%s394 + $0x109] sm:$0xff]
      %v1417 = vld [vmem:[%s394 + $0x111] sm:$0xff]
      %v1418 = vld [vmem:[%s394 + $0x121] sm:$0xff]
      %v1419 = vld [vmem:[%s394 + $0x129] sm:$0xff]
      %v1420 = vld [vmem:[%s394 + $0x139] sm:$0xff]
      %v1421 = vld [vmem:[%s394 + $0x141] sm:$0xff]
      %v1422 = vld [vmem:[%s394 + $0x151] sm:$0xff]
      %v1423 = vld [vmem:[%s394 + $0x159] sm:$0xff]
      %v1424 = vld [vmem:[%s394 + $0x169] sm:$0xff]
      %v1425 = vld [vmem:[%s394 + $0x171] sm:$0xff]
      %v1426 = vpack.c.bf16 %v1394, %v1394
      %v1427 = vpack.c.bf16 %v1395, %v1395
      %v1428 = vpack.c.bf16 %v1396, %v1396
      %v1429 = vpack.c.bf16 %v1397, %v1397
      %v1430 = vpack.c.bf16 %v1398, %v1398
      %v1431 = vpack.c.bf16 %v1399, %v1399
      %v1432 = vpack.c.bf16 %v1400, %v1400
      %v1433 = vpack.c.bf16 %v1401, %v1401
      %v1434 = vpack.c.bf16 %v1402, %v1402
      %v1435 = vpack.c.bf16 %v1403, %v1403
      %v1436 = vpack.c.bf16 %v1404, %v1404
      %v1437 = vpack.c.bf16 %v1405, %v1405
      %v1438 = vpack.c.bf16 %v1406, %v1406
      %v1439 = vpack.c.bf16 %v1407, %v1407
      %v1440 = vpack.c.bf16 %v1408, %v1408
      %v1441 = vpack.c.bf16 %v1409, %v1409
      %v1442 = vpack.c.bf16 %v1410, %v1410
      %v1443 = vpack.c.bf16 %v1411, %v1411
      %v1444 = vpack.c.bf16 %v1412, %v1412
      %v1445 = vpack.c.bf16 %v1413, %v1413
      %v1446 = vpack.c.bf16 %v1414, %v1414
      %v1447 = vpack.c.bf16 %v1415, %v1415
      %v1448 = vpack.c.bf16 %v1416, %v1416
      %v1449 = vpack.c.bf16 %v1417, %v1417
      %v1450 = vpack.c.bf16 %v1418, %v1418
      %v1451 = vpack.c.bf16 %v1419, %v1419
      %v1452 = vpack.c.bf16 %v1420, %v1420
      %v1453 = vpack.c.bf16 %v1421, %v1421
      %v1454 = vpack.c.bf16 %v1422, %v1422
      %v1455 = vpack.c.bf16 %v1423, %v1423
      %v1456 = vpack.c.bf16 %v1424, %v1424
      %v1457 = vpack.c.bf16 %v1425, %v1425
      %1490 = vrot.lane.b32.xlu0 %v1426, 32
      %v1491 = vpop.permute.xlu0 %1490
      %1492 = vrot.lane.b32.xlu0 %v1427, 32
      %v1493 = vpop.permute.xlu0 %1492
      %1494 = vrot.lane.b32.xlu0 %v1428, 32
      %v1495 = vpop.permute.xlu0 %1494
      %1496 = vrot.lane.b32.xlu0 %v1429, 32
      %v1497 = vpop.permute.xlu0 %1496
      %1498 = vrot.lane.b32.xlu0 %v1430, 32
      %v1499 = vpop.permute.xlu0 %1498
      %1500 = vrot.lane.b32.xlu0 %v1431, 32
      %v1501 = vpop.permute.xlu0 %1500
      %1502 = vrot.lane.b32.xlu0 %v1432, 32
      %v1503 = vpop.permute.xlu0 %1502
      %1504 = vrot.lane.b32.xlu0 %v1433, 32
      %v1505 = vpop.permute.xlu0 %1504
      %1506 = vrot.lane.b32.xlu0 %v1434, 32
      %v1507 = vpop.permute.xlu0 %1506
      %1508 = vrot.lane.b32.xlu0 %v1435, 32
      %v1509 = vpop.permute.xlu0 %1508
      %1510 = vrot.lane.b32.xlu0 %v1436, 32
      %v1511 = vpop.permute.xlu0 %1510
      %1512 = vrot.lane.b32.xlu0 %v1437, 32
      %v1513 = vpop.permute.xlu0 %1512
      %1514 = vrot.lane.b32.xlu0 %v1438, 32
      %v1515 = vpop.permute.xlu0 %1514
      %1516 = vrot.lane.b32.xlu0 %v1439, 32
      %v1517 = vpop.permute.xlu0 %1516
      %1518 = vrot.lane.b32.xlu0 %v1440, 32
      %v1519 = vpop.permute.xlu0 %1518
      %1520 = vrot.lane.b32.xlu0 %v1441, 32
      %v1521 = vpop.permute.xlu0 %1520
      %1522 = vrot.lane.b32.xlu0 %v1442, 32
      %v1523 = vpop.permute.xlu0 %1522
      %1524 = vrot.lane.b32.xlu0 %v1443, 32
      %v1525 = vpop.permute.xlu0 %1524
      %1526 = vrot.lane.b32.xlu0 %v1444, 32
      %v1527 = vpop.permute.xlu0 %1526
      %1528 = vrot.lane.b32.xlu0 %v1445, 32
      %v1529 = vpop.permute.xlu0 %1528
      %1530 = vrot.lane.b32.xlu0 %v1446, 32
      %v1531 = vpop.permute.xlu0 %1530
      %1532 = vrot.lane.b32.xlu0 %v1447, 32
      %v1533 = vpop.permute.xlu0 %1532
      %1534 = vrot.lane.b32.xlu0 %v1448, 32
      %v1535 = vpop.permute.xlu0 %1534
      %1536 = vrot.lane.b32.xlu0 %v1449, 32
      %v1537 = vpop.permute.xlu0 %1536
      %1538 = vrot.lane.b32.xlu0 %v1450, 32
      %v1539 = vpop.permute.xlu0 %1538
      %1540 = vrot.lane.b32.xlu0 %v1451, 32
      %v1541 = vpop.permute.xlu0 %1540
      %1542 = vrot.lane.b32.xlu0 %v1452, 32
      %v1543 = vpop.permute.xlu0 %1542
      %1544 = vrot.lane.b32.xlu0 %v1453, 32
      %v1545 = vpop.permute.xlu0 %1544
      %1546 = vrot.lane.b32.xlu0 %v1454, 32
      %v1547 = vpop.permute.xlu0 %1546
      %1548 = vrot.lane.b32.xlu0 %v1455, 32
      %v1549 = vpop.permute.xlu0 %1548
      %1550 = vrot.lane.b32.xlu0 %v1456, 32
      %v1551 = vpop.permute.xlu0 %1550
      %1552 = vrot.lane.b32.xlu0 %v1457, 32
      %v1553 = vpop.permute.xlu0 %1552
      %vm1586 = vcmask 322816
      %1587 = vst.msk [vmem:[#allocation4] sm:$0xf] %vm1586, %v1491
      %1588 = vst.msk [vmem:[#allocation4 + $0x4] sm:$0xf] %vm1586, %v1493
      %1589 = vst.msk [vmem:[#allocation4 + $0x8] sm:$0xf] %vm1586, %v1495
      %1590 = vst.msk [vmem:[#allocation4 + $0xc] sm:$0xf] %vm1586, %v1497
      %1591 = vst.msk [vmem:[#allocation4 + $0x10] sm:$0xf] %vm1586, %v1499
      %1592 = vst.msk [vmem:[#allocation4 + $0x14] sm:$0xf] %vm1586, %v1501
      %1593 = vst.msk [vmem:[#allocation4 + $0x18] sm:$0xf] %vm1586, %v1503
      %1594 = vst.msk [vmem:[#allocation4 + $0x1c] sm:$0xf] %vm1586, %v1505
      %1595 = vst.msk [vmem:[#allocation4 + $0x20] sm:$0xf] %vm1586, %v1507
      %1596 = vst.msk [vmem:[#allocation4 + $0x24] sm:$0xf] %vm1586, %v1509
      %1597 = vst.msk [vmem:[#allocation4 + $0x28] sm:$0xf] %vm1586, %v1511
      %1598 = vst.msk [vmem:[#allocation4 + $0x2c] sm:$0xf] %vm1586, %v1513
      %1599 = vst.msk [vmem:[#allocation4 + $0x30] sm:$0xf] %vm1586, %v1515
      %1600 = vst.msk [vmem:[#allocation4 + $0x34] sm:$0xf] %vm1586, %v1517
      %1601 = vst.msk [vmem:[#allocation4 + $0x38] sm:$0xf] %vm1586, %v1519
      %1602 = vst.msk [vmem:[#allocation4 + $0x3c] sm:$0xf] %vm1586, %v1521
      %1603 = vst.msk [vmem:[#allocation4 + $0x40] sm:$0xf] %vm1586, %v1523
      %1604 = vst.msk [vmem:[#allocation4 + $0x44] sm:$0xf] %vm1586, %v1525
      %1605 = vst.msk [vmem:[#allocation4 + $0x48] sm:$0xf] %vm1586, %v1527
      %1606 = vst.msk [vmem:[#allocation4 + $0x4c] sm:$0xf] %vm1586, %v1529
      %1607 = vst.msk [vmem:[#allocation4 + $0x50] sm:$0xf] %vm1586, %v1531
      %1608 = vst.msk [vmem:[#allocation4 + $0x54] sm:$0xf] %vm1586, %v1533
      %1609 = vst.msk [vmem:[#allocation4 + $0x58] sm:$0xf] %vm1586, %v1535
      %1610 = vst.msk [vmem:[#allocation4 + $0x5c] sm:$0xf] %vm1586, %v1537
      %1611 = vst.msk [vmem:[#allocation4 + $0x60] sm:$0xf] %vm1586, %v1539
      %1612 = vst.msk [vmem:[#allocation4 + $0x64] sm:$0xf] %vm1586, %v1541
      %1613 = vst.msk [vmem:[#allocation4 + $0x68] sm:$0xf] %vm1586, %v1543
      %1614 = vst.msk [vmem:[#allocation4 + $0x6c] sm:$0xf] %vm1586, %v1545
      %1615 = vst.msk [vmem:[#allocation4 + $0x70] sm:$0xf] %vm1586, %v1547
      %1616 = vst.msk [vmem:[#allocation4 + $0x74] sm:$0xf] %vm1586, %v1549
      %1617 = vst.msk [vmem:[#allocation4 + $0x78] sm:$0xf] %vm1586, %v1551
      %1618 = vst.msk [vmem:[#allocation4 + $0x7c] sm:$0xf] %vm1586, %v1553
      %v1619 = vld [vmem:[%s394 + $0x2] sm:$0xff]
      %v1620 = vld [vmem:[%s394 + $0xa] sm:$0xff]
      %v1621 = vld [vmem:[%s394 + $0x1a] sm:$0xff]
      %v1622 = vld [vmem:[%s394 + $0x22] sm:$0xff]
      %v1623 = vld [vmem:[%s394 + $0x32] sm:$0xff]
      %v1624 = vld [vmem:[%s394 + $0x3a] sm:$0xff]
      %v1625 = vld [vmem:[%s394 + $0x4a] sm:$0xff]
      %v1626 = vld [vmem:[%s394 + $0x52] sm:$0xff]
      %v1627 = vld [vmem:[%s394 + $0x62] sm:$0xff]
      %v1628 = vld [vmem:[%s394 + $0x6a] sm:$0xff]
      %v1629 = vld [vmem:[%s394 + $0x7a] sm:$0xff]
      %v1630 = vld [vmem:[%s394 + $0x82] sm:$0xff]
      %v1631 = vld [vmem:[%s394 + $0x92] sm:$0xff]
      %v1632 = vld [vmem:[%s394 + $0x9a] sm:$0xff]
      %v1633 = vld [vmem:[%s394 + $0xaa] sm:$0xff]
      %v1634 = vld [vmem:[%s394 + $0xb2] sm:$0xff]
      %v1635 = vld [vmem:[%s394 + $0xc2] sm:$0xff]
      %v1636 = vld [vmem:[%s394 + $0xca] sm:$0xff]
      %v1637 = vld [vmem:[%s394 + $0xda] sm:$0xff]
      %v1638 = vld [vmem:[%s394 + $0xe2] sm:$0xff]
      %v1639 = vld [vmem:[%s394 + $0xf2] sm:$0xff]
      %v1640 = vld [vmem:[%s394 + $0xfa] sm:$0xff]
      %v1641 = vld [vmem:[%s394 + $0x10a] sm:$0xff]
      %v1642 = vld [vmem:[%s394 + $0x112] sm:$0xff]
      %v1643 = vld [vmem:[%s394 + $0x122] sm:$0xff]
      %v1644 = vld [vmem:[%s394 + $0x12a] sm:$0xff]
      %v1645 = vld [vmem:[%s394 + $0x13a] sm:$0xff]
      %v1646 = vld [vmem:[%s394 + $0x142] sm:$0xff]
      %v1647 = vld [vmem:[%s394 + $0x152] sm:$0xff]
      %v1648 = vld [vmem:[%s394 + $0x15a] sm:$0xff]
      %v1649 = vld [vmem:[%s394 + $0x16a] sm:$0xff]
      %v1650 = vld [vmem:[%s394 + $0x172] sm:$0xff]
      %v1651 = vpack.c.bf16 %v1619, %v1619
      %v1652 = vpack.c.bf16 %v1620, %v1620
      %v1653 = vpack.c.bf16 %v1621, %v1621
      %v1654 = vpack.c.bf16 %v1622, %v1622
      %v1655 = vpack.c.bf16 %v1623, %v1623
      %v1656 = vpack.c.bf16 %v1624, %v1624
      %v1657 = vpack.c.bf16 %v1625, %v1625
      %v1658 = vpack.c.bf16 %v1626, %v1626
      %v1659 = vpack.c.bf16 %v1627, %v1627
      %v1660 = vpack.c.bf16 %v1628, %v1628
      %v1661 = vpack.c.bf16 %v1629, %v1629
      %v1662 = vpack.c.bf16 %v1630, %v1630
      %v1663 = vpack.c.bf16 %v1631, %v1631
      %v1664 = vpack.c.bf16 %v1632, %v1632
      %v1665 = vpack.c.bf16 %v1633, %v1633
      %v1666 = vpack.c.bf16 %v1634, %v1634
      %v1667 = vpack.c.bf16 %v1635, %v1635
      %v1668 = vpack.c.bf16 %v1636, %v1636
      %v1669 = vpack.c.bf16 %v1637, %v1637
      %v1670 = vpack.c.bf16 %v1638, %v1638
      %v1671 = vpack.c.bf16 %v1639, %v1639
      %v1672 = vpack.c.bf16 %v1640, %v1640
      %v1673 = vpack.c.bf16 %v1641, %v1641
      %v1674 = vpack.c.bf16 %v1642, %v1642
      %v1675 = vpack.c.bf16 %v1643, %v1643
      %v1676 = vpack.c.bf16 %v1644, %v1644
      %v1677 = vpack.c.bf16 %v1645, %v1645
      %v1678 = vpack.c.bf16 %v1646, %v1646
      %v1679 = vpack.c.bf16 %v1647, %v1647
      %v1680 = vpack.c.bf16 %v1648, %v1648
      %v1681 = vpack.c.bf16 %v1649, %v1649
      %v1682 = vpack.c.bf16 %v1650, %v1650
      %1715 = vrot.lane.b32.xlu0 %v1651, 40
      %v1716 = vpop.permute.xlu0 %1715
      %1717 = vrot.lane.b32.xlu0 %v1652, 40
      %v1718 = vpop.permute.xlu0 %1717
      %1719 = vrot.lane.b32.xlu0 %v1653, 40
      %v1720 = vpop.permute.xlu0 %1719
      %1721 = vrot.lane.b32.xlu0 %v1654, 40
      %v1722 = vpop.permute.xlu0 %1721
      %1723 = vrot.lane.b32.xlu0 %v1655, 40
      %v1724 = vpop.permute.xlu0 %1723
      %1725 = vrot.lane.b32.xlu0 %v1656, 40
      %v1726 = vpop.permute.xlu0 %1725
      %1727 = vrot.lane.b32.xlu0 %v1657, 40
      %v1728 = vpop.permute.xlu0 %1727
      %1729 = vrot.lane.b32.xlu0 %v1658, 40
      %v1730 = vpop.permute.xlu0 %1729
      %1731 = vrot.lane.b32.xlu0 %v1659, 40
      %v1732 = vpop.permute.xlu0 %1731
      %1733 = vrot.lane.b32.xlu0 %v1660, 40
      %v1734 = vpop.permute.xlu0 %1733
      %1735 = vrot.lane.b32.xlu0 %v1661, 40
      %v1736 = vpop.permute.xlu0 %1735
      %1737 = vrot.lane.b32.xlu0 %v1662, 40
      %v1738 = vpop.permute.xlu0 %1737
      %1739 = vrot.lane.b32.xlu0 %v1663, 40
      %v1740 = vpop.permute.xlu0 %1739
      %1741 = vrot.lane.b32.xlu0 %v1664, 40
      %v1742 = vpop.permute.xlu0 %1741
      %1743 = vrot.lane.b32.xlu0 %v1665, 40
      %v1744 = vpop.permute.xlu0 %1743
      %1745 = vrot.lane.b32.xlu0 %v1666, 40
      %v1746 = vpop.permute.xlu0 %1745
      %1747 = vrot.lane.b32.xlu0 %v1667, 40
      %v1748 = vpop.permute.xlu0 %1747
      %1749 = vrot.lane.b32.xlu0 %v1668, 40
      %v1750 = vpop.permute.xlu0 %1749
      %1751 = vrot.lane.b32.xlu0 %v1669, 40
      %v1752 = vpop.permute.xlu0 %1751
      %1753 = vrot.lane.b32.xlu0 %v1670, 40
      %v1754 = vpop.permute.xlu0 %1753
      %1755 = vrot.lane.b32.xlu0 %v1671, 40
      %v1756 = vpop.permute.xlu0 %1755
      %1757 = vrot.lane.b32.xlu0 %v1672, 40
      %v1758 = vpop.permute.xlu0 %1757
      %1759 = vrot.lane.b32.xlu0 %v1673, 40
      %v1760 = vpop.permute.xlu0 %1759
      %1761 = vrot.lane.b32.xlu0 %v1674, 40
      %v1762 = vpop.permute.xlu0 %1761
      %1763 = vrot.lane.b32.xlu0 %v1675, 40
      %v1764 = vpop.permute.xlu0 %1763
      %1765 = vrot.lane.b32.xlu0 %v1676, 40
      %v1766 = vpop.permute.xlu0 %1765
      %1767 = vrot.lane.b32.xlu0 %v1677, 40
      %v1768 = vpop.permute.xlu0 %1767
      %1769 = vrot.lane.b32.xlu0 %v1678, 40
      %v1770 = vpop.permute.xlu0 %1769
      %1771 = vrot.lane.b32.xlu0 %v1679, 40
      %v1772 = vpop.permute.xlu0 %1771
      %1773 = vrot.lane.b32.xlu0 %v1680, 40
      %v1774 = vpop.permute.xlu0 %1773
      %1775 = vrot.lane.b32.xlu0 %v1681, 40
      %v1776 = vpop.permute.xlu0 %1775
      %1777 = vrot.lane.b32.xlu0 %v1682, 40
      %v1778 = vpop.permute.xlu0 %1777
      %vm1811 = vcmask 388416
      %1812 = vst.msk [vmem:[#allocation4] sm:$0xf] %vm1811, %v1716
      %1813 = vst.msk [vmem:[#allocation4 + $0x4] sm:$0xf] %vm1811, %v1718
      %1814 = vst.msk [vmem:[#allocation4 + $0x8] sm:$0xf] %vm1811, %v1720
      %1815 = vst.msk [vmem:[#allocation4 + $0xc] sm:$0xf] %vm1811, %v1722
      %1816 = vst.msk [vmem:[#allocation4 + $0x10] sm:$0xf] %vm1811, %v1724
      %1817 = vst.msk [vmem:[#allocation4 + $0x14] sm:$0xf] %vm1811, %v1726
      %1818 = vst.msk [vmem:[#allocation4 + $0x18] sm:$0xf] %vm1811, %v1728
      %1819 = vst.msk [vmem:[#allocation4 + $0x1c] sm:$0xf] %vm1811, %v1730
      %1820 = vst.msk [vmem:[#allocation4 + $0x20] sm:$0xf] %vm1811, %v1732
      %1821 = vst.msk [vmem:[#allocation4 + $0x24] sm:$0xf] %vm1811, %v1734
      %1822 = vst.msk [vmem:[#allocation4 + $0x28] sm:$0xf] %vm1811, %v1736
      %1823 = vst.msk [vmem:[#allocation4 + $0x2c] sm:$0xf] %vm1811, %v1738
      %1824 = vst.msk [vmem:[#allocation4 + $0x30] sm:$0xf] %vm1811, %v1740
      %1825 = vst.msk [vmem:[#allocation4 + $0x34] sm:$0xf] %vm1811, %v1742
      %1826 = vst.msk [vmem:[#allocation4 + $0x38] sm:$0xf] %vm1811, %v1744
      %1827 = vst.msk [vmem:[#allocation4 + $0x3c] sm:$0xf] %vm1811, %v1746
      %1828 = vst.msk [vmem:[#allocation4 + $0x40] sm:$0xf] %vm1811, %v1748
      %1829 = vst.msk [vmem:[#allocation4 + $0x44] sm:$0xf] %vm1811, %v1750
      %1830 = vst.msk [vmem:[#allocation4 + $0x48] sm:$0xf] %vm1811, %v1752
      %1831 = vst.msk [vmem:[#allocation4 + $0x4c] sm:$0xf] %vm1811, %v1754
      %1832 = vst.msk [vmem:[#allocation4 + $0x50] sm:$0xf] %vm1811, %v1756
      %1833 = vst.msk [vmem:[#allocation4 + $0x54] sm:$0xf] %vm1811, %v1758
      %1834 = vst.msk [vmem:[#allocation4 + $0x58] sm:$0xf] %vm1811, %v1760
      %1835 = vst.msk [vmem:[#allocation4 + $0x5c] sm:$0xf] %vm1811, %v1762
      %1836 = vst.msk [vmem:[#allocation4 + $0x60] sm:$0xf] %vm1811, %v1764
      %1837 = vst.msk [vmem:[#allocation4 + $0x64] sm:$0xf] %vm1811, %v1766
      %1838 = vst.msk [vmem:[#allocation4 + $0x68] sm:$0xf] %vm1811, %v1768
      %1839 = vst.msk [vmem:[#allocation4 + $0x6c] sm:$0xf] %vm1811, %v1770
      %1840 = vst.msk [vmem:[#allocation4 + $0x70] sm:$0xf] %vm1811, %v1772
      %1841 = vst.msk [vmem:[#allocation4 + $0x74] sm:$0xf] %vm1811, %v1774
      %1842 = vst.msk [vmem:[#allocation4 + $0x78] sm:$0xf] %vm1811, %v1776
      %1843 = vst.msk [vmem:[#allocation4 + $0x7c] sm:$0xf] %vm1811, %v1778
      %s1844 = scalar_lea.vmem [#allocation2], 48
      %v1845 = vld [vmem:[%s1844] sm:$0xff]
      %v1846 = vld [vmem:[%s1844 + $0x8] sm:$0xff]
      %v1847 = vld [vmem:[%s1844 + $0x18] sm:$0xff]
      %v1848 = vld [vmem:[%s1844 + $0x20] sm:$0xff]
      %v1849 = vld [vmem:[%s1844 + $0x30] sm:$0xff]
      %v1850 = vld [vmem:[%s1844 + $0x38] sm:$0xff]
      %v1851 = vld [vmem:[%s1844 + $0x48] sm:$0xff]
      %v1852 = vld [vmem:[%s1844 + $0x50] sm:$0xff]
      %v1853 = vld [vmem:[%s1844 + $0x60] sm:$0xff]
      %v1854 = vld [vmem:[%s1844 + $0x68] sm:$0xff]
      %v1855 = vld [vmem:[%s1844 + $0x78] sm:$0xff]
      %v1856 = vld [vmem:[%s1844 + $0x80] sm:$0xff]
      %v1857 = vld [vmem:[%s1844 + $0x90] sm:$0xff]
      %v1858 = vld [vmem:[%s1844 + $0x98] sm:$0xff]
      %v1859 = vld [vmem:[%s1844 + $0xa8] sm:$0xff]
      %v1860 = vld [vmem:[%s1844 + $0xb0] sm:$0xff]
      %v1861 = vld [vmem:[%s1844 + $0xc0] sm:$0xff]
      %v1862 = vld [vmem:[%s1844 + $0xc8] sm:$0xff]
      %v1863 = vld [vmem:[%s1844 + $0xd8] sm:$0xff]
      %v1864 = vld [vmem:[%s1844 + $0xe0] sm:$0xff]
      %v1865 = vld [vmem:[%s1844 + $0xf0] sm:$0xff]
      %v1866 = vld [vmem:[%s1844 + $0xf8] sm:$0xff]
      %v1867 = vld [vmem:[%s1844 + $0x108] sm:$0xff]
      %v1868 = vld [vmem:[%s1844 + $0x110] sm:$0xff]
      %v1869 = vld [vmem:[%s1844 + $0x120] sm:$0xff]
      %v1870 = vld [vmem:[%s1844 + $0x128] sm:$0xff]
      %v1871 = vld [vmem:[%s1844 + $0x138] sm:$0xff]
      %v1872 = vld [vmem:[%s1844 + $0x140] sm:$0xff]
      %v1873 = vld [vmem:[%s1844 + $0x150] sm:$0xff]
      %v1874 = vld [vmem:[%s1844 + $0x158] sm:$0xff]
      %v1875 = vld [vmem:[%s1844 + $0x168] sm:$0xff]
      %v1876 = vld [vmem:[%s1844 + $0x170] sm:$0xff]
      %v1877 = vpack.c.bf16 %v1845, %v1845
      %v1878 = vpack.c.bf16 %v1846, %v1846
      %v1879 = vpack.c.bf16 %v1847, %v1847
      %v1880 = vpack.c.bf16 %v1848, %v1848
      %v1881 = vpack.c.bf16 %v1849, %v1849
      %v1882 = vpack.c.bf16 %v1850, %v1850
      %v1883 = vpack.c.bf16 %v1851, %v1851
      %v1884 = vpack.c.bf16 %v1852, %v1852
      %v1885 = vpack.c.bf16 %v1853, %v1853
      %v1886 = vpack.c.bf16 %v1854, %v1854
      %v1887 = vpack.c.bf16 %v1855, %v1855
      %v1888 = vpack.c.bf16 %v1856, %v1856
      %v1889 = vpack.c.bf16 %v1857, %v1857
      %v1890 = vpack.c.bf16 %v1858, %v1858
      %v1891 = vpack.c.bf16 %v1859, %v1859
      %v1892 = vpack.c.bf16 %v1860, %v1860
      %v1893 = vpack.c.bf16 %v1861, %v1861
      %v1894 = vpack.c.bf16 %v1862, %v1862
      %v1895 = vpack.c.bf16 %v1863, %v1863
      %v1896 = vpack.c.bf16 %v1864, %v1864
      %v1897 = vpack.c.bf16 %v1865, %v1865
      %v1898 = vpack.c.bf16 %v1866, %v1866
      %v1899 = vpack.c.bf16 %v1867, %v1867
      %v1900 = vpack.c.bf16 %v1868, %v1868
      %v1901 = vpack.c.bf16 %v1869, %v1869
      %v1902 = vpack.c.bf16 %v1870, %v1870
      %v1903 = vpack.c.bf16 %v1871, %v1871
      %v1904 = vpack.c.bf16 %v1872, %v1872
      %v1905 = vpack.c.bf16 %v1873, %v1873
      %v1906 = vpack.c.bf16 %v1874, %v1874
      %v1907 = vpack.c.bf16 %v1875, %v1875
      %v1908 = vpack.c.bf16 %v1876, %v1876
      %1941 = vrot.lane.b32.xlu0 %v1877, 48
      %v1942 = vpop.permute.xlu0 %1941
      %1943 = vrot.lane.b32.xlu0 %v1878, 48
      %v1944 = vpop.permute.xlu0 %1943
      %1945 = vrot.lane.b32.xlu0 %v1879, 48
      %v1946 = vpop.permute.xlu0 %1945
      %1947 = vrot.lane.b32.xlu0 %v1880, 48
      %v1948 = vpop.permute.xlu0 %1947
      %1949 = vrot.lane.b32.xlu0 %v1881, 48
      %v1950 = vpop.permute.xlu0 %1949
      %1951 = vrot.lane.b32.xlu0 %v1882, 48
      %v1952 = vpop.permute.xlu0 %1951
      %1953 = vrot.lane.b32.xlu0 %v1883, 48
      %v1954 = vpop.permute.xlu0 %1953
      %1955 = vrot.lane.b32.xlu0 %v1884, 48
      %v1956 = vpop.permute.xlu0 %1955
      %1957 = vrot.lane.b32.xlu0 %v1885, 48
      %v1958 = vpop.permute.xlu0 %1957
      %1959 = vrot.lane.b32.xlu0 %v1886, 48
      %v1960 = vpop.permute.xlu0 %1959
      %1961 = vrot.lane.b32.xlu0 %v1887, 48
      %v1962 = vpop.permute.xlu0 %1961
      %1963 = vrot.lane.b32.xlu0 %v1888, 48
      %v1964 = vpop.permute.xlu0 %1963
      %1965 = vrot.lane.b32.xlu0 %v1889, 48
      %v1966 = vpop.permute.xlu0 %1965
      %1967 = vrot.lane.b32.xlu0 %v1890, 48
      %v1968 = vpop.permute.xlu0 %1967
      %1969 = vrot.lane.b32.xlu0 %v1891, 48
      %v1970 = vpop.permute.xlu0 %1969
      %1971 = vrot.lane.b32.xlu0 %v1892, 48
      %v1972 = vpop.permute.xlu0 %1971
      %1973 = vrot.lane.b32.xlu0 %v1893, 48
      %v1974 = vpop.permute.xlu0 %1973
      %1975 = vrot.lane.b32.xlu0 %v1894, 48
      %v1976 = vpop.permute.xlu0 %1975
      %1977 = vrot.lane.b32.xlu0 %v1895, 48
      %v1978 = vpop.permute.xlu0 %1977
      %1979 = vrot.lane.b32.xlu0 %v1896, 48
      %v1980 = vpop.permute.xlu0 %1979
      %1981 = vrot.lane.b32.xlu0 %v1897, 48
      %v1982 = vpop.permute.xlu0 %1981
      %1983 = vrot.lane.b32.xlu0 %v1898, 48
      %v1984 = vpop.permute.xlu0 %1983
      %1985 = vrot.lane.b32.xlu0 %v1899, 48
      %v1986 = vpop.permute.xlu0 %1985
      %1987 = vrot.lane.b32.xlu0 %v1900, 48
      %v1988 = vpop.permute.xlu0 %1987
      %1989 = vrot.lane.b32.xlu0 %v1901, 48
      %v1990 = vpop.permute.xlu0 %1989
      %1991 = vrot.lane.b32.xlu0 %v1902, 48
      %v1992 = vpop.permute.xlu0 %1991
      %1993 = vrot.lane.b32.xlu0 %v1903, 48
      %v1994 = vpop.permute.xlu0 %1993
      %1995 = vrot.lane.b32.xlu0 %v1904, 48
      %v1996 = vpop.permute.xlu0 %1995
      %1997 = vrot.lane.b32.xlu0 %v1905, 48
      %v1998 = vpop.permute.xlu0 %1997
      %1999 = vrot.lane.b32.xlu0 %v1906, 48
      %v2000 = vpop.permute.xlu0 %1999
      %2001 = vrot.lane.b32.xlu0 %v1907, 48
      %v2002 = vpop.permute.xlu0 %2001
      %2003 = vrot.lane.b32.xlu0 %v1908, 48
      %v2004 = vpop.permute.xlu0 %2003
      %vm2037 = vcmask 454016
      %2038 = vst.msk [vmem:[#allocation4] sm:$0xf] %vm2037, %v1942
      %2039 = vst.msk [vmem:[#allocation4 + $0x4] sm:$0xf] %vm2037, %v1944
      %2040 = vst.msk [vmem:[#allocation4 + $0x8] sm:$0xf] %vm2037, %v1946
      %2041 = vst.msk [vmem:[#allocation4 + $0xc] sm:$0xf] %vm2037, %v1948
      %2042 = vst.msk [vmem:[#allocation4 + $0x10] sm:$0xf] %vm2037, %v1950
      %2043 = vst.msk [vmem:[#allocation4 + $0x14] sm:$0xf] %vm2037, %v1952
      %2044 = vst.msk [vmem:[#allocation4 + $0x18] sm:$0xf] %vm2037, %v1954
      %2045 = vst.msk [vmem:[#allocation4 + $0x1c] sm:$0xf] %vm2037, %v1956
      %2046 = vst.msk [vmem:[#allocation4 + $0x20] sm:$0xf] %vm2037, %v1958
      %2047 = vst.msk [vmem:[#allocation4 + $0x24] sm:$0xf] %vm2037, %v1960
      %2048 = vst.msk [vmem:[#allocation4 + $0x28] sm:$0xf] %vm2037, %v1962
      %2049 = vst.msk [vmem:[#allocation4 + $0x2c] sm:$0xf] %vm2037, %v1964
      %2050 = vst.msk [vmem:[#allocation4 + $0x30] sm:$0xf] %vm2037, %v1966
      %2051 = vst.msk [vmem:[#allocation4 + $0x34] sm:$0xf] %vm2037, %v1968
      %2052 = vst.msk [vmem:[#allocation4 + $0x38] sm:$0xf] %vm2037, %v1970
      %2053 = vst.msk [vmem:[#allocation4 + $0x3c] sm:$0xf] %vm2037, %v1972
      %2054 = vst.msk [vmem:[#allocation4 + $0x40] sm:$0xf] %vm2037, %v1974
      %2055 = vst.msk [vmem:[#allocation4 + $0x44] sm:$0xf] %vm2037, %v1976
      %2056 = vst.msk [vmem:[#allocation4 + $0x48] sm:$0xf] %vm2037, %v1978
      %2057 = vst.msk [vmem:[#allocation4 + $0x4c] sm:$0xf] %vm2037, %v1980
      %2058 = vst.msk [vmem:[#allocation4 + $0x50] sm:$0xf] %vm2037, %v1982
      %2059 = vst.msk [vmem:[#allocation4 + $0x54] sm:$0xf] %vm2037, %v1984
      %2060 = vst.msk [vmem:[#allocation4 + $0x58] sm:$0xf] %vm2037, %v1986
      %2061 = vst.msk [vmem:[#allocation4 + $0x5c] sm:$0xf] %vm2037, %v1988
      %2062 = vst.msk [vmem:[#allocation4 + $0x60] sm:$0xf] %vm2037, %v1990
      %2063 = vst.msk [vmem:[#allocation4 + $0x64] sm:$0xf] %vm2037, %v1992
      %2064 = vst.msk [vmem:[#allocation4 + $0x68] sm:$0xf] %vm2037, %v1994
      %2065 = vst.msk [vmem:[#allocation4 + $0x6c] sm:$0xf] %vm2037, %v1996
      %2066 = vst.msk [vmem:[#allocation4 + $0x70] sm:$0xf] %vm2037, %v1998
      %2067 = vst.msk [vmem:[#allocation4 + $0x74] sm:$0xf] %vm2037, %v2000
      %2068 = vst.msk [vmem:[#allocation4 + $0x78] sm:$0xf] %vm2037, %v2002
      %2069 = vst.msk [vmem:[#allocation4 + $0x7c] sm:$0xf] %vm2037, %v2004
      %v2070 = vld [vmem:[%s1844 + $0x1] sm:$0xff]
      %v2071 = vld [vmem:[%s1844 + $0x9] sm:$0xff]
      %v2072 = vld [vmem:[%s1844 + $0x19] sm:$0xff]
      %v2073 = vld [vmem:[%s1844 + $0x21] sm:$0xff]
      %v2074 = vld [vmem:[%s1844 + $0x31] sm:$0xff]
      %v2075 = vld [vmem:[%s1844 + $0x39] sm:$0xff]
      %v2076 = vld [vmem:[%s1844 + $0x49] sm:$0xff]
      %v2077 = vld [vmem:[%s1844 + $0x51] sm:$0xff]
      %v2078 = vld [vmem:[%s1844 + $0x61] sm:$0xff]
      %v2079 = vld [vmem:[%s1844 + $0x69] sm:$0xff]
      %v2080 = vld [vmem:[%s1844 + $0x79] sm:$0xff]
      %v2081 = vld [vmem:[%s1844 + $0x81] sm:$0xff]
      %v2082 = vld [vmem:[%s1844 + $0x91] sm:$0xff]
      %v2083 = vld [vmem:[%s1844 + $0x99] sm:$0xff]
      %v2084 = vld [vmem:[%s1844 + $0xa9] sm:$0xff]
      %v2085 = vld [vmem:[%s1844 + $0xb1] sm:$0xff]
      %v2086 = vld [vmem:[%s1844 + $0xc1] sm:$0xff]
      %v2087 = vld [vmem:[%s1844 + $0xc9] sm:$0xff]
      %v2088 = vld [vmem:[%s1844 + $0xd9] sm:$0xff]
      %v2089 = vld [vmem:[%s1844 + $0xe1] sm:$0xff]
      %v2090 = vld [vmem:[%s1844 + $0xf1] sm:$0xff]
      %v2091 = vld [vmem:[%s1844 + $0xf9] sm:$0xff]
      %v2092 = vld [vmem:[%s1844 + $0x109] sm:$0xff]
      %v2093 = vld [vmem:[%s1844 + $0x111] sm:$0xff]
      %v2094 = vld [vmem:[%s1844 + $0x121] sm:$0xff]
      %v2095 = vld [vmem:[%s1844 + $0x129] sm:$0xff]
      %v2096 = vld [vmem:[%s1844 + $0x139] sm:$0xff]
      %v2097 = vld [vmem:[%s1844 + $0x141] sm:$0xff]
      %v2098 = vld [vmem:[%s1844 + $0x151] sm:$0xff]
      %v2099 = vld [vmem:[%s1844 + $0x159] sm:$0xff]
      %v2100 = vld [vmem:[%s1844 + $0x169] sm:$0xff]
      %v2101 = vld [vmem:[%s1844 + $0x171] sm:$0xff]
      %v2102 = vpack.c.bf16 %v2070, %v2070
      %v2103 = vpack.c.bf16 %v2071, %v2071
      %v2104 = vpack.c.bf16 %v2072, %v2072
      %v2105 = vpack.c.bf16 %v2073, %v2073
      %v2106 = vpack.c.bf16 %v2074, %v2074
      %v2107 = vpack.c.bf16 %v2075, %v2075
      %v2108 = vpack.c.bf16 %v2076, %v2076
      %v2109 = vpack.c.bf16 %v2077, %v2077
      %v2110 = vpack.c.bf16 %v2078, %v2078
      %v2111 = vpack.c.bf16 %v2079, %v2079
      %v2112 = vpack.c.bf16 %v2080, %v2080
      %v2113 = vpack.c.bf16 %v2081, %v2081
      %v2114 = vpack.c.bf16 %v2082, %v2082
      %v2115 = vpack.c.bf16 %v2083, %v2083
      %v2116 = vpack.c.bf16 %v2084, %v2084
      %v2117 = vpack.c.bf16 %v2085, %v2085
      %v2118 = vpack.c.bf16 %v2086, %v2086
      %v2119 = vpack.c.bf16 %v2087, %v2087
      %v2120 = vpack.c.bf16 %v2088, %v2088
      %v2121 = vpack.c.bf16 %v2089, %v2089
      %v2122 = vpack.c.bf16 %v2090, %v2090
      %v2123 = vpack.c.bf16 %v2091, %v2091
      %v2124 = vpack.c.bf16 %v2092, %v2092
      %v2125 = vpack.c.bf16 %v2093, %v2093
      %v2126 = vpack.c.bf16 %v2094, %v2094
      %v2127 = vpack.c.bf16 %v2095, %v2095
      %v2128 = vpack.c.bf16 %v2096, %v2096
      %v2129 = vpack.c.bf16 %v2097, %v2097
      %v2130 = vpack.c.bf16 %v2098, %v2098
      %v2131 = vpack.c.bf16 %v2099, %v2099
      %v2132 = vpack.c.bf16 %v2100, %v2100
      %v2133 = vpack.c.bf16 %v2101, %v2101
      %2166 = vrot.lane.b32.xlu0 %v2102, 56
      %v2167 = vpop.permute.xlu0 %2166
      %2168 = vrot.lane.b32.xlu0 %v2103, 56
      %v2169 = vpop.permute.xlu0 %2168
      %2170 = vrot.lane.b32.xlu0 %v2104, 56
      %v2171 = vpop.permute.xlu0 %2170
      %2172 = vrot.lane.b32.xlu0 %v2105, 56
      %v2173 = vpop.permute.xlu0 %2172
      %2174 = vrot.lane.b32.xlu0 %v2106, 56
      %v2175 = vpop.permute.xlu0 %2174
      %2176 = vrot.lane.b32.xlu0 %v2107, 56
      %v2177 = vpop.permute.xlu0 %2176
      %2178 = vrot.lane.b32.xlu0 %v2108, 56
      %v2179 = vpop.permute.xlu0 %2178
      %2180 = vrot.lane.b32.xlu0 %v2109, 56
      %v2181 = vpop.permute.xlu0 %2180
      %2182 = vrot.lane.b32.xlu0 %v2110, 56
      %v2183 = vpop.permute.xlu0 %2182
      %2184 = vrot.lane.b32.xlu0 %v2111, 56
      %v2185 = vpop.permute.xlu0 %2184
      %2186 = vrot.lane.b32.xlu0 %v2112, 56
      %v2187 = vpop.permute.xlu0 %2186
      %2188 = vrot.lane.b32.xlu0 %v2113, 56
      %v2189 = vpop.permute.xlu0 %2188
      %2190 = vrot.lane.b32.xlu0 %v2114, 56
      %v2191 = vpop.permute.xlu0 %2190
      %2192 = vrot.lane.b32.xlu0 %v2115, 56
      %v2193 = vpop.permute.xlu0 %2192
      %2194 = vrot.lane.b32.xlu0 %v2116, 56
      %v2195 = vpop.permute.xlu0 %2194
      %2196 = vrot.lane.b32.xlu0 %v2117, 56
      %v2197 = vpop.permute.xlu0 %2196
      %2198 = vrot.lane.b32.xlu0 %v2118, 56
      %v2199 = vpop.permute.xlu0 %2198
      %2200 = vrot.lane.b32.xlu0 %v2119, 56
      %v2201 = vpop.permute.xlu0 %2200
      %2202 = vrot.lane.b32.xlu0 %v2120, 56
      %v2203 = vpop.permute.xlu0 %2202
      %2204 = vrot.lane.b32.xlu0 %v2121, 56
      %v2205 = vpop.permute.xlu0 %2204
      %2206 = vrot.lane.b32.xlu0 %v2122, 56
      %v2207 = vpop.permute.xlu0 %2206
      %2208 = vrot.lane.b32.xlu0 %v2123, 56
      %v2209 = vpop.permute.xlu0 %2208
      %2210 = vrot.lane.b32.xlu0 %v2124, 56
      %v2211 = vpop.permute.xlu0 %2210
      %2212 = vrot.lane.b32.xlu0 %v2125, 56
      %v2213 = vpop.permute.xlu0 %2212
      %2214 = vrot.lane.b32.xlu0 %v2126, 56
      %v2215 = vpop.permute.xlu0 %2214
      %2216 = vrot.lane.b32.xlu0 %v2127, 56
      %v2217 = vpop.permute.xlu0 %2216
      %2218 = vrot.lane.b32.xlu0 %v2128, 56
      %v2219 = vpop.permute.xlu0 %2218
      %2220 = vrot.lane.b32.xlu0 %v2129, 56
      %v2221 = vpop.permute.xlu0 %2220
      %2222 = vrot.lane.b32.xlu0 %v2130, 56
      %v2223 = vpop.permute.xlu0 %2222
      %2224 = vrot.lane.b32.xlu0 %v2131, 56
      %v2225 = vpop.permute.xlu0 %2224
      %2226 = vrot.lane.b32.xlu0 %v2132, 56
      %v2227 = vpop.permute.xlu0 %2226
      %2228 = vrot.lane.b32.xlu0 %v2133, 56
      %v2229 = vpop.permute.xlu0 %2228
      %vm2262 = vcmask 519616
      %2263 = vst.msk [vmem:[#allocation4] sm:$0xf] %vm2262, %v2167
      %2264 = vst.msk [vmem:[#allocation4 + $0x4] sm:$0xf] %vm2262, %v2169
      %2265 = vst.msk [vmem:[#allocation4 + $0x8] sm:$0xf] %vm2262, %v2171
      %2266 = vst.msk [vmem:[#allocation4 + $0xc] sm:$0xf] %vm2262, %v2173
      %2267 = vst.msk [vmem:[#allocation4 + $0x10] sm:$0xf] %vm2262, %v2175
      %2268 = vst.msk [vmem:[#allocation4 + $0x14] sm:$0xf] %vm2262, %v2177
      %2269 = vst.msk [vmem:[#allocation4 + $0x18] sm:$0xf] %vm2262, %v2179
      %2270 = vst.msk [vmem:[#allocation4 + $0x1c] sm:$0xf] %vm2262, %v2181
      %2271 = vst.msk [vmem:[#allocation4 + $0x20] sm:$0xf] %vm2262, %v2183
      %2272 = vst.msk [vmem:[#allocation4 + $0x24] sm:$0xf] %vm2262, %v2185
      %2273 = vst.msk [vmem:[#allocation4 + $0x28] sm:$0xf] %vm2262, %v2187
      %2274 = vst.msk [vmem:[#allocation4 + $0x2c] sm:$0xf] %vm2262, %v2189
      %2275 = vst.msk [vmem:[#allocation4 + $0x30] sm:$0xf] %vm2262, %v2191
      %2276 = vst.msk [vmem:[#allocation4 + $0x34] sm:$0xf] %vm2262, %v2193
      %2277 = vst.msk [vmem:[#allocation4 + $0x38] sm:$0xf] %vm2262, %v2195
      %2278 = vst.msk [vmem:[#allocation4 + $0x3c] sm:$0xf] %vm2262, %v2197
      %2279 = vst.msk [vmem:[#allocation4 + $0x40] sm:$0xf] %vm2262, %v2199
      %2280 = vst.msk [vmem:[#allocation4 + $0x44] sm:$0xf] %vm2262, %v2201
      %2281 = vst.msk [vmem:[#allocation4 + $0x48] sm:$0xf] %vm2262, %v2203
      %2282 = vst.msk [vmem:[#allocation4 + $0x4c] sm:$0xf] %vm2262, %v2205
      %2283 = vst.msk [vmem:[#allocation4 + $0x50] sm:$0xf] %vm2262, %v2207
      %2284 = vst.msk [vmem:[#allocation4 + $0x54] sm:$0xf] %vm2262, %v2209
      %2285 = vst.msk [vmem:[#allocation4 + $0x58] sm:$0xf] %vm2262, %v2211
      %2286 = vst.msk [vmem:[#allocation4 + $0x5c] sm:$0xf] %vm2262, %v2213
      %2287 = vst.msk [vmem:[#allocation4 + $0x60] sm:$0xf] %vm2262, %v2215
      %2288 = vst.msk [vmem:[#allocation4 + $0x64] sm:$0xf] %vm2262, %v2217
      %2289 = vst.msk [vmem:[#allocation4 + $0x68] sm:$0xf] %vm2262, %v2219
      %2290 = vst.msk [vmem:[#allocation4 + $0x6c] sm:$0xf] %vm2262, %v2221
      %2291 = vst.msk [vmem:[#allocation4 + $0x70] sm:$0xf] %vm2262, %v2223
      %2292 = vst.msk [vmem:[#allocation4 + $0x74] sm:$0xf] %vm2262, %v2225
      %2293 = vst.msk [vmem:[#allocation4 + $0x78] sm:$0xf] %vm2262, %v2227
      %2294 = vst.msk [vmem:[#allocation4 + $0x7c] sm:$0xf] %vm2262, %v2229
      %v2295 = vld [vmem:[%s1844 + $0x2] sm:$0xff]
      %v2296 = vld [vmem:[%s1844 + $0xa] sm:$0xff]
      %v2297 = vld [vmem:[%s1844 + $0x1a] sm:$0xff]
      %v2298 = vld [vmem:[%s1844 + $0x22] sm:$0xff]
      %v2299 = vld [vmem:[%s1844 + $0x32] sm:$0xff]
      %v2300 = vld [vmem:[%s1844 + $0x3a] sm:$0xff]
      %v2301 = vld [vmem:[%s1844 + $0x4a] sm:$0xff]
      %v2302 = vld [vmem:[%s1844 + $0x52] sm:$0xff]
      %v2303 = vld [vmem:[%s1844 + $0x62] sm:$0xff]
      %v2304 = vld [vmem:[%s1844 + $0x6a] sm:$0xff]
      %v2305 = vld [vmem:[%s1844 + $0x7a] sm:$0xff]
      %v2306 = vld [vmem:[%s1844 + $0x82] sm:$0xff]
      %v2307 = vld [vmem:[%s1844 + $0x92] sm:$0xff]
      %v2308 = vld [vmem:[%s1844 + $0x9a] sm:$0xff]
      %v2309 = vld [vmem:[%s1844 + $0xaa] sm:$0xff]
      %v2310 = vld [vmem:[%s1844 + $0xb2] sm:$0xff]
      %v2311 = vld [vmem:[%s1844 + $0xc2] sm:$0xff]
      %v2312 = vld [vmem:[%s1844 + $0xca] sm:$0xff]
      %v2313 = vld [vmem:[%s1844 + $0xda] sm:$0xff]
      %v2314 = vld [vmem:[%s1844 + $0xe2] sm:$0xff]
      %v2315 = vld [vmem:[%s1844 + $0xf2] sm:$0xff]
      %v2316 = vld [vmem:[%s1844 + $0xfa] sm:$0xff]
      %v2317 = vld [vmem:[%s1844 + $0x10a] sm:$0xff]
      %v2318 = vld [vmem:[%s1844 + $0x112] sm:$0xff]
      %v2319 = vld [vmem:[%s1844 + $0x122] sm:$0xff]
      %v2320 = vld [vmem:[%s1844 + $0x12a] sm:$0xff]
      %v2321 = vld [vmem:[%s1844 + $0x13a] sm:$0xff]
      %v2322 = vld [vmem:[%s1844 + $0x142] sm:$0xff]
      %v2323 = vld [vmem:[%s1844 + $0x152] sm:$0xff]
      %v2324 = vld [vmem:[%s1844 + $0x15a] sm:$0xff]
      %v2325 = vld [vmem:[%s1844 + $0x16a] sm:$0xff]
      %v2326 = vld [vmem:[%s1844 + $0x172] sm:$0xff]
      %v2327 = vpack.c.bf16 %v2295, %v2295
      %v2328 = vpack.c.bf16 %v2296, %v2296
      %v2329 = vpack.c.bf16 %v2297, %v2297
      %v2330 = vpack.c.bf16 %v2298, %v2298
      %v2331 = vpack.c.bf16 %v2299, %v2299
      %v2332 = vpack.c.bf16 %v2300, %v2300
      %v2333 = vpack.c.bf16 %v2301, %v2301
      %v2334 = vpack.c.bf16 %v2302, %v2302
      %v2335 = vpack.c.bf16 %v2303, %v2303
      %v2336 = vpack.c.bf16 %v2304, %v2304
      %v2337 = vpack.c.bf16 %v2305, %v2305
      %v2338 = vpack.c.bf16 %v2306, %v2306
      %v2339 = vpack.c.bf16 %v2307, %v2307
      %v2340 = vpack.c.bf16 %v2308, %v2308
      %v2341 = vpack.c.bf16 %v2309, %v2309
      %v2342 = vpack.c.bf16 %v2310, %v2310
      %v2343 = vpack.c.bf16 %v2311, %v2311
      %v2344 = vpack.c.bf16 %v2312, %v2312
      %v2345 = vpack.c.bf16 %v2313, %v2313
      %v2346 = vpack.c.bf16 %v2314, %v2314
      %v2347 = vpack.c.bf16 %v2315, %v2315
      %v2348 = vpack.c.bf16 %v2316, %v2316
      %v2349 = vpack.c.bf16 %v2317, %v2317
      %v2350 = vpack.c.bf16 %v2318, %v2318
      %v2351 = vpack.c.bf16 %v2319, %v2319
      %v2352 = vpack.c.bf16 %v2320, %v2320
      %v2353 = vpack.c.bf16 %v2321, %v2321
      %v2354 = vpack.c.bf16 %v2322, %v2322
      %v2355 = vpack.c.bf16 %v2323, %v2323
      %v2356 = vpack.c.bf16 %v2324, %v2324
      %v2357 = vpack.c.bf16 %v2325, %v2325
      %v2358 = vpack.c.bf16 %v2326, %v2326
      %2391 = vrot.lane.b32.xlu0 %v2327, 64
      %v2392 = vpop.permute.xlu0 %2391
      %2393 = vrot.lane.b32.xlu0 %v2328, 64
      %v2394 = vpop.permute.xlu0 %2393
      %2395 = vrot.lane.b32.xlu0 %v2329, 64
      %v2396 = vpop.permute.xlu0 %2395
      %2397 = vrot.lane.b32.xlu0 %v2330, 64
      %v2398 = vpop.permute.xlu0 %2397
      %2399 = vrot.lane.b32.xlu0 %v2331, 64
      %v2400 = vpop.permute.xlu0 %2399
      %2401 = vrot.lane.b32.xlu0 %v2332, 64
      %v2402 = vpop.permute.xlu0 %2401
      %2403 = vrot.lane.b32.xlu0 %v2333, 64
      %v2404 = vpop.permute.xlu0 %2403
      %2405 = vrot.lane.b32.xlu0 %v2334, 64
      %v2406 = vpop.permute.xlu0 %2405
      %2407 = vrot.lane.b32.xlu0 %v2335, 64
      %v2408 = vpop.permute.xlu0 %2407
      %2409 = vrot.lane.b32.xlu0 %v2336, 64
      %v2410 = vpop.permute.xlu0 %2409
      %2411 = vrot.lane.b32.xlu0 %v2337, 64
      %v2412 = vpop.permute.xlu0 %2411
      %2413 = vrot.lane.b32.xlu0 %v2338, 64
      %v2414 = vpop.permute.xlu0 %2413
      %2415 = vrot.lane.b32.xlu0 %v2339, 64
      %v2416 = vpop.permute.xlu0 %2415
      %2417 = vrot.lane.b32.xlu0 %v2340, 64
      %v2418 = vpop.permute.xlu0 %2417
      %2419 = vrot.lane.b32.xlu0 %v2341, 64
      %v2420 = vpop.permute.xlu0 %2419
      %2421 = vrot.lane.b32.xlu0 %v2342, 64
      %v2422 = vpop.permute.xlu0 %2421
      %2423 = vrot.lane.b32.xlu0 %v2343, 64
      %v2424 = vpop.permute.xlu0 %2423
      %2425 = vrot.lane.b32.xlu0 %v2344, 64
      %v2426 = vpop.permute.xlu0 %2425
      %2427 = vrot.lane.b32.xlu0 %v2345, 64
      %v2428 = vpop.permute.xlu0 %2427
      %2429 = vrot.lane.b32.xlu0 %v2346, 64
      %v2430 = vpop.permute.xlu0 %2429
      %2431 = vrot.lane.b32.xlu0 %v2347, 64
      %v2432 = vpop.permute.xlu0 %2431
      %2433 = vrot.lane.b32.xlu0 %v2348, 64
      %v2434 = vpop.permute.xlu0 %2433
      %2435 = vrot.lane.b32.xlu0 %v2349, 64
      %v2436 = vpop.permute.xlu0 %2435
      %2437 = vrot.lane.b32.xlu0 %v2350, 64
      %v2438 = vpop.permute.xlu0 %2437
      %2439 = vrot.lane.b32.xlu0 %v2351, 64
      %v2440 = vpop.permute.xlu0 %2439
      %2441 = vrot.lane.b32.xlu0 %v2352, 64
      %v2442 = vpop.permute.xlu0 %2441
      %2443 = vrot.lane.b32.xlu0 %v2353, 64
      %v2444 = vpop.permute.xlu0 %2443
      %2445 = vrot.lane.b32.xlu0 %v2354, 64
      %v2446 = vpop.permute.xlu0 %2445
      %2447 = vrot.lane.b32.xlu0 %v2355, 64
      %v2448 = vpop.permute.xlu0 %2447
      %2449 = vrot.lane.b32.xlu0 %v2356, 64
      %v2450 = vpop.permute.xlu0 %2449
      %2451 = vrot.lane.b32.xlu0 %v2357, 64
      %v2452 = vpop.permute.xlu0 %2451
      %2453 = vrot.lane.b32.xlu0 %v2358, 64
      %v2454 = vpop.permute.xlu0 %2453
      %vm2487 = vcmask 585216
      %2488 = vst.msk [vmem:[#allocation4] sm:$0xf] %vm2487, %v2392
      %2489 = vst.msk [vmem:[#allocation4 + $0x4] sm:$0xf] %vm2487, %v2394
      %2490 = vst.msk [vmem:[#allocation4 + $0x8] sm:$0xf] %vm2487, %v2396
      %2491 = vst.msk [vmem:[#allocation4 + $0xc] sm:$0xf] %vm2487, %v2398
      %2492 = vst.msk [vmem:[#allocation4 + $0x10] sm:$0xf] %vm2487, %v2400
      %2493 = vst.msk [vmem:[#allocation4 + $0x14] sm:$0xf] %vm2487, %v2402
      %2494 = vst.msk [vmem:[#allocation4 + $0x18] sm:$0xf] %vm2487, %v2404
      %2495 = vst.msk [vmem:[#allocation4 + $0x1c] sm:$0xf] %vm2487, %v2406
      %2496 = vst.msk [vmem:[#allocation4 + $0x20] sm:$0xf] %vm2487, %v2408
      %2497 = vst.msk [vmem:[#allocation4 + $0x24] sm:$0xf] %vm2487, %v2410
      %2498 = vst.msk [vmem:[#allocation4 + $0x28] sm:$0xf] %vm2487, %v2412
      %2499 = vst.msk [vmem:[#allocation4 + $0x2c] sm:$0xf] %vm2487, %v2414
      %2500 = vst.msk [vmem:[#allocation4 + $0x30] sm:$0xf] %vm2487, %v2416
      %2501 = vst.msk [vmem:[#allocation4 + $0x34] sm:$0xf] %vm2487, %v2418
      %2502 = vst.msk [vmem:[#allocation4 + $0x38] sm:$0xf] %vm2487, %v2420
      %2503 = vst.msk [vmem:[#allocation4 + $0x3c] sm:$0xf] %vm2487, %v2422
      %2504 = vst.msk [vmem:[#allocation4 + $0x40] sm:$0xf] %vm2487, %v2424
      %2505 = vst.msk [vmem:[#allocation4 + $0x44] sm:$0xf] %vm2487, %v2426
      %2506 = vst.msk [vmem:[#allocation4 + $0x48] sm:$0xf] %vm2487, %v2428
      %2507 = vst.msk [vmem:[#allocation4 + $0x4c] sm:$0xf] %vm2487, %v2430
      %2508 = vst.msk [vmem:[#allocation4 + $0x50] sm:$0xf] %vm2487, %v2432
      %2509 = vst.msk [vmem:[#allocation4 + $0x54] sm:$0xf] %vm2487, %v2434
      %2510 = vst.msk [vmem:[#allocation4 + $0x58] sm:$0xf] %vm2487, %v2436
      %2511 = vst.msk [vmem:[#allocation4 + $0x5c] sm:$0xf] %vm2487, %v2438
      %2512 = vst.msk [vmem:[#allocation4 + $0x60] sm:$0xf] %vm2487, %v2440
      %2513 = vst.msk [vmem:[#allocation4 + $0x64] sm:$0xf] %vm2487, %v2442
      %2514 = vst.msk [vmem:[#allocation4 + $0x68] sm:$0xf] %vm2487, %v2444
      %2515 = vst.msk [vmem:[#allocation4 + $0x6c] sm:$0xf] %vm2487, %v2446
      %2516 = vst.msk [vmem:[#allocation4 + $0x70] sm:$0xf] %vm2487, %v2448
      %2517 = vst.msk [vmem:[#allocation4 + $0x74] sm:$0xf] %vm2487, %v2450
      %2518 = vst.msk [vmem:[#allocation4 + $0x78] sm:$0xf] %vm2487, %v2452
      %2519 = vst.msk [vmem:[#allocation4 + $0x7c] sm:$0xf] %vm2487, %v2454
      %v2520 = vld [vmem:[#allocation4] sm:$0xf]
      %v2521 = vld [vmem:[#allocation4 + $0x4] sm:$0xf]
      %v2522 = vld [vmem:[#allocation4 + $0x8] sm:$0xf]
      %v2523 = vld [vmem:[#allocation4 + $0xc] sm:$0xf]
      %v2524 = vld [vmem:[#allocation4 + $0x10] sm:$0xf]
      %v2525 = vld [vmem:[#allocation4 + $0x14] sm:$0xf]
      %v2526 = vld [vmem:[#allocation4 + $0x18] sm:$0xf]
      %v2527 = vld [vmem:[#allocation4 + $0x1c] sm:$0xf]
      %v2528 = vld [vmem:[#allocation4 + $0x20] sm:$0xf]
      %v2529 = vld [vmem:[#allocation4 + $0x24] sm:$0xf]
      %v2530 = vld [vmem:[#allocation4 + $0x28] sm:$0xf]
      %v2531 = vld [vmem:[#allocation4 + $0x2c] sm:$0xf]
      %v2532 = vld [vmem:[#allocation4 + $0x30] sm:$0xf]
      %v2533 = vld [vmem:[#allocation4 + $0x34] sm:$0xf]
      %v2534 = vld [vmem:[#allocation4 + $0x38] sm:$0xf]
      %v2535 = vld [vmem:[#allocation4 + $0x3c] sm:$0xf]
      %v2536 = vld [vmem:[#allocation4 + $0x40] sm:$0xf]
      %v2537 = vld [vmem:[#allocation4 + $0x44] sm:$0xf]
      %v2538 = vld [vmem:[#allocation4 + $0x48] sm:$0xf]
      %v2539 = vld [vmem:[#allocation4 + $0x4c] sm:$0xf]
      %v2540 = vld [vmem:[#allocation4 + $0x50] sm:$0xf]
      %v2541 = vld [vmem:[#allocation4 + $0x54] sm:$0xf]
      %v2542 = vld [vmem:[#allocation4 + $0x58] sm:$0xf]
      %v2543 = vld [vmem:[#allocation4 + $0x5c] sm:$0xf]
      %v2544 = vld [vmem:[#allocation4 + $0x60] sm:$0xf]
      %v2545 = vld [vmem:[#allocation4 + $0x64] sm:$0xf]
      %v2546 = vld [vmem:[#allocation4 + $0x68] sm:$0xf]
      %v2547 = vld [vmem:[#allocation4 + $0x6c] sm:$0xf]
      %v2548 = vld [vmem:[#allocation4 + $0x70] sm:$0xf]
      %v2549 = vld [vmem:[#allocation4 + $0x74] sm:$0xf]
      %v2550 = vld [vmem:[#allocation4 + $0x78] sm:$0xf]
      %v2551 = vld [vmem:[#allocation4 + $0x7c] sm:$0xf]
      %v2552 = vld [vmem:[%s2] sm:$0xf]
      %v2553 = vld [vmem:[%s2 + $0x4] sm:$0xf]
      %v2554 = vld [vmem:[%s2 + $0x8] sm:$0xf]
      %v2555 = vld [vmem:[%s2 + $0xc] sm:$0xf]
      %v2556 = vld [vmem:[%s2 + $0x10] sm:$0xf]
      %v2557 = vld [vmem:[%s2 + $0x14] sm:$0xf]
      %v2558 = vld [vmem:[%s2 + $0x18] sm:$0xf]
      %v2559 = vld [vmem:[%s2 + $0x1c] sm:$0xf]
      %v2560 = vld [vmem:[%s2 + $0x20] sm:$0xf]
      %v2562 = vperm.slane %v621, 0
      %v2596 = vunpack.c.l.b16 %v2520
      %v2597 = vunpack.c.l.b16 %v2521
      %v2598 = vunpack.c.l.b16 %v2522
      %v2599 = vunpack.c.l.b16 %v2523
      %v2600 = vunpack.c.l.b16 %v2524
      %v2601 = vunpack.c.l.b16 %v2525
      %v2602 = vunpack.c.l.b16 %v2526
      %v2603 = vunpack.c.l.b16 %v2527
      %v2604 = vunpack.c.l.b16 %v2528
      %v2605 = vunpack.c.l.b16 %v2529
      %v2606 = vunpack.c.l.b16 %v2530
      %v2607 = vunpack.c.l.b16 %v2531
      %v2608 = vunpack.c.l.b16 %v2532
      %v2609 = vunpack.c.l.b16 %v2533
      %v2610 = vunpack.c.l.b16 %v2534
      %v2611 = vunpack.c.l.b16 %v2535
      %v2612 = vunpack.c.l.b16 %v2536
      %v2613 = vunpack.c.l.b16 %v2537
      %v2614 = vunpack.c.l.b16 %v2538
      %v2615 = vunpack.c.l.b16 %v2539
      %v2616 = vunpack.c.l.b16 %v2540
      %v2617 = vunpack.c.l.b16 %v2541
      %v2618 = vunpack.c.l.b16 %v2542
      %v2619 = vunpack.c.l.b16 %v2543
      %v2620 = vunpack.c.l.b16 %v2544
      %v2621 = vunpack.c.l.b16 %v2545
      %v2622 = vunpack.c.l.b16 %v2546
      %v2623 = vunpack.c.l.b16 %v2547
      %v2624 = vunpack.c.l.b16 %v2548
      %v2625 = vunpack.c.l.b16 %v2549
      %v2626 = vunpack.c.l.b16 %v2550
      %v2627 = vunpack.c.l.b16 %v2551
      %v2628 = vpack.c.b16 %v2597, %v2596
      %v2629 = vpack.c.b16 %v2599, %v2598
      %v2630 = vpack.c.b16 %v2601, %v2600
      %v2631 = vpack.c.b16 %v2603, %v2602
      %v2632 = vpack.c.b16 %v2605, %v2604
      %v2633 = vpack.c.b16 %v2607, %v2606
      %v2634 = vpack.c.b16 %v2609, %v2608
      %v2635 = vpack.c.b16 %v2611, %v2610
      %v2636 = vpack.c.b16 %v2613, %v2612
      %v2637 = vpack.c.b16 %v2615, %v2614
      %v2638 = vpack.c.b16 %v2617, %v2616
      %v2639 = vpack.c.b16 %v2619, %v2618
      %v2640 = vpack.c.b16 %v2621, %v2620
      %v2641 = vpack.c.b16 %v2623, %v2622
      %v2642 = vpack.c.b16 %v2625, %v2624
      %v2643 = vpack.c.b16 %v2627, %v2626
      %v2653 = vunpack.c.l.b16 %v2552
      %v2654 = vunpack.c.l.b16 %v2553
      %v2655 = vunpack.c.l.b16 %v2554
      %v2656 = vunpack.c.l.b16 %v2555
      %v2657 = vunpack.c.l.b16 %v2556
      %v2658 = vunpack.c.l.b16 %v2557
      %v2659 = vunpack.c.l.b16 %v2558
      %v2660 = vunpack.c.l.b16 %v2559
      %v2661 = vunpack.c.l.b16 %v2560
      %v2662 = vpack.c.b16 %v2654, %v2653
      %v2663 = vpack.c.b16 %v2656, %v2655
      %v2664 = vpack.c.b16 %v2658, %v2657
      %v2665 = vpack.c.b16 %v2660, %v2659
      %v2666 = vpack.c.b16 %v2661, %v2661
      %vm2671 = vcmask 588800
      %v2673 = vsel %vm2671, %v2628, 0
      %v2676 = vsel %vm2671, %v2629, 0
      %v2679 = vsel %vm2671, %v2630, 0
      %v2682 = vsel %vm2671, %v2631, 0
      %v2685 = vsel %vm2671, %v2632, 0
      %v2688 = vsel %vm2671, %v2633, 0
      %v2691 = vsel %vm2671, %v2634, 0
      %v2694 = vsel %vm2671, %v2635, 0
      %v2697 = vsel %vm2671, %v2636, 0
      %v2700 = vsel %vm2671, %v2637, 0
      %v2703 = vsel %vm2671, %v2638, 0
      %v2706 = vsel %vm2671, %v2639, 0
      %v2709 = vsel %vm2671, %v2640, 0
      %v2712 = vsel %vm2671, %v2641, 0
      %v2715 = vsel %vm2671, %v2642, 0
      %v2718 = vsel %vm2671, %v2643, 0
      %vm2720 = vcmask 1043456
      %v2722 = vsel %vm2720, %v2666, 0
      %2724 = vmatpush.bf16.msra.mxu0 0
      %2725 = vmatpush.bf16.msra.mxu0 0
      %2726 = vmatpush.bf16.msra.mxu0 0
      %2727 = vmatpush.bf16.msra.mxu0 %v2722
      %2728 = vmatpush.bf16.msra.mxu0 %v2665
      %2729 = vmatpush.bf16.msra.mxu0 %v2664
      %2730 = vmatpush.bf16.msra.mxu0 %v2663
      %2731 = vmatpush.bf16.msra.mxu0 %v2662
      %2732 = vmatmul.bf16.gmra.mxu0 %v2673
      %v2733 = vpop.f32.mrf.mxu0
      %v2734 = vadd.f32 %v2562, %v2733
      %v2735 = vpop.f32.mrf.mxu0
      %v2736 = vadd.f32 %v2562, %v2735
      %2737 = vmatmul.bf16.gmra.mxu0 %v2676
      %v2738 = vpop.f32.mrf.mxu0
      %v2739 = vadd.f32 %v2562, %v2738
      %v2740 = vpop.f32.mrf.mxu0
      %v2741 = vadd.f32 %v2562, %v2740
      %2742 = vmatmul.bf16.gmra.mxu0 %v2679
      %v2743 = vpop.f32.mrf.mxu0
      %v2744 = vadd.f32 %v2562, %v2743
      %v2745 = vpop.f32.mrf.mxu0
      %v2746 = vadd.f32 %v2562, %v2745
      %2747 = vmatmul.bf16.gmra.mxu0 %v2682
      %v2748 = vpop.f32.mrf.mxu0
      %v2749 = vadd.f32 %v2562, %v2748
      %v2750 = vpop.f32.mrf.mxu0
      %v2751 = vadd.f32 %v2562, %v2750
      %2752 = vmatmul.bf16.gmra.mxu0 %v2685
      %v2753 = vpop.f32.mrf.mxu0
      %v2754 = vadd.f32 %v2562, %v2753
      %v2755 = vpop.f32.mrf.mxu0
      %v2756 = vadd.f32 %v2562, %v2755
      %2757 = vmatmul.bf16.gmra.mxu0 %v2688
      %v2758 = vpop.f32.mrf.mxu0
      %v2759 = vadd.f32 %v2562, %v2758
      %v2760 = vpop.f32.mrf.mxu0
      %v2761 = vadd.f32 %v2562, %v2760
      %2762 = vmatmul.bf16.gmra.mxu0 %v2691
      %v2763 = vpop.f32.mrf.mxu0
      %v2764 = vadd.f32 %v2562, %v2763
      %v2765 = vpop.f32.mrf.mxu0
      %v2766 = vadd.f32 %v2562, %v2765
      %2767 = vmatmul.bf16.gmra.mxu0 %v2694
      %v2768 = vpop.f32.mrf.mxu0
      %v2769 = vadd.f32 %v2562, %v2768
      %v2770 = vpop.f32.mrf.mxu0
      %v2771 = vadd.f32 %v2562, %v2770
      %2772 = vmatmul.bf16.gmra.mxu0 %v2697
      %v2773 = vpop.f32.mrf.mxu0
      %v2774 = vadd.f32 %v2562, %v2773
      %v2775 = vpop.f32.mrf.mxu0
      %v2776 = vadd.f32 %v2562, %v2775
      %2777 = vmatmul.bf16.gmra.mxu0 %v2700
      %v2778 = vpop.f32.mrf.mxu0
      %v2779 = vadd.f32 %v2562, %v2778
      %v2780 = vpop.f32.mrf.mxu0
      %v2781 = vadd.f32 %v2562, %v2780
      %2782 = vmatmul.bf16.gmra.mxu0 %v2703
      %v2783 = vpop.f32.mrf.mxu0
      %v2784 = vadd.f32 %v2562, %v2783
      %v2785 = vpop.f32.mrf.mxu0
      %v2786 = vadd.f32 %v2562, %v2785
      %2787 = vmatmul.bf16.gmra.mxu0 %v2706
      %v2788 = vpop.f32.mrf.mxu0
      %v2789 = vadd.f32 %v2562, %v2788
      %v2790 = vpop.f32.mrf.mxu0
      %v2791 = vadd.f32 %v2562, %v2790
      %2792 = vmatmul.bf16.gmra.mxu0 %v2709
      %v2793 = vpop.f32.mrf.mxu0
      %v2794 = vadd.f32 %v2562, %v2793
      %v2795 = vpop.f32.mrf.mxu0
      %v2796 = vadd.f32 %v2562, %v2795
      %2797 = vmatmul.bf16.gmra.mxu0 %v2712
      %v2798 = vpop.f32.mrf.mxu0
      %v2799 = vadd.f32 %v2562, %v2798
      %v2800 = vpop.f32.mrf.mxu0
      %v2801 = vadd.f32 %v2562, %v2800
      %2802 = vmatmul.bf16.gmra.mxu0 %v2715
      %v2803 = vpop.f32.mrf.mxu0
      %v2804 = vadd.f32 %v2562, %v2803
      %v2805 = vpop.f32.mrf.mxu0
      %v2806 = vadd.f32 %v2562, %v2805
      %2807 = vmatmul.bf16.gmra.mxu0 %v2718
      %v2808 = vpop.f32.mrf.mxu0
      %v2809 = vadd.f32 %v2562, %v2808
      %v2810 = vpop.f32.mrf.mxu0
      %v2811 = vadd.f32 %v2562, %v2810
      %2812 = vdwg.mxu0
      %v2813 = vmax.f32 %v2734, 0.0
      %v2814 = vmax.f32 %v2736, 0.0
      %v2815 = vmax.f32 %v2739, 0.0
      %v2816 = vmax.f32 %v2741, 0.0
      %v2817 = vmax.f32 %v2744, 0.0
      %v2818 = vmax.f32 %v2746, 0.0
      %v2819 = vmax.f32 %v2749, 0.0
      %v2820 = vmax.f32 %v2751, 0.0
      %v2821 = vmax.f32 %v2754, 0.0
      %v2822 = vmax.f32 %v2756, 0.0
      %v2823 = vmax.f32 %v2759, 0.0
      %v2824 = vmax.f32 %v2761, 0.0
      %v2825 = vmax.f32 %v2764, 0.0
      %v2826 = vmax.f32 %v2766, 0.0
      %v2827 = vmax.f32 %v2769, 0.0
      %v2828 = vmax.f32 %v2771, 0.0
      %v2829 = vmax.f32 %v2774, 0.0
      %v2830 = vmax.f32 %v2776, 0.0
      %v2831 = vmax.f32 %v2779, 0.0
      %v2832 = vmax.f32 %v2781, 0.0
      %v2833 = vmax.f32 %v2784, 0.0
      %v2834 = vmax.f32 %v2786, 0.0
      %v2835 = vmax.f32 %v2789, 0.0
      %v2836 = vmax.f32 %v2791, 0.0
      %v2837 = vmax.f32 %v2794, 0.0
      %v2838 = vmax.f32 %v2796, 0.0
      %v2839 = vmax.f32 %v2799, 0.0
      %v2840 = vmax.f32 %v2801, 0.0
      %v2841 = vmax.f32 %v2804, 0.0
      %v2842 = vmax.f32 %v2806, 0.0
      %v2843 = vmax.f32 %v2809, 0.0
      %v2844 = vmax.f32 %v2811, 0.0
      %s2845 = scalar_lea.vmem [#allocation3], 24
      %2846 = vst [vmem:[%s2845 + $0x1] sm:$0xff] %v2813
      %2847 = vst [vmem:[%s2845 + $0x9] sm:$0xff] %v2814
      %2848 = vst [vmem:[%s2845 + $0x19] sm:$0xff] %v2815
      %2849 = vst [vmem:[%s2845 + $0x21] sm:$0xff] %v2816
      %2850 = vst [vmem:[%s2845 + $0x31] sm:$0xff] %v2817
      %2851 = vst [vmem:[%s2845 + $0x39] sm:$0xff] %v2818
      %2852 = vst [vmem:[%s2845 + $0x49] sm:$0xff] %v2819
      %2853 = vst [vmem:[%s2845 + $0x51] sm:$0xff] %v2820
      %2854 = vst [vmem:[%s2845 + $0x61] sm:$0xff] %v2821
      %2855 = vst [vmem:[%s2845 + $0x69] sm:$0xff] %v2822
      %2856 = vst [vmem:[%s2845 + $0x79] sm:$0xff] %v2823
      %2857 = vst [vmem:[%s2845 + $0x81] sm:$0xff] %v2824
      %2858 = vst [vmem:[%s2845 + $0x91] sm:$0xff] %v2825
      %2859 = vst [vmem:[%s2845 + $0x99] sm:$0xff] %v2826
      %2860 = vst [vmem:[%s2845 + $0xa9] sm:$0xff] %v2827
      %2861 = vst [vmem:[%s2845 + $0xb1] sm:$0xff] %v2828
      %2862 = vst [vmem:[%s2845 + $0xc1] sm:$0xff] %v2829
      %2863 = vst [vmem:[%s2845 + $0xc9] sm:$0xff] %v2830
      %2864 = vst [vmem:[%s2845 + $0xd9] sm:$0xff] %v2831
      %2865 = vst [vmem:[%s2845 + $0xe1] sm:$0xff] %v2832
      %2866 = vst [vmem:[%s2845 + $0xf1] sm:$0xff] %v2833
      %2867 = vst [vmem:[%s2845 + $0xf9] sm:$0xff] %v2834
      %2868 = vst [vmem:[%s2845 + $0x109] sm:$0xff] %v2835
      %2869 = vst [vmem:[%s2845 + $0x111] sm:$0xff] %v2836
      %2870 = vst [vmem:[%s2845 + $0x121] sm:$0xff] %v2837
      %2871 = vst [vmem:[%s2845 + $0x129] sm:$0xff] %v2838
      %2872 = vst [vmem:[%s2845 + $0x139] sm:$0xff] %v2839
      %2873 = vst [vmem:[%s2845 + $0x141] sm:$0xff] %v2840
      %2874 = vst [vmem:[%s2845 + $0x151] sm:$0xff] %v2841
      %2875 = vst [vmem:[%s2845 + $0x159] sm:$0xff] %v2842
      %2876 = vst [vmem:[%s2845 + $0x169] sm:$0xff] %v2843
      %2877 = vst [vmem:[%s2845 + $0x171] sm:$0xff] %v2844
      %v2878 = vld [vmem:[%s5] sm:$0x1]
      %v2879 = vld [vmem:[#allocation3] sm:$0xff]
      %v2880 = vld [vmem:[#allocation3 + $0x8] sm:$0xff]
      %v2881 = vld [vmem:[#allocation3 + $0x18] sm:$0xff]
      %v2882 = vld [vmem:[#allocation3 + $0x20] sm:$0xff]
      %v2883 = vld [vmem:[#allocation3 + $0x30] sm:$0xff]
      %v2884 = vld [vmem:[#allocation3 + $0x38] sm:$0xff]
      %v2885 = vld [vmem:[#allocation3 + $0x48] sm:$0xff]
      %v2886 = vld [vmem:[#allocation3 + $0x50] sm:$0xff]
      %v2887 = vld [vmem:[#allocation3 + $0x60] sm:$0xff]
      %v2888 = vld [vmem:[#allocation3 + $0x68] sm:$0xff]
      %v2889 = vld [vmem:[#allocation3 + $0x78] sm:$0xff]
      %v2890 = vld [vmem:[#allocation3 + $0x80] sm:$0xff]
      %v2891 = vld [vmem:[#allocation3 + $0x90] sm:$0xff]
      %v2892 = vld [vmem:[#allocation3 + $0x98] sm:$0xff]
      %v2893 = vld [vmem:[#allocation3 + $0xa8] sm:$0xff]
      %v2894 = vld [vmem:[#allocation3 + $0xb0] sm:$0xff]
      %v2895 = vld [vmem:[#allocation3 + $0xc0] sm:$0xff]
      %v2896 = vld [vmem:[#allocation3 + $0xc8] sm:$0xff]
      %v2897 = vld [vmem:[#allocation3 + $0xd8] sm:$0xff]
      %v2898 = vld [vmem:[#allocation3 + $0xe0] sm:$0xff]
      %v2899 = vld [vmem:[#allocation3 + $0xf0] sm:$0xff]
      %v2900 = vld [vmem:[#allocation3 + $0xf8] sm:$0xff]
      %v2901 = vld [vmem:[#allocation3 + $0x108] sm:$0xff]
      %v2902 = vld [vmem:[#allocation3 + $0x110] sm:$0xff]
      %v2903 = vld [vmem:[#allocation3 + $0x120] sm:$0xff]
      %v2904 = vld [vmem:[#allocation3 + $0x128] sm:$0xff]
      %v2905 = vld [vmem:[#allocation3 + $0x138] sm:$0xff]
      %v2906 = vld [vmem:[#allocation3 + $0x140] sm:$0xff]
      %v2907 = vld [vmem:[#allocation3 + $0x150] sm:$0xff]
      %v2908 = vld [vmem:[#allocation3 + $0x158] sm:$0xff]
      %v2909 = vld [vmem:[#allocation3 + $0x168] sm:$0xff]
      %v2910 = vld [vmem:[#allocation3 + $0x170] sm:$0xff]
      %v2911 = vpack.c.bf16 %v2880, %v2879
      %v2912 = vpack.c.bf16 %v2882, %v2881
      %v2913 = vpack.c.bf16 %v2884, %v2883
      %v2914 = vpack.c.bf16 %v2886, %v2885
      %v2915 = vpack.c.bf16 %v2888, %v2887
      %v2916 = vpack.c.bf16 %v2890, %v2889
      %v2917 = vpack.c.bf16 %v2892, %v2891
      %v2918 = vpack.c.bf16 %v2894, %v2893
      %v2919 = vpack.c.bf16 %v2896, %v2895
      %v2920 = vpack.c.bf16 %v2898, %v2897
      %v2921 = vpack.c.bf16 %v2900, %v2899
      %v2922 = vpack.c.bf16 %v2902, %v2901
      %v2923 = vpack.c.bf16 %v2904, %v2903
      %v2924 = vpack.c.bf16 %v2906, %v2905
      %v2925 = vpack.c.bf16 %v2908, %v2907
      %v2926 = vpack.c.bf16 %v2910, %v2909
      %v2927 = vld [vmem:[%s4] sm:$0xf]
      %v2928 = vld [vmem:[%s4 + $0x4] sm:$0xf]
      %v2929 = vld [vmem:[%s4 + $0x8] sm:$0xf]
      %v2930 = vld [vmem:[%s4 + $0xc] sm:$0xf]
      %v2931 = vld [vmem:[%s4 + $0x10] sm:$0xf]
      %v2932 = vld [vmem:[%s4 + $0x14] sm:$0xf]
      %v2933 = vld [vmem:[%s4 + $0x18] sm:$0xf]
      %v2934 = vld [vmem:[%s4 + $0x1c] sm:$0xf]
      %v2935 = vld [vmem:[%s4 + $0x20] sm:$0xf]
      %v2936 = vld [vmem:[%s4 + $0x24] sm:$0xf]
      %v2937 = vld [vmem:[%s4 + $0x28] sm:$0xf]
      %v2938 = vld [vmem:[%s4 + $0x2c] sm:$0xf]
      %v2939 = vld [vmem:[%s4 + $0x30] sm:$0xf]
      %v2940 = vld [vmem:[%s4 + $0x34] sm:$0xf]
      %v2941 = vld [vmem:[%s4 + $0x38] sm:$0xf]
      %v2942 = vld [vmem:[%s4 + $0x3c] sm:$0xf]
      %v2943 = vld [vmem:[#allocation3 + $0x1] sm:$0xff]
      %v2944 = vld [vmem:[#allocation3 + $0x9] sm:$0xff]
      %v2945 = vld [vmem:[#allocation3 + $0x19] sm:$0xff]
      %v2946 = vld [vmem:[#allocation3 + $0x21] sm:$0xff]
      %v2947 = vld [vmem:[#allocation3 + $0x31] sm:$0xff]
      %v2948 = vld [vmem:[#allocation3 + $0x39] sm:$0xff]
      %v2949 = vld [vmem:[#allocation3 + $0x49] sm:$0xff]
      %v2950 = vld [vmem:[#allocation3 + $0x51] sm:$0xff]
      %v2951 = vld [vmem:[#allocation3 + $0x61] sm:$0xff]
      %v2952 = vld [vmem:[#allocation3 + $0x69] sm:$0xff]
      %v2953 = vld [vmem:[#allocation3 + $0x79] sm:$0xff]
      %v2954 = vld [vmem:[#allocation3 + $0x81] sm:$0xff]
      %v2955 = vld [vmem:[#allocation3 + $0x91] sm:$0xff]
      %v2956 = vld [vmem:[#allocation3 + $0x99] sm:$0xff]
      %v2957 = vld [vmem:[#allocation3 + $0xa9] sm:$0xff]
      %v2958 = vld [vmem:[#allocation3 + $0xb1] sm:$0xff]
      %v2959 = vld [vmem:[#allocation3 + $0xc1] sm:$0xff]
      %v2960 = vld [vmem:[#allocation3 + $0xc9] sm:$0xff]
      %v2961 = vld [vmem:[#allocation3 + $0xd9] sm:$0xff]
      %v2962 = vld [vmem:[#allocation3 + $0xe1] sm:$0xff]
      %v2963 = vld [vmem:[#allocation3 + $0xf1] sm:$0xff]
      %v2964 = vld [vmem:[#allocation3 + $0xf9] sm:$0xff]
      %v2965 = vld [vmem:[#allocation3 + $0x109] sm:$0xff]
      %v2966 = vld [vmem:[#allocation3 + $0x111] sm:$0xff]
      %v2967 = vld [vmem:[#allocation3 + $0x121] sm:$0xff]
      %v2968 = vld [vmem:[#allocation3 + $0x129] sm:$0xff]
      %v2969 = vld [vmem:[#allocation3 + $0x139] sm:$0xff]
      %v2970 = vld [vmem:[#allocation3 + $0x141] sm:$0xff]
      %v2971 = vld [vmem:[#allocation3 + $0x151] sm:$0xff]
      %v2972 = vld [vmem:[#allocation3 + $0x159] sm:$0xff]
      %v2973 = vld [vmem:[#allocation3 + $0x169] sm:$0xff]
      %v2974 = vld [vmem:[#allocation3 + $0x171] sm:$0xff]
      %v2975 = vpack.c.bf16 %v2944, %v2943
      %v2976 = vpack.c.bf16 %v2946, %v2945
      %v2977 = vpack.c.bf16 %v2948, %v2947
      %v2978 = vpack.c.bf16 %v2950, %v2949
      %v2979 = vpack.c.bf16 %v2952, %v2951
      %v2980 = vpack.c.bf16 %v2954, %v2953
      %v2981 = vpack.c.bf16 %v2956, %v2955
      %v2982 = vpack.c.bf16 %v2958, %v2957
      %v2983 = vpack.c.bf16 %v2960, %v2959
      %v2984 = vpack.c.bf16 %v2962, %v2961
      %v2985 = vpack.c.bf16 %v2964, %v2963
      %v2986 = vpack.c.bf16 %v2966, %v2965
      %v2987 = vpack.c.bf16 %v2968, %v2967
      %v2988 = vpack.c.bf16 %v2970, %v2969
      %v2989 = vpack.c.bf16 %v2972, %v2971
      %v2990 = vpack.c.bf16 %v2974, %v2973
      %v2991 = vld [vmem:[%s4 + $0x40] sm:$0xf]
      %v2992 = vld [vmem:[%s4 + $0x44] sm:$0xf]
      %v2993 = vld [vmem:[%s4 + $0x48] sm:$0xf]
      %v2994 = vld [vmem:[%s4 + $0x4c] sm:$0xf]
      %v2995 = vld [vmem:[%s4 + $0x50] sm:$0xf]
      %v2996 = vld [vmem:[%s4 + $0x54] sm:$0xf]
      %v2997 = vld [vmem:[%s4 + $0x58] sm:$0xf]
      %v2998 = vld [vmem:[%s4 + $0x5c] sm:$0xf]
      %v2999 = vld [vmem:[%s4 + $0x60] sm:$0xf]
      %v3000 = vld [vmem:[%s4 + $0x64] sm:$0xf]
      %v3001 = vld [vmem:[%s4 + $0x68] sm:$0xf]
      %v3002 = vld [vmem:[%s4 + $0x6c] sm:$0xf]
      %v3003 = vld [vmem:[%s4 + $0x70] sm:$0xf]
      %v3004 = vld [vmem:[%s4 + $0x74] sm:$0xf]
      %v3005 = vld [vmem:[%s4 + $0x78] sm:$0xf]
      %v3006 = vld [vmem:[%s4 + $0x7c] sm:$0xf]
      %v3023 = vunpack.c.l.b16 %v2991
      %v3024 = vunpack.c.l.b16 %v2992
      %v3025 = vunpack.c.l.b16 %v2993
      %v3026 = vunpack.c.l.b16 %v2994
      %v3027 = vunpack.c.l.b16 %v2995
      %v3028 = vunpack.c.l.b16 %v2996
      %v3029 = vunpack.c.l.b16 %v2997
      %v3030 = vunpack.c.l.b16 %v2998
      %v3031 = vunpack.c.l.b16 %v2999
      %v3032 = vunpack.c.l.b16 %v3000
      %v3033 = vunpack.c.l.b16 %v3001
      %v3034 = vunpack.c.l.b16 %v3002
      %v3035 = vunpack.c.l.b16 %v3003
      %v3036 = vunpack.c.l.b16 %v3004
      %v3037 = vunpack.c.l.b16 %v3005
      %v3038 = vunpack.c.l.b16 %v3006
      %v3039 = vpack.c.b16 %v3024, %v3023
      %v3040 = vpack.c.b16 %v3026, %v3025
      %v3041 = vpack.c.b16 %v3028, %v3027
      %v3042 = vpack.c.b16 %v3030, %v3029
      %v3043 = vpack.c.b16 %v3032, %v3031
      %v3044 = vpack.c.b16 %v3034, %v3033
      %v3045 = vpack.c.b16 %v3036, %v3035
      %v3046 = vpack.c.b16 %v3038, %v3037
      %3055 = vmatpush.bf16.msra.mxu0 %v3046
      %3056 = vmatpush.bf16.msra.mxu0 %v3045
      %3057 = vmatpush.bf16.msra.mxu0 %v3044
      %3058 = vmatpush.bf16.msra.mxu0 %v3043
      %3059 = vmatpush.bf16.msra.mxu0 %v3042
      %3060 = vmatpush.bf16.msra.mxu0 %v3041
      %3061 = vmatpush.bf16.msra.mxu0 %v3040
      %3062 = vmatpush.bf16.msra.mxu0 %v3039
      %3063 = vmatmul.bf16.gmra.mxu0 %v2975
      %v3064 = vpop.f32.mrf.mxu0
      %v3065 = vadd.f32 0.0, %v3064
      %v3066 = vpop.f32.mrf.mxu0
      %v3067 = vadd.f32 0.0, %v3066
      %3068 = vmatmul.bf16.gmra.mxu0 %v2976
      %v3069 = vpop.f32.mrf.mxu0
      %v3070 = vadd.f32 0.0, %v3069
      %v3071 = vpop.f32.mrf.mxu0
      %v3072 = vadd.f32 0.0, %v3071
      %3073 = vmatmul.bf16.gmra.mxu0 %v2977
      %v3074 = vpop.f32.mrf.mxu0
      %v3075 = vadd.f32 0.0, %v3074
      %v3076 = vpop.f32.mrf.mxu0
      %v3077 = vadd.f32 0.0, %v3076
      %3078 = vmatmul.bf16.gmra.mxu0 %v2978
      %v3079 = vpop.f32.mrf.mxu0
      %v3080 = vadd.f32 0.0, %v3079
      %v3081 = vpop.f32.mrf.mxu0
      %v3082 = vadd.f32 0.0, %v3081
      %3083 = vmatmul.bf16.gmra.mxu0 %v2979
      %v3084 = vpop.f32.mrf.mxu0
      %v3085 = vadd.f32 0.0, %v3084
      %v3086 = vpop.f32.mrf.mxu0
      %v3087 = vadd.f32 0.0, %v3086
      %3088 = vmatmul.bf16.gmra.mxu0 %v2980
      %v3089 = vpop.f32.mrf.mxu0
      %v3090 = vadd.f32 0.0, %v3089
      %v3091 = vpop.f32.mrf.mxu0
      %v3092 = vadd.f32 0.0, %v3091
      %3093 = vmatmul.bf16.gmra.mxu0 %v2981
      %v3094 = vpop.f32.mrf.mxu0
      %v3095 = vadd.f32 0.0, %v3094
      %v3096 = vpop.f32.mrf.mxu0
      %v3097 = vadd.f32 0.0, %v3096
      %3098 = vmatmul.bf16.gmra.mxu0 %v2982
      %v3099 = vpop.f32.mrf.mxu0
      %v3100 = vadd.f32 0.0, %v3099
      %v3101 = vpop.f32.mrf.mxu0
      %v3102 = vadd.f32 0.0, %v3101
      %3103 = vmatmul.bf16.gmra.mxu0 %v2983
      %v3104 = vpop.f32.mrf.mxu0
      %v3105 = vadd.f32 0.0, %v3104
      %v3106 = vpop.f32.mrf.mxu0
      %v3107 = vadd.f32 0.0, %v3106
      %3108 = vmatmul.bf16.gmra.mxu0 %v2984
      %v3109 = vpop.f32.mrf.mxu0
      %v3110 = vadd.f32 0.0, %v3109
      %v3111 = vpop.f32.mrf.mxu0
      %v3112 = vadd.f32 0.0, %v3111
      %3113 = vmatmul.bf16.gmra.mxu0 %v2985
      %v3114 = vpop.f32.mrf.mxu0
      %v3115 = vadd.f32 0.0, %v3114
      %v3116 = vpop.f32.mrf.mxu0
      %v3117 = vadd.f32 0.0, %v3116
      %3118 = vmatmul.bf16.gmra.mxu0 %v2986
      %v3119 = vpop.f32.mrf.mxu0
      %v3120 = vadd.f32 0.0, %v3119
      %v3121 = vpop.f32.mrf.mxu0
      %v3122 = vadd.f32 0.0, %v3121
      %3123 = vmatmul.bf16.gmra.mxu0 %v2987
      %v3124 = vpop.f32.mrf.mxu0
      %v3125 = vadd.f32 0.0, %v3124
      %v3126 = vpop.f32.mrf.mxu0
      %v3127 = vadd.f32 0.0, %v3126
      %3128 = vmatmul.bf16.gmra.mxu0 %v2988
      %v3129 = vpop.f32.mrf.mxu0
      %v3130 = vadd.f32 0.0, %v3129
      %v3131 = vpop.f32.mrf.mxu0
      %v3132 = vadd.f32 0.0, %v3131
      %3133 = vmatmul.bf16.gmra.mxu0 %v2989
      %v3134 = vpop.f32.mrf.mxu0
      %v3135 = vadd.f32 0.0, %v3134
      %v3136 = vpop.f32.mrf.mxu0
      %v3137 = vadd.f32 0.0, %v3136
      %3138 = vmatmul.bf16.gmra.mxu0 %v2990
      %v3139 = vpop.f32.mrf.mxu0
      %v3140 = vadd.f32 0.0, %v3139
      %v3141 = vpop.f32.mrf.mxu0
      %v3142 = vadd.f32 0.0, %v3141
      %3143 = vdwg.mxu0
      %v3160 = vunpack.c.l.b16 %v2927
      %v3161 = vunpack.c.l.b16 %v2928
      %v3162 = vunpack.c.l.b16 %v2929
      %v3163 = vunpack.c.l.b16 %v2930
      %v3164 = vunpack.c.l.b16 %v2931
      %v3165 = vunpack.c.l.b16 %v2932
      %v3166 = vunpack.c.l.b16 %v2933
      %v3167 = vunpack.c.l.b16 %v2934
      %v3168 = vunpack.c.l.b16 %v2935
      %v3169 = vunpack.c.l.b16 %v2936
      %v3170 = vunpack.c.l.b16 %v2937
      %v3171 = vunpack.c.l.b16 %v2938
      %v3172 = vunpack.c.l.b16 %v2939
      %v3173 = vunpack.c.l.b16 %v2940
      %v3174 = vunpack.c.l.b16 %v2941
      %v3175 = vunpack.c.l.b16 %v2942
      %v3176 = vpack.c.b16 %v3161, %v3160
      %v3177 = vpack.c.b16 %v3163, %v3162
      %v3178 = vpack.c.b16 %v3165, %v3164
      %v3179 = vpack.c.b16 %v3167, %v3166
      %v3180 = vpack.c.b16 %v3169, %v3168
      %v3181 = vpack.c.b16 %v3171, %v3170
      %v3182 = vpack.c.b16 %v3173, %v3172
      %v3183 = vpack.c.b16 %v3175, %v3174
      %3192 = vmatpush.bf16.msra.mxu0 %v3183
      %3193 = vmatpush.bf16.msra.mxu0 %v3182
      %3194 = vmatpush.bf16.msra.mxu0 %v3181
      %3195 = vmatpush.bf16.msra.mxu0 %v3180
      %3196 = vmatpush.bf16.msra.mxu0 %v3179
      %3197 = vmatpush.bf16.msra.mxu0 %v3178
      %3198 = vmatpush.bf16.msra.mxu0 %v3177
      %3199 = vmatpush.bf16.msra.mxu0 %v3176
      %3200 = vmatmul.bf16.gmra.mxu0 %v2911
      %v3201 = vpop.f32.mrf.mxu0
      %v3202 = vadd.f32 %v3065, %v3201
      %v3203 = vpop.f32.mrf.mxu0
      %v3204 = vadd.f32 %v3067, %v3203
      %3205 = vmatmul.bf16.gmra.mxu0 %v2912
      %v3206 = vpop.f32.mrf.mxu0
      %v3207 = vadd.f32 %v3070, %v3206
      %v3208 = vpop.f32.mrf.mxu0
      %v3209 = vadd.f32 %v3072, %v3208
      %3210 = vmatmul.bf16.gmra.mxu0 %v2913
      %v3211 = vpop.f32.mrf.mxu0
      %v3212 = vadd.f32 %v3075, %v3211
      %v3213 = vpop.f32.mrf.mxu0
      %v3214 = vadd.f32 %v3077, %v3213
      %3215 = vmatmul.bf16.gmra.mxu0 %v2914
      %v3216 = vpop.f32.mrf.mxu0
      %v3217 = vadd.f32 %v3080, %v3216
      %v3218 = vpop.f32.mrf.mxu0
      %v3219 = vadd.f32 %v3082, %v3218
      %3220 = vmatmul.bf16.gmra.mxu0 %v2915
      %v3221 = vpop.f32.mrf.mxu0
      %v3222 = vadd.f32 %v3085, %v3221
      %v3223 = vpop.f32.mrf.mxu0
      %v3224 = vadd.f32 %v3087, %v3223
      %3225 = vmatmul.bf16.gmra.mxu0 %v2916
      %v3226 = vpop.f32.mrf.mxu0
      %v3227 = vadd.f32 %v3090, %v3226
      %v3228 = vpop.f32.mrf.mxu0
      %v3229 = vadd.f32 %v3092, %v3228
      %3230 = vmatmul.bf16.gmra.mxu0 %v2917
      %v3231 = vpop.f32.mrf.mxu0
      %v3232 = vadd.f32 %v3095, %v3231
      %v3233 = vpop.f32.mrf.mxu0
      %v3234 = vadd.f32 %v3097, %v3233
      %3235 = vmatmul.bf16.gmra.mxu0 %v2918
      %v3236 = vpop.f32.mrf.mxu0
      %v3237 = vadd.f32 %v3100, %v3236
      %v3238 = vpop.f32.mrf.mxu0
      %v3239 = vadd.f32 %v3102, %v3238
      %3240 = vmatmul.bf16.gmra.mxu0 %v2919
      %v3241 = vpop.f32.mrf.mxu0
      %v3242 = vadd.f32 %v3105, %v3241
      %v3243 = vpop.f32.mrf.mxu0
      %v3244 = vadd.f32 %v3107, %v3243
      %3245 = vmatmul.bf16.gmra.mxu0 %v2920
      %v3246 = vpop.f32.mrf.mxu0
      %v3247 = vadd.f32 %v3110, %v3246
      %v3248 = vpop.f32.mrf.mxu0
      %v3249 = vadd.f32 %v3112, %v3248
      %3250 = vmatmul.bf16.gmra.mxu0 %v2921
      %v3251 = vpop.f32.mrf.mxu0
      %v3252 = vadd.f32 %v3115, %v3251
      %v3253 = vpop.f32.mrf.mxu0
      %v3254 = vadd.f32 %v3117, %v3253
      %3255 = vmatmul.bf16.gmra.mxu0 %v2922
      %v3256 = vpop.f32.mrf.mxu0
      %v3257 = vadd.f32 %v3120, %v3256
      %v3258 = vpop.f32.mrf.mxu0
      %v3259 = vadd.f32 %v3122, %v3258
      %3260 = vmatmul.bf16.gmra.mxu0 %v2923
      %v3261 = vpop.f32.mrf.mxu0
      %v3262 = vadd.f32 %v3125, %v3261
      %v3263 = vpop.f32.mrf.mxu0
      %v3264 = vadd.f32 %v3127, %v3263
      %3265 = vmatmul.bf16.gmra.mxu0 %v2924
      %v3266 = vpop.f32.mrf.mxu0
      %v3267 = vadd.f32 %v3130, %v3266
      %v3268 = vpop.f32.mrf.mxu0
      %v3269 = vadd.f32 %v3132, %v3268
      %3270 = vmatmul.bf16.gmra.mxu0 %v2925
      %v3271 = vpop.f32.mrf.mxu0
      %v3272 = vadd.f32 %v3135, %v3271
      %v3273 = vpop.f32.mrf.mxu0
      %v3274 = vadd.f32 %v3137, %v3273
      %3275 = vmatmul.bf16.gmra.mxu0 %v2926
      %v3276 = vpop.f32.mrf.mxu0
      %v3277 = vadd.f32 %v3140, %v3276
      %v3278 = vpop.f32.mrf.mxu0
      %v3279 = vadd.f32 %v3142, %v3278
      %3280 = vdwg.mxu0
      %v3281 = vld [vmem:[#allocation3 + $0x2] sm:$0xff]
      %v3282 = vld [vmem:[#allocation3 + $0xa] sm:$0xff]
      %v3283 = vld [vmem:[#allocation3 + $0x1a] sm:$0xff]
      %v3284 = vld [vmem:[#allocation3 + $0x22] sm:$0xff]
      %v3285 = vld [vmem:[#allocation3 + $0x32] sm:$0xff]
      %v3286 = vld [vmem:[#allocation3 + $0x3a] sm:$0xff]
      %v3287 = vld [vmem:[#allocation3 + $0x4a] sm:$0xff]
      %v3288 = vld [vmem:[#allocation3 + $0x52] sm:$0xff]
      %v3289 = vld [vmem:[#allocation3 + $0x62] sm:$0xff]
      %v3290 = vld [vmem:[#allocation3 + $0x6a] sm:$0xff]
      %v3291 = vld [vmem:[#allocation3 + $0x7a] sm:$0xff]
      %v3292 = vld [vmem:[#allocation3 + $0x82] sm:$0xff]
      %v3293 = vld [vmem:[#allocation3 + $0x92] sm:$0xff]
      %v3294 = vld [vmem:[#allocation3 + $0x9a] sm:$0xff]
      %v3295 = vld [vmem:[#allocation3 + $0xaa] sm:$0xff]
      %v3296 = vld [vmem:[#allocation3 + $0xb2] sm:$0xff]
      %v3297 = vld [vmem:[#allocation3 + $0xc2] sm:$0xff]
      %v3298 = vld [vmem:[#allocation3 + $0xca] sm:$0xff]
      %v3299 = vld [vmem:[#allocation3 + $0xda] sm:$0xff]
      %v3300 = vld [vmem:[#allocation3 + $0xe2] sm:$0xff]
      %v3301 = vld [vmem:[#allocation3 + $0xf2] sm:$0xff]
      %v3302 = vld [vmem:[#allocation3 + $0xfa] sm:$0xff]
      %v3303 = vld [vmem:[#allocation3 + $0x10a] sm:$0xff]
      %v3304 = vld [vmem:[#allocation3 + $0x112] sm:$0xff]
      %v3305 = vld [vmem:[#allocation3 + $0x122] sm:$0xff]
      %v3306 = vld [vmem:[#allocation3 + $0x12a] sm:$0xff]
      %v3307 = vld [vmem:[#allocation3 + $0x13a] sm:$0xff]
      %v3308 = vld [vmem:[#allocation3 + $0x142] sm:$0xff]
      %v3309 = vld [vmem:[#allocation3 + $0x152] sm:$0xff]
      %v3310 = vld [vmem:[#allocation3 + $0x15a] sm:$0xff]
      %v3311 = vld [vmem:[#allocation3 + $0x16a] sm:$0xff]
      %v3312 = vld [vmem:[#allocation3 + $0x172] sm:$0xff]
      %v3313 = vpack.c.bf16 %v3282, %v3281
      %v3314 = vpack.c.bf16 %v3284, %v3283
      %v3315 = vpack.c.bf16 %v3286, %v3285
      %v3316 = vpack.c.bf16 %v3288, %v3287
      %v3317 = vpack.c.bf16 %v3290, %v3289
      %v3318 = vpack.c.bf16 %v3292, %v3291
      %v3319 = vpack.c.bf16 %v3294, %v3293
      %v3320 = vpack.c.bf16 %v3296, %v3295
      %v3321 = vpack.c.bf16 %v3298, %v3297
      %v3322 = vpack.c.bf16 %v3300, %v3299
      %v3323 = vpack.c.bf16 %v3302, %v3301
      %v3324 = vpack.c.bf16 %v3304, %v3303
      %v3325 = vpack.c.bf16 %v3306, %v3305
      %v3326 = vpack.c.bf16 %v3308, %v3307
      %v3327 = vpack.c.bf16 %v3310, %v3309
      %v3328 = vpack.c.bf16 %v3312, %v3311
      %v3329 = vld [vmem:[%s4 + $0x80] sm:$0xf]
      %v3330 = vld [vmem:[%s4 + $0x84] sm:$0xf]
      %v3331 = vld [vmem:[%s4 + $0x88] sm:$0xf]
      %v3332 = vld [vmem:[%s4 + $0x8c] sm:$0xf]
      %v3333 = vld [vmem:[%s4 + $0x90] sm:$0xf]
      %v3334 = vld [vmem:[%s4 + $0x94] sm:$0xf]
      %v3335 = vld [vmem:[%s4 + $0x98] sm:$0xf]
      %v3336 = vld [vmem:[%s4 + $0x9c] sm:$0xf]
      %v3337 = vld [vmem:[%s4 + $0xa0] sm:$0xf]
      %v3338 = vld [vmem:[%s4 + $0xa4] sm:$0xf]
      %v3339 = vld [vmem:[%s4 + $0xa8] sm:$0xf]
      %v3340 = vld [vmem:[%s4 + $0xac] sm:$0xf]
      %v3341 = vld [vmem:[%s4 + $0xb0] sm:$0xf]
      %v3342 = vld [vmem:[%s4 + $0xb4] sm:$0xf]
      %v3343 = vld [vmem:[%s4 + $0xb8] sm:$0xf]
      %v3344 = vld [vmem:[%s4 + $0xbc] sm:$0xf]
      %v3361 = vunpack.c.l.b16 %v3329
      %v3362 = vunpack.c.l.b16 %v3330
      %v3363 = vunpack.c.l.b16 %v3331
      %v3364 = vunpack.c.l.b16 %v3332
      %v3365 = vunpack.c.l.b16 %v3333
      %v3366 = vunpack.c.l.b16 %v3334
      %v3367 = vunpack.c.l.b16 %v3335
      %v3368 = vunpack.c.l.b16 %v3336
      %v3369 = vunpack.c.l.b16 %v3337
      %v3370 = vunpack.c.l.b16 %v3338
      %v3371 = vunpack.c.l.b16 %v3339
      %v3372 = vunpack.c.l.b16 %v3340
      %v3373 = vunpack.c.l.b16 %v3341
      %v3374 = vunpack.c.l.b16 %v3342
      %v3375 = vunpack.c.l.b16 %v3343
      %v3376 = vunpack.c.l.b16 %v3344
      %v3377 = vpack.c.b16 %v3362, %v3361
      %v3378 = vpack.c.b16 %v3364, %v3363
      %v3379 = vpack.c.b16 %v3366, %v3365
      %v3380 = vpack.c.b16 %v3368, %v3367
      %v3381 = vpack.c.b16 %v3370, %v3369
      %v3382 = vpack.c.b16 %v3372, %v3371
      %v3383 = vpack.c.b16 %v3374, %v3373
      %v3384 = vpack.c.b16 %v3376, %v3375
      %3393 = vmatpush.bf16.msra.mxu0 %v3384
      %3394 = vmatpush.bf16.msra.mxu0 %v3383
      %3395 = vmatpush.bf16.msra.mxu0 %v3382
      %3396 = vmatpush.bf16.msra.mxu0 %v3381
      %3397 = vmatpush.bf16.msra.mxu0 %v3380
      %3398 = vmatpush.bf16.msra.mxu0 %v3379
      %3399 = vmatpush.bf16.msra.mxu0 %v3378
      %3400 = vmatpush.bf16.msra.mxu0 %v3377
      %3401 = vmatmul.bf16.gmra.mxu0 %v3313
      %v3402 = vpop.f32.mrf.mxu0
      %v3403 = vadd.f32 0.0, %v3402
      %v3404 = vpop.f32.mrf.mxu0
      %v3405 = vadd.f32 0.0, %v3404
      %3406 = vmatmul.bf16.gmra.mxu0 %v3314
      %v3407 = vpop.f32.mrf.mxu0
      %v3408 = vadd.f32 0.0, %v3407
      %v3409 = vpop.f32.mrf.mxu0
      %v3410 = vadd.f32 0.0, %v3409
      %3411 = vmatmul.bf16.gmra.mxu0 %v3315
      %v3412 = vpop.f32.mrf.mxu0
      %v3413 = vadd.f32 0.0, %v3412
      %v3414 = vpop.f32.mrf.mxu0
      %v3415 = vadd.f32 0.0, %v3414
      %3416 = vmatmul.bf16.gmra.mxu0 %v3316
      %v3417 = vpop.f32.mrf.mxu0
      %v3418 = vadd.f32 0.0, %v3417
      %v3419 = vpop.f32.mrf.mxu0
      %v3420 = vadd.f32 0.0, %v3419
      %3421 = vmatmul.bf16.gmra.mxu0 %v3317
      %v3422 = vpop.f32.mrf.mxu0
      %v3423 = vadd.f32 0.0, %v3422
      %v3424 = vpop.f32.mrf.mxu0
      %v3425 = vadd.f32 0.0, %v3424
      %3426 = vmatmul.bf16.gmra.mxu0 %v3318
      %v3427 = vpop.f32.mrf.mxu0
      %v3428 = vadd.f32 0.0, %v3427
      %v3429 = vpop.f32.mrf.mxu0
      %v3430 = vadd.f32 0.0, %v3429
      %3431 = vmatmul.bf16.gmra.mxu0 %v3319
      %v3432 = vpop.f32.mrf.mxu0
      %v3433 = vadd.f32 0.0, %v3432
      %v3434 = vpop.f32.mrf.mxu0
      %v3435 = vadd.f32 0.0, %v3434
      %3436 = vmatmul.bf16.gmra.mxu0 %v3320
      %v3437 = vpop.f32.mrf.mxu0
      %v3438 = vadd.f32 0.0, %v3437
      %v3439 = vpop.f32.mrf.mxu0
      %v3440 = vadd.f32 0.0, %v3439
      %3441 = vmatmul.bf16.gmra.mxu0 %v3321
      %v3442 = vpop.f32.mrf.mxu0
      %v3443 = vadd.f32 0.0, %v3442
      %v3444 = vpop.f32.mrf.mxu0
      %v3445 = vadd.f32 0.0, %v3444
      %3446 = vmatmul.bf16.gmra.mxu0 %v3322
      %v3447 = vpop.f32.mrf.mxu0
      %v3448 = vadd.f32 0.0, %v3447
      %v3449 = vpop.f32.mrf.mxu0
      %v3450 = vadd.f32 0.0, %v3449
      %3451 = vmatmul.bf16.gmra.mxu0 %v3323
      %v3452 = vpop.f32.mrf.mxu0
      %v3453 = vadd.f32 0.0, %v3452
      %v3454 = vpop.f32.mrf.mxu0
      %v3455 = vadd.f32 0.0, %v3454
      %3456 = vmatmul.bf16.gmra.mxu0 %v3324
      %v3457 = vpop.f32.mrf.mxu0
      %v3458 = vadd.f32 0.0, %v3457
      %v3459 = vpop.f32.mrf.mxu0
      %v3460 = vadd.f32 0.0, %v3459
      %3461 = vmatmul.bf16.gmra.mxu0 %v3325
      %v3462 = vpop.f32.mrf.mxu0
      %v3463 = vadd.f32 0.0, %v3462
      %v3464 = vpop.f32.mrf.mxu0
      %v3465 = vadd.f32 0.0, %v3464
      %3466 = vmatmul.bf16.gmra.mxu0 %v3326
      %v3467 = vpop.f32.mrf.mxu0
      %v3468 = vadd.f32 0.0, %v3467
      %v3469 = vpop.f32.mrf.mxu0
      %v3470 = vadd.f32 0.0, %v3469
      %3471 = vmatmul.bf16.gmra.mxu0 %v3327
      %v3472 = vpop.f32.mrf.mxu0
      %v3473 = vadd.f32 0.0, %v3472
      %v3474 = vpop.f32.mrf.mxu0
      %v3475 = vadd.f32 0.0, %v3474
      %3476 = vmatmul.bf16.gmra.mxu0 %v3328
      %v3477 = vpop.f32.mrf.mxu0
      %v3478 = vadd.f32 0.0, %v3477
      %v3479 = vpop.f32.mrf.mxu0
      %v3480 = vadd.f32 0.0, %v3479
      %3481 = vdwg.mxu0
      %v3482 = vadd.f32 %v3202, %v3403
      %v3483 = vadd.f32 %v3204, %v3405
      %v3484 = vadd.f32 %v3207, %v3408
      %v3485 = vadd.f32 %v3209, %v3410
      %v3486 = vadd.f32 %v3212, %v3413
      %v3487 = vadd.f32 %v3214, %v3415
      %v3488 = vadd.f32 %v3217, %v3418
      %v3489 = vadd.f32 %v3219, %v3420
      %v3490 = vadd.f32 %v3222, %v3423
      %v3491 = vadd.f32 %v3224, %v3425
      %v3492 = vadd.f32 %v3227, %v3428
      %v3493 = vadd.f32 %v3229, %v3430
      %v3494 = vadd.f32 %v3232, %v3433
      %v3495 = vadd.f32 %v3234, %v3435
      %v3496 = vadd.f32 %v3237, %v3438
      %v3497 = vadd.f32 %v3239, %v3440
      %v3498 = vadd.f32 %v3242, %v3443
      %v3499 = vadd.f32 %v3244, %v3445
      %v3500 = vadd.f32 %v3247, %v3448
      %v3501 = vadd.f32 %v3249, %v3450
      %v3502 = vadd.f32 %v3252, %v3453
      %v3503 = vadd.f32 %v3254, %v3455
      %v3504 = vadd.f32 %v3257, %v3458
      %v3505 = vadd.f32 %v3259, %v3460
      %v3506 = vadd.f32 %v3262, %v3463
      %v3507 = vadd.f32 %v3264, %v3465
      %v3508 = vadd.f32 %v3267, %v3468
      %v3509 = vadd.f32 %v3269, %v3470
      %v3510 = vadd.f32 %v3272, %v3473
      %v3511 = vadd.f32 %v3274, %v3475
      %v3512 = vadd.f32 %v3277, %v3478
      %v3513 = vadd.f32 %v3279, %v3480
      %v3514 = vld [vmem:[%s2845] sm:$0xff]
      %v3515 = vld [vmem:[%s2845 + $0x8] sm:$0xff]
      %v3516 = vld [vmem:[%s2845 + $0x18] sm:$0xff]
      %v3517 = vld [vmem:[%s2845 + $0x20] sm:$0xff]
      %v3518 = vld [vmem:[%s2845 + $0x30] sm:$0xff]
      %v3519 = vld [vmem:[%s2845 + $0x38] sm:$0xff]
      %v3520 = vld [vmem:[%s2845 + $0x48] sm:$0xff]
      %v3521 = vld [vmem:[%s2845 + $0x50] sm:$0xff]
      %v3522 = vld [vmem:[%s2845 + $0x60] sm:$0xff]
      %v3523 = vld [vmem:[%s2845 + $0x68] sm:$0xff]
      %v3524 = vld [vmem:[%s2845 + $0x78] sm:$0xff]
      %v3525 = vld [vmem:[%s2845 + $0x80] sm:$0xff]
      %v3526 = vld [vmem:[%s2845 + $0x90] sm:$0xff]
      %v3527 = vld [vmem:[%s2845 + $0x98] sm:$0xff]
      %v3528 = vld [vmem:[%s2845 + $0xa8] sm:$0xff]
      %v3529 = vld [vmem:[%s2845 + $0xb0] sm:$0xff]
      %v3530 = vld [vmem:[%s2845 + $0xc0] sm:$0xff]
      %v3531 = vld [vmem:[%s2845 + $0xc8] sm:$0xff]
      %v3532 = vld [vmem:[%s2845 + $0xd8] sm:$0xff]
      %v3533 = vld [vmem:[%s2845 + $0xe0] sm:$0xff]
      %v3534 = vld [vmem:[%s2845 + $0xf0] sm:$0xff]
      %v3535 = vld [vmem:[%s2845 + $0xf8] sm:$0xff]
      %v3536 = vld [vmem:[%s2845 + $0x108] sm:$0xff]
      %v3537 = vld [vmem:[%s2845 + $0x110] sm:$0xff]
      %v3538 = vld [vmem:[%s2845 + $0x120] sm:$0xff]
      %v3539 = vld [vmem:[%s2845 + $0x128] sm:$0xff]
      %v3540 = vld [vmem:[%s2845 + $0x138] sm:$0xff]
      %v3541 = vld [vmem:[%s2845 + $0x140] sm:$0xff]
      %v3542 = vld [vmem:[%s2845 + $0x150] sm:$0xff]
      %v3543 = vld [vmem:[%s2845 + $0x158] sm:$0xff]
      %v3544 = vld [vmem:[%s2845 + $0x168] sm:$0xff]
      %v3545 = vld [vmem:[%s2845 + $0x170] sm:$0xff]
      %v3546 = vpack.c.bf16 %v3515, %v3514
      %v3547 = vpack.c.bf16 %v3517, %v3516
      %v3548 = vpack.c.bf16 %v3519, %v3518
      %v3549 = vpack.c.bf16 %v3521, %v3520
      %v3550 = vpack.c.bf16 %v3523, %v3522
      %v3551 = vpack.c.bf16 %v3525, %v3524
      %v3552 = vpack.c.bf16 %v3527, %v3526
      %v3553 = vpack.c.bf16 %v3529, %v3528
      %v3554 = vpack.c.bf16 %v3531, %v3530
      %v3555 = vpack.c.bf16 %v3533, %v3532
      %v3556 = vpack.c.bf16 %v3535, %v3534
      %v3557 = vpack.c.bf16 %v3537, %v3536
      %v3558 = vpack.c.bf16 %v3539, %v3538
      %v3559 = vpack.c.bf16 %v3541, %v3540
      %v3560 = vpack.c.bf16 %v3543, %v3542
      %v3561 = vpack.c.bf16 %v3545, %v3544
      %v3562 = vld [vmem:[%s4 + $0xc0] sm:$0xf]
      %v3563 = vld [vmem:[%s4 + $0xc4] sm:$0xf]
      %v3564 = vld [vmem:[%s4 + $0xc8] sm:$0xf]
      %v3565 = vld [vmem:[%s4 + $0xcc] sm:$0xf]
      %v3566 = vld [vmem:[%s4 + $0xd0] sm:$0xf]
      %v3567 = vld [vmem:[%s4 + $0xd4] sm:$0xf]
      %v3568 = vld [vmem:[%s4 + $0xd8] sm:$0xf]
      %v3569 = vld [vmem:[%s4 + $0xdc] sm:$0xf]
      %v3570 = vld [vmem:[%s4 + $0xe0] sm:$0xf]
      %v3571 = vld [vmem:[%s4 + $0xe4] sm:$0xf]
      %v3572 = vld [vmem:[%s4 + $0xe8] sm:$0xf]
      %v3573 = vld [vmem:[%s4 + $0xec] sm:$0xf]
      %v3574 = vld [vmem:[%s4 + $0xf0] sm:$0xf]
      %v3575 = vld [vmem:[%s4 + $0xf4] sm:$0xf]
      %v3576 = vld [vmem:[%s4 + $0xf8] sm:$0xf]
      %v3577 = vld [vmem:[%s4 + $0xfc] sm:$0xf]
      %v3594 = vunpack.c.l.b16 %v3562
      %v3595 = vunpack.c.l.b16 %v3563
      %v3596 = vunpack.c.l.b16 %v3564
      %v3597 = vunpack.c.l.b16 %v3565
      %v3598 = vunpack.c.l.b16 %v3566
      %v3599 = vunpack.c.l.b16 %v3567
      %v3600 = vunpack.c.l.b16 %v3568
      %v3601 = vunpack.c.l.b16 %v3569
      %v3602 = vunpack.c.l.b16 %v3570
      %v3603 = vunpack.c.l.b16 %v3571
      %v3604 = vunpack.c.l.b16 %v3572
      %v3605 = vunpack.c.l.b16 %v3573
      %v3606 = vunpack.c.l.b16 %v3574
      %v3607 = vunpack.c.l.b16 %v3575
      %v3608 = vunpack.c.l.b16 %v3576
      %v3609 = vunpack.c.l.b16 %v3577
      %v3610 = vpack.c.b16 %v3595, %v3594
      %v3611 = vpack.c.b16 %v3597, %v3596
      %v3612 = vpack.c.b16 %v3599, %v3598
      %v3613 = vpack.c.b16 %v3601, %v3600
      %v3614 = vpack.c.b16 %v3603, %v3602
      %v3615 = vpack.c.b16 %v3605, %v3604
      %v3616 = vpack.c.b16 %v3607, %v3606
      %v3617 = vpack.c.b16 %v3609, %v3608
      %3626 = vmatpush.bf16.msra.mxu0 %v3617
      %3627 = vmatpush.bf16.msra.mxu0 %v3616
      %3628 = vmatpush.bf16.msra.mxu0 %v3615
      %3629 = vmatpush.bf16.msra.mxu0 %v3614
      %3630 = vmatpush.bf16.msra.mxu0 %v3613
      %3631 = vmatpush.bf16.msra.mxu0 %v3612
      %3632 = vmatpush.bf16.msra.mxu0 %v3611
      %3633 = vmatpush.bf16.msra.mxu0 %v3610
      %3634 = vmatmul.bf16.gmra.mxu0 %v3546
      %v3635 = vpop.f32.mrf.mxu0
      %v3636 = vadd.f32 0.0, %v3635
      %v3637 = vpop.f32.mrf.mxu0
      %v3638 = vadd.f32 0.0, %v3637
      %3639 = vmatmul.bf16.gmra.mxu0 %v3547
      %v3640 = vpop.f32.mrf.mxu0
      %v3641 = vadd.f32 0.0, %v3640
      %v3642 = vpop.f32.mrf.mxu0
      %v3643 = vadd.f32 0.0, %v3642
      %3644 = vmatmul.bf16.gmra.mxu0 %v3548
      %v3645 = vpop.f32.mrf.mxu0
      %v3646 = vadd.f32 0.0, %v3645
      %v3647 = vpop.f32.mrf.mxu0
      %v3648 = vadd.f32 0.0, %v3647
      %3649 = vmatmul.bf16.gmra.mxu0 %v3549
      %v3650 = vpop.f32.mrf.mxu0
      %v3651 = vadd.f32 0.0, %v3650
      %v3652 = vpop.f32.mrf.mxu0
      %v3653 = vadd.f32 0.0, %v3652
      %3654 = vmatmul.bf16.gmra.mxu0 %v3550
      %v3655 = vpop.f32.mrf.mxu0
      %v3656 = vadd.f32 0.0, %v3655
      %v3657 = vpop.f32.mrf.mxu0
      %v3658 = vadd.f32 0.0, %v3657
      %3659 = vmatmul.bf16.gmra.mxu0 %v3551
      %v3660 = vpop.f32.mrf.mxu0
      %v3661 = vadd.f32 0.0, %v3660
      %v3662 = vpop.f32.mrf.mxu0
      %v3663 = vadd.f32 0.0, %v3662
      %3664 = vmatmul.bf16.gmra.mxu0 %v3552
      %v3665 = vpop.f32.mrf.mxu0
      %v3666 = vadd.f32 0.0, %v3665
      %v3667 = vpop.f32.mrf.mxu0
      %v3668 = vadd.f32 0.0, %v3667
      %3669 = vmatmul.bf16.gmra.mxu0 %v3553
      %v3670 = vpop.f32.mrf.mxu0
      %v3671 = vadd.f32 0.0, %v3670
      %v3672 = vpop.f32.mrf.mxu0
      %v3673 = vadd.f32 0.0, %v3672
      %3674 = vmatmul.bf16.gmra.mxu0 %v3554
      %v3675 = vpop.f32.mrf.mxu0
      %v3676 = vadd.f32 0.0, %v3675
      %v3677 = vpop.f32.mrf.mxu0
      %v3678 = vadd.f32 0.0, %v3677
      %3679 = vmatmul.bf16.gmra.mxu0 %v3555
      %v3680 = vpop.f32.mrf.mxu0
      %v3681 = vadd.f32 0.0, %v3680
      %v3682 = vpop.f32.mrf.mxu0
      %v3683 = vadd.f32 0.0, %v3682
      %3684 = vmatmul.bf16.gmra.mxu0 %v3556
      %v3685 = vpop.f32.mrf.mxu0
      %v3686 = vadd.f32 0.0, %v3685
      %v3687 = vpop.f32.mrf.mxu0
      %v3688 = vadd.f32 0.0, %v3687
      %3689 = vmatmul.bf16.gmra.mxu0 %v3557
      %v3690 = vpop.f32.mrf.mxu0
      %v3691 = vadd.f32 0.0, %v3690
      %v3692 = vpop.f32.mrf.mxu0
      %v3693 = vadd.f32 0.0, %v3692
      %3694 = vmatmul.bf16.gmra.mxu0 %v3558
      %v3695 = vpop.f32.mrf.mxu0
      %v3696 = vadd.f32 0.0, %v3695
      %v3697 = vpop.f32.mrf.mxu0
      %v3698 = vadd.f32 0.0, %v3697
      %3699 = vmatmul.bf16.gmra.mxu0 %v3559
      %v3700 = vpop.f32.mrf.mxu0
      %v3701 = vadd.f32 0.0, %v3700
      %v3702 = vpop.f32.mrf.mxu0
      %v3703 = vadd.f32 0.0, %v3702
      %3704 = vmatmul.bf16.gmra.mxu0 %v3560
      %v3705 = vpop.f32.mrf.mxu0
      %v3706 = vadd.f32 0.0, %v3705
      %v3707 = vpop.f32.mrf.mxu0
      %v3708 = vadd.f32 0.0, %v3707
      %3709 = vmatmul.bf16.gmra.mxu0 %v3561
      %v3710 = vpop.f32.mrf.mxu0
      %v3711 = vadd.f32 0.0, %v3710
      %v3712 = vpop.f32.mrf.mxu0
      %v3713 = vadd.f32 0.0, %v3712
      %3714 = vdwg.mxu0
      %v3715 = vadd.f32 %v3482, %v3636
      %v3716 = vadd.f32 %v3483, %v3638
      %v3717 = vadd.f32 %v3484, %v3641
      %v3718 = vadd.f32 %v3485, %v3643
      %v3719 = vadd.f32 %v3486, %v3646
      %v3720 = vadd.f32 %v3487, %v3648
      %v3721 = vadd.f32 %v3488, %v3651
      %v3722 = vadd.f32 %v3489, %v3653
      %v3723 = vadd.f32 %v3490, %v3656
      %v3724 = vadd.f32 %v3491, %v3658
      %v3725 = vadd.f32 %v3492, %v3661
      %v3726 = vadd.f32 %v3493, %v3663
      %v3727 = vadd.f32 %v3494, %v3666
      %v3728 = vadd.f32 %v3495, %v3668
      %v3729 = vadd.f32 %v3496, %v3671
      %v3730 = vadd.f32 %v3497, %v3673
      %v3731 = vadd.f32 %v3498, %v3676
      %v3732 = vadd.f32 %v3499, %v3678
      %v3733 = vadd.f32 %v3500, %v3681
      %v3734 = vadd.f32 %v3501, %v3683
      %v3735 = vadd.f32 %v3502, %v3686
      %v3736 = vadd.f32 %v3503, %v3688
      %v3737 = vadd.f32 %v3504, %v3691
      %v3738 = vadd.f32 %v3505, %v3693
      %v3739 = vadd.f32 %v3506, %v3696
      %v3740 = vadd.f32 %v3507, %v3698
      %v3741 = vadd.f32 %v3508, %v3701
      %v3742 = vadd.f32 %v3509, %v3703
      %v3743 = vadd.f32 %v3510, %v3706
      %v3744 = vadd.f32 %v3511, %v3708
      %v3745 = vadd.f32 %v3512, %v3711
      %v3746 = vadd.f32 %v3513, %v3713
      %v3747 = vld [vmem:[%s2845 + $0x1] sm:$0xff]
      %v3748 = vld [vmem:[%s2845 + $0x9] sm:$0xff]
      %v3749 = vld [vmem:[%s2845 + $0x19] sm:$0xff]
      %v3750 = vld [vmem:[%s2845 + $0x21] sm:$0xff]
      %v3751 = vld [vmem:[%s2845 + $0x31] sm:$0xff]
      %v3752 = vld [vmem:[%s2845 + $0x39] sm:$0xff]
      %v3753 = vld [vmem:[%s2845 + $0x49] sm:$0xff]
      %v3754 = vld [vmem:[%s2845 + $0x51] sm:$0xff]
      %v3755 = vld [vmem:[%s2845 + $0x61] sm:$0xff]
      %v3756 = vld [vmem:[%s2845 + $0x69] sm:$0xff]
      %v3757 = vld [vmem:[%s2845 + $0x79] sm:$0xff]
      %v3758 = vld [vmem:[%s2845 + $0x81] sm:$0xff]
      %v3759 = vld [vmem:[%s2845 + $0x91] sm:$0xff]
      %v3760 = vld [vmem:[%s2845 + $0x99] sm:$0xff]
      %v3761 = vld [vmem:[%s2845 + $0xa9] sm:$0xff]
      %v3762 = vld [vmem:[%s2845 + $0xb1] sm:$0xff]
      %v3763 = vld [vmem:[%s2845 + $0xc1] sm:$0xff]
      %v3764 = vld [vmem:[%s2845 + $0xc9] sm:$0xff]
      %v3765 = vld [vmem:[%s2845 + $0xd9] sm:$0xff]
      %v3766 = vld [vmem:[%s2845 + $0xe1] sm:$0xff]
      %v3767 = vld [vmem:[%s2845 + $0xf1] sm:$0xff]
      %v3768 = vld [vmem:[%s2845 + $0xf9] sm:$0xff]
      %v3769 = vld [vmem:[%s2845 + $0x109] sm:$0xff]
      %v3770 = vld [vmem:[%s2845 + $0x111] sm:$0xff]
      %v3771 = vld [vmem:[%s2845 + $0x121] sm:$0xff]
      %v3772 = vld [vmem:[%s2845 + $0x129] sm:$0xff]
      %v3773 = vld [vmem:[%s2845 + $0x139] sm:$0xff]
      %v3774 = vld [vmem:[%s2845 + $0x141] sm:$0xff]
      %v3775 = vld [vmem:[%s2845 + $0x151] sm:$0xff]
      %v3776 = vld [vmem:[%s2845 + $0x159] sm:$0xff]
      %v3777 = vld [vmem:[%s2845 + $0x169] sm:$0xff]
      %v3778 = vld [vmem:[%s2845 + $0x171] sm:$0xff]
      %v3779 = vpack.c.bf16 %v3748, %v3747
      %v3780 = vpack.c.bf16 %v3750, %v3749
      %v3781 = vpack.c.bf16 %v3752, %v3751
      %v3782 = vpack.c.bf16 %v3754, %v3753
      %v3783 = vpack.c.bf16 %v3756, %v3755
      %v3784 = vpack.c.bf16 %v3758, %v3757
      %v3785 = vpack.c.bf16 %v3760, %v3759
      %v3786 = vpack.c.bf16 %v3762, %v3761
      %v3787 = vpack.c.bf16 %v3764, %v3763
      %v3788 = vpack.c.bf16 %v3766, %v3765
      %v3789 = vpack.c.bf16 %v3768, %v3767
      %v3790 = vpack.c.bf16 %v3770, %v3769
      %v3791 = vpack.c.bf16 %v3772, %v3771
      %v3792 = vpack.c.bf16 %v3774, %v3773
      %v3793 = vpack.c.bf16 %v3776, %v3775
      %v3794 = vpack.c.bf16 %v3778, %v3777
      %v3795 = vld [vmem:[%s4 + $0x100] sm:$0xf]
      %v3796 = vld [vmem:[%s4 + $0x104] sm:$0xf]
      %v3797 = vld [vmem:[%s4 + $0x108] sm:$0xf]
      %v3798 = vld [vmem:[%s4 + $0x10c] sm:$0xf]
      %v3799 = vld [vmem:[%s4 + $0x110] sm:$0xf]
      %v3800 = vld [vmem:[%s4 + $0x114] sm:$0xf]
      %v3801 = vld [vmem:[%s4 + $0x118] sm:$0xf]
      %v3802 = vld [vmem:[%s4 + $0x11c] sm:$0xf]
      %v3803 = vld [vmem:[%s4 + $0x120] sm:$0xf]
      %v3804 = vld [vmem:[%s4 + $0x124] sm:$0xf]
      %v3805 = vld [vmem:[%s4 + $0x128] sm:$0xf]
      %v3806 = vld [vmem:[%s4 + $0x12c] sm:$0xf]
      %v3807 = vld [vmem:[%s4 + $0x130] sm:$0xf]
      %v3808 = vld [vmem:[%s4 + $0x134] sm:$0xf]
      %v3809 = vld [vmem:[%s4 + $0x138] sm:$0xf]
      %v3810 = vld [vmem:[%s4 + $0x13c] sm:$0xf]
      %v3827 = vunpack.c.l.b16 %v3795
      %v3828 = vunpack.c.l.b16 %v3796
      %v3829 = vunpack.c.l.b16 %v3797
      %v3830 = vunpack.c.l.b16 %v3798
      %v3831 = vunpack.c.l.b16 %v3799
      %v3832 = vunpack.c.l.b16 %v3800
      %v3833 = vunpack.c.l.b16 %v3801
      %v3834 = vunpack.c.l.b16 %v3802
      %v3835 = vunpack.c.l.b16 %v3803
      %v3836 = vunpack.c.l.b16 %v3804
      %v3837 = vunpack.c.l.b16 %v3805
      %v3838 = vunpack.c.l.b16 %v3806
      %v3839 = vunpack.c.l.b16 %v3807
      %v3840 = vunpack.c.l.b16 %v3808
      %v3841 = vunpack.c.l.b16 %v3809
      %v3842 = vunpack.c.l.b16 %v3810
      %v3843 = vpack.c.b16 %v3828, %v3827
      %v3844 = vpack.c.b16 %v3830, %v3829
      %v3845 = vpack.c.b16 %v3832, %v3831
      %v3846 = vpack.c.b16 %v3834, %v3833
      %v3847 = vpack.c.b16 %v3836, %v3835
      %v3848 = vpack.c.b16 %v3838, %v3837
      %v3849 = vpack.c.b16 %v3840, %v3839
      %v3850 = vpack.c.b16 %v3842, %v3841
      %3859 = vmatpush.bf16.msra.mxu0 %v3850
      %3860 = vmatpush.bf16.msra.mxu0 %v3849
      %3861 = vmatpush.bf16.msra.mxu0 %v3848
      %3862 = vmatpush.bf16.msra.mxu0 %v3847
      %3863 = vmatpush.bf16.msra.mxu0 %v3846
      %3864 = vmatpush.bf16.msra.mxu0 %v3845
      %3865 = vmatpush.bf16.msra.mxu0 %v3844
      %3866 = vmatpush.bf16.msra.mxu0 %v3843
      %3867 = vmatmul.bf16.gmra.mxu0 %v3779
      %v3868 = vpop.f32.mrf.mxu0
      %v3869 = vadd.f32 0.0, %v3868
      %v3870 = vpop.f32.mrf.mxu0
      %v3871 = vadd.f32 0.0, %v3870
      %3872 = vmatmul.bf16.gmra.mxu0 %v3780
      %v3873 = vpop.f32.mrf.mxu0
      %v3874 = vadd.f32 0.0, %v3873
      %v3875 = vpop.f32.mrf.mxu0
      %v3876 = vadd.f32 0.0, %v3875
      %3877 = vmatmul.bf16.gmra.mxu0 %v3781
      %v3878 = vpop.f32.mrf.mxu0
      %v3879 = vadd.f32 0.0, %v3878
      %v3880 = vpop.f32.mrf.mxu0
      %v3881 = vadd.f32 0.0, %v3880
      %3882 = vmatmul.bf16.gmra.mxu0 %v3782
      %v3883 = vpop.f32.mrf.mxu0
      %v3884 = vadd.f32 0.0, %v3883
      %v3885 = vpop.f32.mrf.mxu0
      %v3886 = vadd.f32 0.0, %v3885
      %3887 = vmatmul.bf16.gmra.mxu0 %v3783
      %v3888 = vpop.f32.mrf.mxu0
      %v3889 = vadd.f32 0.0, %v3888
      %v3890 = vpop.f32.mrf.mxu0
      %v3891 = vadd.f32 0.0, %v3890
      %3892 = vmatmul.bf16.gmra.mxu0 %v3784
      %v3893 = vpop.f32.mrf.mxu0
      %v3894 = vadd.f32 0.0, %v3893
      %v3895 = vpop.f32.mrf.mxu0
      %v3896 = vadd.f32 0.0, %v3895
      %3897 = vmatmul.bf16.gmra.mxu0 %v3785
      %v3898 = vpop.f32.mrf.mxu0
      %v3899 = vadd.f32 0.0, %v3898
      %v3900 = vpop.f32.mrf.mxu0
      %v3901 = vadd.f32 0.0, %v3900
      %3902 = vmatmul.bf16.gmra.mxu0 %v3786
      %v3903 = vpop.f32.mrf.mxu0
      %v3904 = vadd.f32 0.0, %v3903
      %v3905 = vpop.f32.mrf.mxu0
      %v3906 = vadd.f32 0.0, %v3905
      %3907 = vmatmul.bf16.gmra.mxu0 %v3787
      %v3908 = vpop.f32.mrf.mxu0
      %v3909 = vadd.f32 0.0, %v3908
      %v3910 = vpop.f32.mrf.mxu0
      %v3911 = vadd.f32 0.0, %v3910
      %3912 = vmatmul.bf16.gmra.mxu0 %v3788
      %v3913 = vpop.f32.mrf.mxu0
      %v3914 = vadd.f32 0.0, %v3913
      %v3915 = vpop.f32.mrf.mxu0
      %v3916 = vadd.f32 0.0, %v3915
      %3917 = vmatmul.bf16.gmra.mxu0 %v3789
      %v3918 = vpop.f32.mrf.mxu0
      %v3919 = vadd.f32 0.0, %v3918
      %v3920 = vpop.f32.mrf.mxu0
      %v3921 = vadd.f32 0.0, %v3920
      %3922 = vmatmul.bf16.gmra.mxu0 %v3790
      %v3923 = vpop.f32.mrf.mxu0
      %v3924 = vadd.f32 0.0, %v3923
      %v3925 = vpop.f32.mrf.mxu0
      %v3926 = vadd.f32 0.0, %v3925
      %3927 = vmatmul.bf16.gmra.mxu0 %v3791
      %v3928 = vpop.f32.mrf.mxu0
      %v3929 = vadd.f32 0.0, %v3928
      %v3930 = vpop.f32.mrf.mxu0
      %v3931 = vadd.f32 0.0, %v3930
      %3932 = vmatmul.bf16.gmra.mxu0 %v3792
      %v3933 = vpop.f32.mrf.mxu0
      %v3934 = vadd.f32 0.0, %v3933
      %v3935 = vpop.f32.mrf.mxu0
      %v3936 = vadd.f32 0.0, %v3935
      %3937 = vmatmul.bf16.gmra.mxu0 %v3793
      %v3938 = vpop.f32.mrf.mxu0
      %v3939 = vadd.f32 0.0, %v3938
      %v3940 = vpop.f32.mrf.mxu0
      %v3941 = vadd.f32 0.0, %v3940
      %3942 = vmatmul.bf16.gmra.mxu0 %v3794
      %v3943 = vpop.f32.mrf.mxu0
      %v3944 = vadd.f32 0.0, %v3943
      %v3945 = vpop.f32.mrf.mxu0
      %v3946 = vadd.f32 0.0, %v3945
      %3947 = vdwg.mxu0
      %v3948 = vadd.f32 %v3715, %v3869
      %v3949 = vadd.f32 %v3716, %v3871
      %v3950 = vadd.f32 %v3717, %v3874
      %v3951 = vadd.f32 %v3718, %v3876
      %v3952 = vadd.f32 %v3719, %v3879
      %v3953 = vadd.f32 %v3720, %v3881
      %v3954 = vadd.f32 %v3721, %v3884
      %v3955 = vadd.f32 %v3722, %v3886
      %v3956 = vadd.f32 %v3723, %v3889
      %v3957 = vadd.f32 %v3724, %v3891
      %v3958 = vadd.f32 %v3725, %v3894
      %v3959 = vadd.f32 %v3726, %v3896
      %v3960 = vadd.f32 %v3727, %v3899
      %v3961 = vadd.f32 %v3728, %v3901
      %v3962 = vadd.f32 %v3729, %v3904
      %v3963 = vadd.f32 %v3730, %v3906
      %v3964 = vadd.f32 %v3731, %v3909
      %v3965 = vadd.f32 %v3732, %v3911
      %v3966 = vadd.f32 %v3733, %v3914
      %v3967 = vadd.f32 %v3734, %v3916
      %v3968 = vadd.f32 %v3735, %v3919
      %v3969 = vadd.f32 %v3736, %v3921
      %v3970 = vadd.f32 %v3737, %v3924
      %v3971 = vadd.f32 %v3738, %v3926
      %v3972 = vadd.f32 %v3739, %v3929
      %v3973 = vadd.f32 %v3740, %v3931
      %v3974 = vadd.f32 %v3741, %v3934
      %v3975 = vadd.f32 %v3742, %v3936
      %v3976 = vadd.f32 %v3743, %v3939
      %v3977 = vadd.f32 %v3744, %v3941
      %v3978 = vadd.f32 %v3745, %v3944
      %v3979 = vadd.f32 %v3746, %v3946
      %v3980 = vld [vmem:[%s2845 + $0x2] sm:$0xff]
      %v3981 = vld [vmem:[%s2845 + $0xa] sm:$0xff]
      %v3982 = vld [vmem:[%s2845 + $0x1a] sm:$0xff]
      %v3983 = vld [vmem:[%s2845 + $0x22] sm:$0xff]
      %v3984 = vld [vmem:[%s2845 + $0x32] sm:$0xff]
      %v3985 = vld [vmem:[%s2845 + $0x3a] sm:$0xff]
      %v3986 = vld [vmem:[%s2845 + $0x4a] sm:$0xff]
      %v3987 = vld [vmem:[%s2845 + $0x52] sm:$0xff]
      %v3988 = vld [vmem:[%s2845 + $0x62] sm:$0xff]
      %v3989 = vld [vmem:[%s2845 + $0x6a] sm:$0xff]
      %v3990 = vld [vmem:[%s2845 + $0x7a] sm:$0xff]
      %v3991 = vld [vmem:[%s2845 + $0x82] sm:$0xff]
      %v3992 = vld [vmem:[%s2845 + $0x92] sm:$0xff]
      %v3993 = vld [vmem:[%s2845 + $0x9a] sm:$0xff]
      %v3994 = vld [vmem:[%s2845 + $0xaa] sm:$0xff]
      %v3995 = vld [vmem:[%s2845 + $0xb2] sm:$0xff]
      %v3996 = vld [vmem:[%s2845 + $0xc2] sm:$0xff]
      %v3997 = vld [vmem:[%s2845 + $0xca] sm:$0xff]
      %v3998 = vld [vmem:[%s2845 + $0xda] sm:$0xff]
      %v3999 = vld [vmem:[%s2845 + $0xe2] sm:$0xff]
      %v4000 = vld [vmem:[%s2845 + $0xf2] sm:$0xff]
      %v4001 = vld [vmem:[%s2845 + $0xfa] sm:$0xff]
      %v4002 = vld [vmem:[%s2845 + $0x10a] sm:$0xff]
      %v4003 = vld [vmem:[%s2845 + $0x112] sm:$0xff]
      %v4004 = vld [vmem:[%s2845 + $0x122] sm:$0xff]
      %v4005 = vld [vmem:[%s2845 + $0x12a] sm:$0xff]
      %v4006 = vld [vmem:[%s2845 + $0x13a] sm:$0xff]
      %v4007 = vld [vmem:[%s2845 + $0x142] sm:$0xff]
      %v4008 = vld [vmem:[%s2845 + $0x152] sm:$0xff]
      %v4009 = vld [vmem:[%s2845 + $0x15a] sm:$0xff]
      %v4010 = vld [vmem:[%s2845 + $0x16a] sm:$0xff]
      %v4011 = vld [vmem:[%s2845 + $0x172] sm:$0xff]
      %v4012 = vpack.c.bf16 %v3981, %v3980
      %v4013 = vpack.c.bf16 %v3983, %v3982
      %v4014 = vpack.c.bf16 %v3985, %v3984
      %v4015 = vpack.c.bf16 %v3987, %v3986
      %v4016 = vpack.c.bf16 %v3989, %v3988
      %v4017 = vpack.c.bf16 %v3991, %v3990
      %v4018 = vpack.c.bf16 %v3993, %v3992
      %v4019 = vpack.c.bf16 %v3995, %v3994
      %v4020 = vpack.c.bf16 %v3997, %v3996
      %v4021 = vpack.c.bf16 %v3999, %v3998
      %v4022 = vpack.c.bf16 %v4001, %v4000
      %v4023 = vpack.c.bf16 %v4003, %v4002
      %v4024 = vpack.c.bf16 %v4005, %v4004
      %v4025 = vpack.c.bf16 %v4007, %v4006
      %v4026 = vpack.c.bf16 %v4009, %v4008
      %v4027 = vpack.c.bf16 %v4011, %v4010
      %v4028 = vld [vmem:[%s4 + $0x140] sm:$0xf]
      %v4029 = vld [vmem:[%s4 + $0x144] sm:$0xf]
      %v4030 = vld [vmem:[%s4 + $0x148] sm:$0xf]
      %v4031 = vld [vmem:[%s4 + $0x14c] sm:$0xf]
      %v4032 = vld [vmem:[%s4 + $0x150] sm:$0xf]
      %v4033 = vld [vmem:[%s4 + $0x154] sm:$0xf]
      %v4034 = vld [vmem:[%s4 + $0x158] sm:$0xf]
      %v4035 = vld [vmem:[%s4 + $0x15c] sm:$0xf]
      %v4036 = vld [vmem:[%s4 + $0x160] sm:$0xf]
      %v4037 = vld [vmem:[%s4 + $0x164] sm:$0xf]
      %v4038 = vld [vmem:[%s4 + $0x168] sm:$0xf]
      %v4039 = vld [vmem:[%s4 + $0x16c] sm:$0xf]
      %v4040 = vld [vmem:[%s4 + $0x170] sm:$0xf]
      %v4041 = vld [vmem:[%s4 + $0x174] sm:$0xf]
      %v4042 = vld [vmem:[%s4 + $0x178] sm:$0xf]
      %v4043 = vld [vmem:[%s4 + $0x17c] sm:$0xf]
      %v4060 = vunpack.c.l.b16 %v4028
      %v4061 = vunpack.c.l.b16 %v4029
      %v4062 = vunpack.c.l.b16 %v4030
      %v4063 = vunpack.c.l.b16 %v4031
      %v4064 = vunpack.c.l.b16 %v4032
      %v4065 = vunpack.c.l.b16 %v4033
      %v4066 = vunpack.c.l.b16 %v4034
      %v4067 = vunpack.c.l.b16 %v4035
      %v4068 = vunpack.c.l.b16 %v4036
      %v4069 = vunpack.c.l.b16 %v4037
      %v4070 = vunpack.c.l.b16 %v4038
      %v4071 = vunpack.c.l.b16 %v4039
      %v4072 = vunpack.c.l.b16 %v4040
      %v4073 = vunpack.c.l.b16 %v4041
      %v4074 = vunpack.c.l.b16 %v4042
      %v4075 = vunpack.c.l.b16 %v4043
      %v4076 = vpack.c.b16 %v4061, %v4060
      %v4077 = vpack.c.b16 %v4063, %v4062
      %v4078 = vpack.c.b16 %v4065, %v4064
      %v4079 = vpack.c.b16 %v4067, %v4066
      %v4080 = vpack.c.b16 %v4069, %v4068
      %v4081 = vpack.c.b16 %v4071, %v4070
      %v4082 = vpack.c.b16 %v4073, %v4072
      %v4083 = vpack.c.b16 %v4075, %v4074
      %4092 = vmatpush.bf16.msra.mxu0 %v4083
      %4093 = vmatpush.bf16.msra.mxu0 %v4082
      %4094 = vmatpush.bf16.msra.mxu0 %v4081
      %4095 = vmatpush.bf16.msra.mxu0 %v4080
      %4096 = vmatpush.bf16.msra.mxu0 %v4079
      %4097 = vmatpush.bf16.msra.mxu0 %v4078
      %4098 = vmatpush.bf16.msra.mxu0 %v4077
      %4099 = vmatpush.bf16.msra.mxu0 %v4076
      %4100 = vmatmul.bf16.gmra.mxu0 %v4012
      %v4101 = vpop.f32.mrf.mxu0
      %v4102 = vadd.f32 0.0, %v4101
      %v4103 = vpop.f32.mrf.mxu0
      %v4104 = vadd.f32 0.0, %v4103
      %4105 = vmatmul.bf16.gmra.mxu0 %v4013
      %v4106 = vpop.f32.mrf.mxu0
      %v4107 = vadd.f32 0.0, %v4106
      %v4108 = vpop.f32.mrf.mxu0
      %v4109 = vadd.f32 0.0, %v4108
      %4110 = vmatmul.bf16.gmra.mxu0 %v4014
      %v4111 = vpop.f32.mrf.mxu0
      %v4112 = vadd.f32 0.0, %v4111
      %v4113 = vpop.f32.mrf.mxu0
      %v4114 = vadd.f32 0.0, %v4113
      %4115 = vmatmul.bf16.gmra.mxu0 %v4015
      %v4116 = vpop.f32.mrf.mxu0
      %v4117 = vadd.f32 0.0, %v4116
      %v4118 = vpop.f32.mrf.mxu0
      %v4119 = vadd.f32 0.0, %v4118
      %4120 = vmatmul.bf16.gmra.mxu0 %v4016
      %v4121 = vpop.f32.mrf.mxu0
      %v4122 = vadd.f32 0.0, %v4121
      %v4123 = vpop.f32.mrf.mxu0
      %v4124 = vadd.f32 0.0, %v4123
      %4125 = vmatmul.bf16.gmra.mxu0 %v4017
      %v4126 = vpop.f32.mrf.mxu0
      %v4127 = vadd.f32 0.0, %v4126
      %v4128 = vpop.f32.mrf.mxu0
      %v4129 = vadd.f32 0.0, %v4128
      %4130 = vmatmul.bf16.gmra.mxu0 %v4018
      %v4131 = vpop.f32.mrf.mxu0
      %v4132 = vadd.f32 0.0, %v4131
      %v4133 = vpop.f32.mrf.mxu0
      %v4134 = vadd.f32 0.0, %v4133
      %4135 = vmatmul.bf16.gmra.mxu0 %v4019
      %v4136 = vpop.f32.mrf.mxu0
      %v4137 = vadd.f32 0.0, %v4136
      %v4138 = vpop.f32.mrf.mxu0
      %v4139 = vadd.f32 0.0, %v4138
      %4140 = vmatmul.bf16.gmra.mxu0 %v4020
      %v4141 = vpop.f32.mrf.mxu0
      %v4142 = vadd.f32 0.0, %v4141
      %v4143 = vpop.f32.mrf.mxu0
      %v4144 = vadd.f32 0.0, %v4143
      %4145 = vmatmul.bf16.gmra.mxu0 %v4021
      %v4146 = vpop.f32.mrf.mxu0
      %v4147 = vadd.f32 0.0, %v4146
      %v4148 = vpop.f32.mrf.mxu0
      %v4149 = vadd.f32 0.0, %v4148
      %4150 = vmatmul.bf16.gmra.mxu0 %v4022
      %v4151 = vpop.f32.mrf.mxu0
      %v4152 = vadd.f32 0.0, %v4151
      %v4153 = vpop.f32.mrf.mxu0
      %v4154 = vadd.f32 0.0, %v4153
      %4155 = vmatmul.bf16.gmra.mxu0 %v4023
      %v4156 = vpop.f32.mrf.mxu0
      %v4157 = vadd.f32 0.0, %v4156
      %v4158 = vpop.f32.mrf.mxu0
      %v4159 = vadd.f32 0.0, %v4158
      %4160 = vmatmul.bf16.gmra.mxu0 %v4024
      %v4161 = vpop.f32.mrf.mxu0
      %v4162 = vadd.f32 0.0, %v4161
      %v4163 = vpop.f32.mrf.mxu0
      %v4164 = vadd.f32 0.0, %v4163
      %4165 = vmatmul.bf16.gmra.mxu0 %v4025
      %v4166 = vpop.f32.mrf.mxu0
      %v4167 = vadd.f32 0.0, %v4166
      %v4168 = vpop.f32.mrf.mxu0
      %v4169 = vadd.f32 0.0, %v4168
      %4170 = vmatmul.bf16.gmra.mxu0 %v4026
      %v4171 = vpop.f32.mrf.mxu0
      %v4172 = vadd.f32 0.0, %v4171
      %v4173 = vpop.f32.mrf.mxu0
      %v4174 = vadd.f32 0.0, %v4173
      %4175 = vmatmul.bf16.gmra.mxu0 %v4027
      %v4176 = vpop.f32.mrf.mxu0
      %v4177 = vadd.f32 0.0, %v4176
      %v4178 = vpop.f32.mrf.mxu0
      %v4179 = vadd.f32 0.0, %v4178
      %4180 = vdwg.mxu0
      %v4181 = vadd.f32 %v3948, %v4102
      %v4182 = vadd.f32 %v3949, %v4104
      %v4183 = vadd.f32 %v3950, %v4107
      %v4184 = vadd.f32 %v3951, %v4109
      %v4185 = vadd.f32 %v3952, %v4112
      %v4186 = vadd.f32 %v3953, %v4114
      %v4187 = vadd.f32 %v3954, %v4117
      %v4188 = vadd.f32 %v3955, %v4119
      %v4189 = vadd.f32 %v3956, %v4122
      %v4190 = vadd.f32 %v3957, %v4124
      %v4191 = vadd.f32 %v3958, %v4127
      %v4192 = vadd.f32 %v3959, %v4129
      %v4193 = vadd.f32 %v3960, %v4132
      %v4194 = vadd.f32 %v3961, %v4134
      %v4195 = vadd.f32 %v3962, %v4137
      %v4196 = vadd.f32 %v3963, %v4139
      %v4197 = vadd.f32 %v3964, %v4142
      %v4198 = vadd.f32 %v3965, %v4144
      %v4199 = vadd.f32 %v3966, %v4147
      %v4200 = vadd.f32 %v3967, %v4149
      %v4201 = vadd.f32 %v3968, %v4152
      %v4202 = vadd.f32 %v3969, %v4154
      %v4203 = vadd.f32 %v3970, %v4157
      %v4204 = vadd.f32 %v3971, %v4159
      %v4205 = vadd.f32 %v3972, %v4162
      %v4206 = vadd.f32 %v3973, %v4164
      %v4207 = vadd.f32 %v3974, %v4167
      %v4208 = vadd.f32 %v3975, %v4169
      %v4209 = vadd.f32 %v3976, %v4172
      %v4210 = vadd.f32 %v3977, %v4174
      %v4211 = vadd.f32 %v3978, %v4177
      %v4212 = vadd.f32 %v3979, %v4179
      %s4213 = scalar_lea.vmem [#allocation3], 48
      %v4214 = vld [vmem:[%s4213] sm:$0xff]
      %v4215 = vld [vmem:[%s4213 + $0x8] sm:$0xff]
      %v4216 = vld [vmem:[%s4213 + $0x18] sm:$0xff]
      %v4217 = vld [vmem:[%s4213 + $0x20] sm:$0xff]
      %v4218 = vld [vmem:[%s4213 + $0x30] sm:$0xff]
      %v4219 = vld [vmem:[%s4213 + $0x38] sm:$0xff]
      %v4220 = vld [vmem:[%s4213 + $0x48] sm:$0xff]
      %v4221 = vld [vmem:[%s4213 + $0x50] sm:$0xff]
      %v4222 = vld [vmem:[%s4213 + $0x60] sm:$0xff]
      %v4223 = vld [vmem:[%s4213 + $0x68] sm:$0xff]
      %v4224 = vld [vmem:[%s4213 + $0x78] sm:$0xff]
      %v4225 = vld [vmem:[%s4213 + $0x80] sm:$0xff]
      %v4226 = vld [vmem:[%s4213 + $0x90] sm:$0xff]
      %v4227 = vld [vmem:[%s4213 + $0x98] sm:$0xff]
      %v4228 = vld [vmem:[%s4213 + $0xa8] sm:$0xff]
      %v4229 = vld [vmem:[%s4213 + $0xb0] sm:$0xff]
      %v4230 = vld [vmem:[%s4213 + $0xc0] sm:$0xff]
      %v4231 = vld [vmem:[%s4213 + $0xc8] sm:$0xff]
      %v4232 = vld [vmem:[%s4213 + $0xd8] sm:$0xff]
      %v4233 = vld [vmem:[%s4213 + $0xe0] sm:$0xff]
      %v4234 = vld [vmem:[%s4213 + $0xf0] sm:$0xff]
      %v4235 = vld [vmem:[%s4213 + $0xf8] sm:$0xff]
      %v4236 = vld [vmem:[%s4213 + $0x108] sm:$0xff]
      %v4237 = vld [vmem:[%s4213 + $0x110] sm:$0xff]
      %v4238 = vld [vmem:[%s4213 + $0x120] sm:$0xff]
      %v4239 = vld [vmem:[%s4213 + $0x128] sm:$0xff]
      %v4240 = vld [vmem:[%s4213 + $0x138] sm:$0xff]
      %v4241 = vld [vmem:[%s4213 + $0x140] sm:$0xff]
      %v4242 = vld [vmem:[%s4213 + $0x150] sm:$0xff]
      %v4243 = vld [vmem:[%s4213 + $0x158] sm:$0xff]
      %v4244 = vld [vmem:[%s4213 + $0x168] sm:$0xff]
      %v4245 = vld [vmem:[%s4213 + $0x170] sm:$0xff]
      %v4246 = vpack.c.bf16 %v4215, %v4214
      %v4247 = vpack.c.bf16 %v4217, %v4216
      %v4248 = vpack.c.bf16 %v4219, %v4218
      %v4249 = vpack.c.bf16 %v4221, %v4220
      %v4250 = vpack.c.bf16 %v4223, %v4222
      %v4251 = vpack.c.bf16 %v4225, %v4224
      %v4252 = vpack.c.bf16 %v4227, %v4226
      %v4253 = vpack.c.bf16 %v4229, %v4228
      %v4254 = vpack.c.bf16 %v4231, %v4230
      %v4255 = vpack.c.bf16 %v4233, %v4232
      %v4256 = vpack.c.bf16 %v4235, %v4234
      %v4257 = vpack.c.bf16 %v4237, %v4236
      %v4258 = vpack.c.bf16 %v4239, %v4238
      %v4259 = vpack.c.bf16 %v4241, %v4240
      %v4260 = vpack.c.bf16 %v4243, %v4242
      %v4261 = vpack.c.bf16 %v4245, %v4244
      %v4262 = vld [vmem:[%s4 + $0x180] sm:$0xf]
      %v4263 = vld [vmem:[%s4 + $0x184] sm:$0xf]
      %v4264 = vld [vmem:[%s4 + $0x188] sm:$0xf]
      %v4265 = vld [vmem:[%s4 + $0x18c] sm:$0xf]
      %v4266 = vld [vmem:[%s4 + $0x190] sm:$0xf]
      %v4267 = vld [vmem:[%s4 + $0x194] sm:$0xf]
      %v4268 = vld [vmem:[%s4 + $0x198] sm:$0xf]
      %v4269 = vld [vmem:[%s4 + $0x19c] sm:$0xf]
      %v4270 = vld [vmem:[%s4 + $0x1a0] sm:$0xf]
      %v4271 = vld [vmem:[%s4 + $0x1a4] sm:$0xf]
      %v4272 = vld [vmem:[%s4 + $0x1a8] sm:$0xf]
      %v4273 = vld [vmem:[%s4 + $0x1ac] sm:$0xf]
      %v4274 = vld [vmem:[%s4 + $0x1b0] sm:$0xf]
      %v4275 = vld [vmem:[%s4 + $0x1b4] sm:$0xf]
      %v4276 = vld [vmem:[%s4 + $0x1b8] sm:$0xf]
      %v4277 = vld [vmem:[%s4 + $0x1bc] sm:$0xf]
      %v4294 = vunpack.c.l.b16 %v4262
      %v4295 = vunpack.c.l.b16 %v4263
      %v4296 = vunpack.c.l.b16 %v4264
      %v4297 = vunpack.c.l.b16 %v4265
      %v4298 = vunpack.c.l.b16 %v4266
      %v4299 = vunpack.c.l.b16 %v4267
      %v4300 = vunpack.c.l.b16 %v4268
      %v4301 = vunpack.c.l.b16 %v4269
      %v4302 = vunpack.c.l.b16 %v4270
      %v4303 = vunpack.c.l.b16 %v4271
      %v4304 = vunpack.c.l.b16 %v4272
      %v4305 = vunpack.c.l.b16 %v4273
      %v4306 = vunpack.c.l.b16 %v4274
      %v4307 = vunpack.c.l.b16 %v4275
      %v4308 = vunpack.c.l.b16 %v4276
      %v4309 = vunpack.c.l.b16 %v4277
      %v4310 = vpack.c.b16 %v4295, %v4294
      %v4311 = vpack.c.b16 %v4297, %v4296
      %v4312 = vpack.c.b16 %v4299, %v4298
      %v4313 = vpack.c.b16 %v4301, %v4300
      %v4314 = vpack.c.b16 %v4303, %v4302
      %v4315 = vpack.c.b16 %v4305, %v4304
      %v4316 = vpack.c.b16 %v4307, %v4306
      %v4317 = vpack.c.b16 %v4309, %v4308
      %4326 = vmatpush.bf16.msra.mxu0 %v4317
      %4327 = vmatpush.bf16.msra.mxu0 %v4316
      %4328 = vmatpush.bf16.msra.mxu0 %v4315
      %4329 = vmatpush.bf16.msra.mxu0 %v4314
      %4330 = vmatpush.bf16.msra.mxu0 %v4313
      %4331 = vmatpush.bf16.msra.mxu0 %v4312
      %4332 = vmatpush.bf16.msra.mxu0 %v4311
      %4333 = vmatpush.bf16.msra.mxu0 %v4310
      %4334 = vmatmul.bf16.gmra.mxu0 %v4246
      %v4335 = vpop.f32.mrf.mxu0
      %v4336 = vadd.f32 0.0, %v4335
      %v4337 = vpop.f32.mrf.mxu0
      %v4338 = vadd.f32 0.0, %v4337
      %4339 = vmatmul.bf16.gmra.mxu0 %v4247
      %v4340 = vpop.f32.mrf.mxu0
      %v4341 = vadd.f32 0.0, %v4340
      %v4342 = vpop.f32.mrf.mxu0
      %v4343 = vadd.f32 0.0, %v4342
      %4344 = vmatmul.bf16.gmra.mxu0 %v4248
      %v4345 = vpop.f32.mrf.mxu0
      %v4346 = vadd.f32 0.0, %v4345
      %v4347 = vpop.f32.mrf.mxu0
      %v4348 = vadd.f32 0.0, %v4347
      %4349 = vmatmul.bf16.gmra.mxu0 %v4249
      %v4350 = vpop.f32.mrf.mxu0
      %v4351 = vadd.f32 0.0, %v4350
      %v4352 = vpop.f32.mrf.mxu0
      %v4353 = vadd.f32 0.0, %v4352
      %4354 = vmatmul.bf16.gmra.mxu0 %v4250
      %v4355 = vpop.f32.mrf.mxu0
      %v4356 = vadd.f32 0.0, %v4355
      %v4357 = vpop.f32.mrf.mxu0
      %v4358 = vadd.f32 0.0, %v4357
      %4359 = vmatmul.bf16.gmra.mxu0 %v4251
      %v4360 = vpop.f32.mrf.mxu0
      %v4361 = vadd.f32 0.0, %v4360
      %v4362 = vpop.f32.mrf.mxu0
      %v4363 = vadd.f32 0.0, %v4362
      %4364 = vmatmul.bf16.gmra.mxu0 %v4252
      %v4365 = vpop.f32.mrf.mxu0
      %v4366 = vadd.f32 0.0, %v4365
      %v4367 = vpop.f32.mrf.mxu0
      %v4368 = vadd.f32 0.0, %v4367
      %4369 = vmatmul.bf16.gmra.mxu0 %v4253
      %v4370 = vpop.f32.mrf.mxu0
      %v4371 = vadd.f32 0.0, %v4370
      %v4372 = vpop.f32.mrf.mxu0
      %v4373 = vadd.f32 0.0, %v4372
      %4374 = vmatmul.bf16.gmra.mxu0 %v4254
      %v4375 = vpop.f32.mrf.mxu0
      %v4376 = vadd.f32 0.0, %v4375
      %v4377 = vpop.f32.mrf.mxu0
      %v4378 = vadd.f32 0.0, %v4377
      %4379 = vmatmul.bf16.gmra.mxu0 %v4255
      %v4380 = vpop.f32.mrf.mxu0
      %v4381 = vadd.f32 0.0, %v4380
      %v4382 = vpop.f32.mrf.mxu0
      %v4383 = vadd.f32 0.0, %v4382
      %4384 = vmatmul.bf16.gmra.mxu0 %v4256
      %v4385 = vpop.f32.mrf.mxu0
      %v4386 = vadd.f32 0.0, %v4385
      %v4387 = vpop.f32.mrf.mxu0
      %v4388 = vadd.f32 0.0, %v4387
      %4389 = vmatmul.bf16.gmra.mxu0 %v4257
      %v4390 = vpop.f32.mrf.mxu0
      %v4391 = vadd.f32 0.0, %v4390
      %v4392 = vpop.f32.mrf.mxu0
      %v4393 = vadd.f32 0.0, %v4392
      %4394 = vmatmul.bf16.gmra.mxu0 %v4258
      %v4395 = vpop.f32.mrf.mxu0
      %v4396 = vadd.f32 0.0, %v4395
      %v4397 = vpop.f32.mrf.mxu0
      %v4398 = vadd.f32 0.0, %v4397
      %4399 = vmatmul.bf16.gmra.mxu0 %v4259
      %v4400 = vpop.f32.mrf.mxu0
      %v4401 = vadd.f32 0.0, %v4400
      %v4402 = vpop.f32.mrf.mxu0
      %v4403 = vadd.f32 0.0, %v4402
      %4404 = vmatmul.bf16.gmra.mxu0 %v4260
      %v4405 = vpop.f32.mrf.mxu0
      %v4406 = vadd.f32 0.0, %v4405
      %v4407 = vpop.f32.mrf.mxu0
      %v4408 = vadd.f32 0.0, %v4407
      %4409 = vmatmul.bf16.gmra.mxu0 %v4261
      %v4410 = vpop.f32.mrf.mxu0
      %v4411 = vadd.f32 0.0, %v4410
      %v4412 = vpop.f32.mrf.mxu0
      %v4413 = vadd.f32 0.0, %v4412
      %4414 = vdwg.mxu0
      %v4415 = vadd.f32 %v4181, %v4336
      %v4416 = vadd.f32 %v4182, %v4338
      %v4417 = vadd.f32 %v4183, %v4341
      %v4418 = vadd.f32 %v4184, %v4343
      %v4419 = vadd.f32 %v4185, %v4346
      %v4420 = vadd.f32 %v4186, %v4348
      %v4421 = vadd.f32 %v4187, %v4351
      %v4422 = vadd.f32 %v4188, %v4353
      %v4423 = vadd.f32 %v4189, %v4356
      %v4424 = vadd.f32 %v4190, %v4358
      %v4425 = vadd.f32 %v4191, %v4361
      %v4426 = vadd.f32 %v4192, %v4363
      %v4427 = vadd.f32 %v4193, %v4366
      %v4428 = vadd.f32 %v4194, %v4368
      %v4429 = vadd.f32 %v4195, %v4371
      %v4430 = vadd.f32 %v4196, %v4373
      %v4431 = vadd.f32 %v4197, %v4376
      %v4432 = vadd.f32 %v4198, %v4378
      %v4433 = vadd.f32 %v4199, %v4381
      %v4434 = vadd.f32 %v4200, %v4383
      %v4435 = vadd.f32 %v4201, %v4386
      %v4436 = vadd.f32 %v4202, %v4388
      %v4437 = vadd.f32 %v4203, %v4391
      %v4438 = vadd.f32 %v4204, %v4393
      %v4439 = vadd.f32 %v4205, %v4396
      %v4440 = vadd.f32 %v4206, %v4398
      %v4441 = vadd.f32 %v4207, %v4401
      %v4442 = vadd.f32 %v4208, %v4403
      %v4443 = vadd.f32 %v4209, %v4406
      %v4444 = vadd.f32 %v4210, %v4408
      %v4445 = vadd.f32 %v4211, %v4411
      %v4446 = vadd.f32 %v4212, %v4413
      %v4447 = vld [vmem:[%s4213 + $0x1] sm:$0xff]
      %v4448 = vld [vmem:[%s4213 + $0x9] sm:$0xff]
      %v4449 = vld [vmem:[%s4213 + $0x19] sm:$0xff]
      %v4450 = vld [vmem:[%s4213 + $0x21] sm:$0xff]
      %v4451 = vld [vmem:[%s4213 + $0x31] sm:$0xff]
      %v4452 = vld [vmem:[%s4213 + $0x39] sm:$0xff]
      %v4453 = vld [vmem:[%s4213 + $0x49] sm:$0xff]
      %v4454 = vld [vmem:[%s4213 + $0x51] sm:$0xff]
      %v4455 = vld [vmem:[%s4213 + $0x61] sm:$0xff]
      %v4456 = vld [vmem:[%s4213 + $0x69] sm:$0xff]
      %v4457 = vld [vmem:[%s4213 + $0x79] sm:$0xff]
      %v4458 = vld [vmem:[%s4213 + $0x81] sm:$0xff]
      %v4459 = vld [vmem:[%s4213 + $0x91] sm:$0xff]
      %v4460 = vld [vmem:[%s4213 + $0x99] sm:$0xff]
      %v4461 = vld [vmem:[%s4213 + $0xa9] sm:$0xff]
      %v4462 = vld [vmem:[%s4213 + $0xb1] sm:$0xff]
      %v4463 = vld [vmem:[%s4213 + $0xc1] sm:$0xff]
      %v4464 = vld [vmem:[%s4213 + $0xc9] sm:$0xff]
      %v4465 = vld [vmem:[%s4213 + $0xd9] sm:$0xff]
      %v4466 = vld [vmem:[%s4213 + $0xe1] sm:$0xff]
      %v4467 = vld [vmem:[%s4213 + $0xf1] sm:$0xff]
      %v4468 = vld [vmem:[%s4213 + $0xf9] sm:$0xff]
      %v4469 = vld [vmem:[%s4213 + $0x109] sm:$0xff]
      %v4470 = vld [vmem:[%s4213 + $0x111] sm:$0xff]
      %v4471 = vld [vmem:[%s4213 + $0x121] sm:$0xff]
      %v4472 = vld [vmem:[%s4213 + $0x129] sm:$0xff]
      %v4473 = vld [vmem:[%s4213 + $0x139] sm:$0xff]
      %v4474 = vld [vmem:[%s4213 + $0x141] sm:$0xff]
      %v4475 = vld [vmem:[%s4213 + $0x151] sm:$0xff]
      %v4476 = vld [vmem:[%s4213 + $0x159] sm:$0xff]
      %v4477 = vld [vmem:[%s4213 + $0x169] sm:$0xff]
      %v4478 = vld [vmem:[%s4213 + $0x171] sm:$0xff]
      %v4479 = vpack.c.bf16 %v4448, %v4447
      %v4480 = vpack.c.bf16 %v4450, %v4449
      %v4481 = vpack.c.bf16 %v4452, %v4451
      %v4482 = vpack.c.bf16 %v4454, %v4453
      %v4483 = vpack.c.bf16 %v4456, %v4455
      %v4484 = vpack.c.bf16 %v4458, %v4457
      %v4485 = vpack.c.bf16 %v4460, %v4459
      %v4486 = vpack.c.bf16 %v4462, %v4461
      %v4487 = vpack.c.bf16 %v4464, %v4463
      %v4488 = vpack.c.bf16 %v4466, %v4465
      %v4489 = vpack.c.bf16 %v4468, %v4467
      %v4490 = vpack.c.bf16 %v4470, %v4469
      %v4491 = vpack.c.bf16 %v4472, %v4471
      %v4492 = vpack.c.bf16 %v4474, %v4473
      %v4493 = vpack.c.bf16 %v4476, %v4475
      %v4494 = vpack.c.bf16 %v4478, %v4477
      %v4495 = vld [vmem:[%s4 + $0x1c0] sm:$0xf]
      %v4496 = vld [vmem:[%s4 + $0x1c4] sm:$0xf]
      %v4497 = vld [vmem:[%s4 + $0x1c8] sm:$0xf]
      %v4498 = vld [vmem:[%s4 + $0x1cc] sm:$0xf]
      %v4499 = vld [vmem:[%s4 + $0x1d0] sm:$0xf]
      %v4500 = vld [vmem:[%s4 + $0x1d4] sm:$0xf]
      %v4501 = vld [vmem:[%s4 + $0x1d8] sm:$0xf]
      %v4502 = vld [vmem:[%s4 + $0x1dc] sm:$0xf]
      %v4503 = vld [vmem:[%s4 + $0x1e0] sm:$0xf]
      %v4504 = vld [vmem:[%s4 + $0x1e4] sm:$0xf]
      %v4505 = vld [vmem:[%s4 + $0x1e8] sm:$0xf]
      %v4506 = vld [vmem:[%s4 + $0x1ec] sm:$0xf]
      %v4507 = vld [vmem:[%s4 + $0x1f0] sm:$0xf]
      %v4508 = vld [vmem:[%s4 + $0x1f4] sm:$0xf]
      %v4509 = vld [vmem:[%s4 + $0x1f8] sm:$0xf]
      %v4510 = vld [vmem:[%s4 + $0x1fc] sm:$0xf]
      %v4527 = vunpack.c.l.b16 %v4495
      %v4528 = vunpack.c.l.b16 %v4496
      %v4529 = vunpack.c.l.b16 %v4497
      %v4530 = vunpack.c.l.b16 %v4498
      %v4531 = vunpack.c.l.b16 %v4499
      %v4532 = vunpack.c.l.b16 %v4500
      %v4533 = vunpack.c.l.b16 %v4501
      %v4534 = vunpack.c.l.b16 %v4502
      %v4535 = vunpack.c.l.b16 %v4503
      %v4536 = vunpack.c.l.b16 %v4504
      %v4537 = vunpack.c.l.b16 %v4505
      %v4538 = vunpack.c.l.b16 %v4506
      %v4539 = vunpack.c.l.b16 %v4507
      %v4540 = vunpack.c.l.b16 %v4508
      %v4541 = vunpack.c.l.b16 %v4509
      %v4542 = vunpack.c.l.b16 %v4510
      %v4543 = vpack.c.b16 %v4528, %v4527
      %v4544 = vpack.c.b16 %v4530, %v4529
      %v4545 = vpack.c.b16 %v4532, %v4531
      %v4546 = vpack.c.b16 %v4534, %v4533
      %v4547 = vpack.c.b16 %v4536, %v4535
      %v4548 = vpack.c.b16 %v4538, %v4537
      %v4549 = vpack.c.b16 %v4540, %v4539
      %v4550 = vpack.c.b16 %v4542, %v4541
      %4559 = vmatpush.bf16.msra.mxu0 %v4550
      %4560 = vmatpush.bf16.msra.mxu0 %v4549
      %4561 = vmatpush.bf16.msra.mxu0 %v4548
      %4562 = vmatpush.bf16.msra.mxu0 %v4547
      %4563 = vmatpush.bf16.msra.mxu0 %v4546
      %4564 = vmatpush.bf16.msra.mxu0 %v4545
      %4565 = vmatpush.bf16.msra.mxu0 %v4544
      %4566 = vmatpush.bf16.msra.mxu0 %v4543
      %4567 = vmatmul.bf16.gmra.mxu0 %v4479
      %v4568 = vpop.f32.mrf.mxu0
      %v4569 = vadd.f32 0.0, %v4568
      %v4570 = vpop.f32.mrf.mxu0
      %v4571 = vadd.f32 0.0, %v4570
      %4572 = vmatmul.bf16.gmra.mxu0 %v4480
      %v4573 = vpop.f32.mrf.mxu0
      %v4574 = vadd.f32 0.0, %v4573
      %v4575 = vpop.f32.mrf.mxu0
      %v4576 = vadd.f32 0.0, %v4575
      %4577 = vmatmul.bf16.gmra.mxu0 %v4481
      %v4578 = vpop.f32.mrf.mxu0
      %v4579 = vadd.f32 0.0, %v4578
      %v4580 = vpop.f32.mrf.mxu0
      %v4581 = vadd.f32 0.0, %v4580
      %4582 = vmatmul.bf16.gmra.mxu0 %v4482
      %v4583 = vpop.f32.mrf.mxu0
      %v4584 = vadd.f32 0.0, %v4583
      %v4585 = vpop.f32.mrf.mxu0
      %v4586 = vadd.f32 0.0, %v4585
      %4587 = vmatmul.bf16.gmra.mxu0 %v4483
      %v4588 = vpop.f32.mrf.mxu0
      %v4589 = vadd.f32 0.0, %v4588
      %v4590 = vpop.f32.mrf.mxu0
      %v4591 = vadd.f32 0.0, %v4590
      %4592 = vmatmul.bf16.gmra.mxu0 %v4484
      %v4593 = vpop.f32.mrf.mxu0
      %v4594 = vadd.f32 0.0, %v4593
      %v4595 = vpop.f32.mrf.mxu0
      %v4596 = vadd.f32 0.0, %v4595
      %4597 = vmatmul.bf16.gmra.mxu0 %v4485
      %v4598 = vpop.f32.mrf.mxu0
      %v4599 = vadd.f32 0.0, %v4598
      %v4600 = vpop.f32.mrf.mxu0
      %v4601 = vadd.f32 0.0, %v4600
      %4602 = vmatmul.bf16.gmra.mxu0 %v4486
      %v4603 = vpop.f32.mrf.mxu0
      %v4604 = vadd.f32 0.0, %v4603
      %v4605 = vpop.f32.mrf.mxu0
      %v4606 = vadd.f32 0.0, %v4605
      %4607 = vmatmul.bf16.gmra.mxu0 %v4487
      %v4608 = vpop.f32.mrf.mxu0
      %v4609 = vadd.f32 0.0, %v4608
      %v4610 = vpop.f32.mrf.mxu0
      %v4611 = vadd.f32 0.0, %v4610
      %4612 = vmatmul.bf16.gmra.mxu0 %v4488
      %v4613 = vpop.f32.mrf.mxu0
      %v4614 = vadd.f32 0.0, %v4613
      %v4615 = vpop.f32.mrf.mxu0
      %v4616 = vadd.f32 0.0, %v4615
      %4617 = vmatmul.bf16.gmra.mxu0 %v4489
      %v4618 = vpop.f32.mrf.mxu0
      %v4619 = vadd.f32 0.0, %v4618
      %v4620 = vpop.f32.mrf.mxu0
      %v4621 = vadd.f32 0.0, %v4620
      %4622 = vmatmul.bf16.gmra.mxu0 %v4490
      %v4623 = vpop.f32.mrf.mxu0
      %v4624 = vadd.f32 0.0, %v4623
      %v4625 = vpop.f32.mrf.mxu0
      %v4626 = vadd.f32 0.0, %v4625
      %4627 = vmatmul.bf16.gmra.mxu0 %v4491
      %v4628 = vpop.f32.mrf.mxu0
      %v4629 = vadd.f32 0.0, %v4628
      %v4630 = vpop.f32.mrf.mxu0
      %v4631 = vadd.f32 0.0, %v4630
      %4632 = vmatmul.bf16.gmra.mxu0 %v4492
      %v4633 = vpop.f32.mrf.mxu0
      %v4634 = vadd.f32 0.0, %v4633
      %v4635 = vpop.f32.mrf.mxu0
      %v4636 = vadd.f32 0.0, %v4635
      %4637 = vmatmul.bf16.gmra.mxu0 %v4493
      %v4638 = vpop.f32.mrf.mxu0
      %v4639 = vadd.f32 0.0, %v4638
      %v4640 = vpop.f32.mrf.mxu0
      %v4641 = vadd.f32 0.0, %v4640
      %4642 = vmatmul.bf16.gmra.mxu0 %v4494
      %v4643 = vpop.f32.mrf.mxu0
      %v4644 = vadd.f32 0.0, %v4643
      %v4645 = vpop.f32.mrf.mxu0
      %v4646 = vadd.f32 0.0, %v4645
      %4647 = vdwg.mxu0
      %v4648 = vadd.f32 %v4415, %v4569
      %v4649 = vadd.f32 %v4416, %v4571
      %v4650 = vadd.f32 %v4417, %v4574
      %v4651 = vadd.f32 %v4418, %v4576
      %v4652 = vadd.f32 %v4419, %v4579
      %v4653 = vadd.f32 %v4420, %v4581
      %v4654 = vadd.f32 %v4421, %v4584
      %v4655 = vadd.f32 %v4422, %v4586
      %v4656 = vadd.f32 %v4423, %v4589
      %v4657 = vadd.f32 %v4424, %v4591
      %v4658 = vadd.f32 %v4425, %v4594
      %v4659 = vadd.f32 %v4426, %v4596
      %v4660 = vadd.f32 %v4427, %v4599
      %v4661 = vadd.f32 %v4428, %v4601
      %v4662 = vadd.f32 %v4429, %v4604
      %v4663 = vadd.f32 %v4430, %v4606
      %v4664 = vadd.f32 %v4431, %v4609
      %v4665 = vadd.f32 %v4432, %v4611
      %v4666 = vadd.f32 %v4433, %v4614
      %v4667 = vadd.f32 %v4434, %v4616
      %v4668 = vadd.f32 %v4435, %v4619
      %v4669 = vadd.f32 %v4436, %v4621
      %v4670 = vadd.f32 %v4437, %v4624
      %v4671 = vadd.f32 %v4438, %v4626
      %v4672 = vadd.f32 %v4439, %v4629
      %v4673 = vadd.f32 %v4440, %v4631
      %v4674 = vadd.f32 %v4441, %v4634
      %v4675 = vadd.f32 %v4442, %v4636
      %v4676 = vadd.f32 %v4443, %v4639
      %v4677 = vadd.f32 %v4444, %v4641
      %v4678 = vadd.f32 %v4445, %v4644
      %v4679 = vadd.f32 %v4446, %v4646
      %v4680 = vld [vmem:[%s4213 + $0x2] sm:$0xff]
      %v4681 = vld [vmem:[%s4213 + $0xa] sm:$0xff]
      %v4682 = vld [vmem:[%s4213 + $0x1a] sm:$0xff]
      %v4683 = vld [vmem:[%s4213 + $0x22] sm:$0xff]
      %v4684 = vld [vmem:[%s4213 + $0x32] sm:$0xff]
      %v4685 = vld [vmem:[%s4213 + $0x3a] sm:$0xff]
      %v4686 = vld [vmem:[%s4213 + $0x4a] sm:$0xff]
      %v4687 = vld [vmem:[%s4213 + $0x52] sm:$0xff]
      %v4688 = vld [vmem:[%s4213 + $0x62] sm:$0xff]
      %v4689 = vld [vmem:[%s4213 + $0x6a] sm:$0xff]
      %v4690 = vld [vmem:[%s4213 + $0x7a] sm:$0xff]
      %v4691 = vld [vmem:[%s4213 + $0x82] sm:$0xff]
      %v4692 = vld [vmem:[%s4213 + $0x92] sm:$0xff]
      %v4693 = vld [vmem:[%s4213 + $0x9a] sm:$0xff]
      %v4694 = vld [vmem:[%s4213 + $0xaa] sm:$0xff]
      %v4695 = vld [vmem:[%s4213 + $0xb2] sm:$0xff]
      %v4696 = vld [vmem:[%s4213 + $0xc2] sm:$0xff]
      %v4697 = vld [vmem:[%s4213 + $0xca] sm:$0xff]
      %v4698 = vld [vmem:[%s4213 + $0xda] sm:$0xff]
      %v4699 = vld [vmem:[%s4213 + $0xe2] sm:$0xff]
      %v4700 = vld [vmem:[%s4213 + $0xf2] sm:$0xff]
      %v4701 = vld [vmem:[%s4213 + $0xfa] sm:$0xff]
      %v4702 = vld [vmem:[%s4213 + $0x10a] sm:$0xff]
      %v4703 = vld [vmem:[%s4213 + $0x112] sm:$0xff]
      %v4704 = vld [vmem:[%s4213 + $0x122] sm:$0xff]
      %v4705 = vld [vmem:[%s4213 + $0x12a] sm:$0xff]
      %v4706 = vld [vmem:[%s4213 + $0x13a] sm:$0xff]
      %v4707 = vld [vmem:[%s4213 + $0x142] sm:$0xff]
      %v4708 = vld [vmem:[%s4213 + $0x152] sm:$0xff]
      %v4709 = vld [vmem:[%s4213 + $0x15a] sm:$0xff]
      %v4710 = vld [vmem:[%s4213 + $0x16a] sm:$0xff]
      %v4711 = vld [vmem:[%s4213 + $0x172] sm:$0xff]
      %v4712 = vpack.c.bf16 %v4681, %v4680
      %v4713 = vpack.c.bf16 %v4683, %v4682
      %v4714 = vpack.c.bf16 %v4685, %v4684
      %v4715 = vpack.c.bf16 %v4687, %v4686
      %v4716 = vpack.c.bf16 %v4689, %v4688
      %v4717 = vpack.c.bf16 %v4691, %v4690
      %v4718 = vpack.c.bf16 %v4693, %v4692
      %v4719 = vpack.c.bf16 %v4695, %v4694
      %v4720 = vpack.c.bf16 %v4697, %v4696
      %v4721 = vpack.c.bf16 %v4699, %v4698
      %v4722 = vpack.c.bf16 %v4701, %v4700
      %v4723 = vpack.c.bf16 %v4703, %v4702
      %v4724 = vpack.c.bf16 %v4705, %v4704
      %v4725 = vpack.c.bf16 %v4707, %v4706
      %v4726 = vpack.c.bf16 %v4709, %v4708
      %v4727 = vpack.c.bf16 %v4711, %v4710
      %v4728 = vld [vmem:[%s4 + $0x200] sm:$0xf]
      %v4729 = vld [vmem:[%s4 + $0x204] sm:$0xf]
      %v4730 = vld [vmem:[%s4 + $0x208] sm:$0xf]
      %v4731 = vld [vmem:[%s4 + $0x20c] sm:$0xf]
      %v4732 = vld [vmem:[%s4 + $0x210] sm:$0xf]
      %v4733 = vld [vmem:[%s4 + $0x214] sm:$0xf]
      %v4734 = vld [vmem:[%s4 + $0x218] sm:$0xf]
      %v4735 = vld [vmem:[%s4 + $0x21c] sm:$0xf]
      %v4736 = vld [vmem:[%s4 + $0x220] sm:$0xf]
      %v4737 = vld [vmem:[%s4 + $0x224] sm:$0xf]
      %v4738 = vld [vmem:[%s4 + $0x228] sm:$0xf]
      %v4739 = vld [vmem:[%s4 + $0x22c] sm:$0xf]
      %v4740 = vld [vmem:[%s4 + $0x230] sm:$0xf]
      %v4741 = vld [vmem:[%s4 + $0x234] sm:$0xf]
      %v4742 = vld [vmem:[%s4 + $0x238] sm:$0xf]
      %v4743 = vld [vmem:[%s4 + $0x23c] sm:$0xf]
      %v4760 = vunpack.c.l.b16 %v4728
      %v4761 = vunpack.c.l.b16 %v4729
      %v4762 = vunpack.c.l.b16 %v4730
      %v4763 = vunpack.c.l.b16 %v4731
      %v4764 = vunpack.c.l.b16 %v4732
      %v4765 = vunpack.c.l.b16 %v4733
      %v4766 = vunpack.c.l.b16 %v4734
      %v4767 = vunpack.c.l.b16 %v4735
      %v4768 = vunpack.c.l.b16 %v4736
      %v4769 = vunpack.c.l.b16 %v4737
      %v4770 = vunpack.c.l.b16 %v4738
      %v4771 = vunpack.c.l.b16 %v4739
      %v4772 = vunpack.c.l.b16 %v4740
      %v4773 = vunpack.c.l.b16 %v4741
      %v4774 = vunpack.c.l.b16 %v4742
      %v4775 = vunpack.c.l.b16 %v4743
      %v4776 = vpack.c.b16 %v4761, %v4760
      %v4777 = vpack.c.b16 %v4763, %v4762
      %v4778 = vpack.c.b16 %v4765, %v4764
      %v4779 = vpack.c.b16 %v4767, %v4766
      %v4780 = vpack.c.b16 %v4769, %v4768
      %v4781 = vpack.c.b16 %v4771, %v4770
      %v4782 = vpack.c.b16 %v4773, %v4772
      %v4783 = vpack.c.b16 %v4775, %v4774
      %4792 = vmatpush.bf16.msra.mxu0 %v4783
      %4793 = vmatpush.bf16.msra.mxu0 %v4782
      %4794 = vmatpush.bf16.msra.mxu0 %v4781
      %4795 = vmatpush.bf16.msra.mxu0 %v4780
      %4796 = vmatpush.bf16.msra.mxu0 %v4779
      %4797 = vmatpush.bf16.msra.mxu0 %v4778
      %4798 = vmatpush.bf16.msra.mxu0 %v4777
      %4799 = vmatpush.bf16.msra.mxu0 %v4776
      %4800 = vmatmul.bf16.gmra.mxu0 %v4712
      %v4801 = vpop.f32.mrf.mxu0
      %v4802 = vadd.f32 0.0, %v4801
      %v4803 = vpop.f32.mrf.mxu0
      %v4804 = vadd.f32 0.0, %v4803
      %4805 = vmatmul.bf16.gmra.mxu0 %v4713
      %v4806 = vpop.f32.mrf.mxu0
      %v4807 = vadd.f32 0.0, %v4806
      %v4808 = vpop.f32.mrf.mxu0
      %v4809 = vadd.f32 0.0, %v4808
      %4810 = vmatmul.bf16.gmra.mxu0 %v4714
      %v4811 = vpop.f32.mrf.mxu0
      %v4812 = vadd.f32 0.0, %v4811
      %v4813 = vpop.f32.mrf.mxu0
      %v4814 = vadd.f32 0.0, %v4813
      %4815 = vmatmul.bf16.gmra.mxu0 %v4715
      %v4816 = vpop.f32.mrf.mxu0
      %v4817 = vadd.f32 0.0, %v4816
      %v4818 = vpop.f32.mrf.mxu0
      %v4819 = vadd.f32 0.0, %v4818
      %4820 = vmatmul.bf16.gmra.mxu0 %v4716
      %v4821 = vpop.f32.mrf.mxu0
      %v4822 = vadd.f32 0.0, %v4821
      %v4823 = vpop.f32.mrf.mxu0
      %v4824 = vadd.f32 0.0, %v4823
      %4825 = vmatmul.bf16.gmra.mxu0 %v4717
      %v4826 = vpop.f32.mrf.mxu0
      %v4827 = vadd.f32 0.0, %v4826
      %v4828 = vpop.f32.mrf.mxu0
      %v4829 = vadd.f32 0.0, %v4828
      %4830 = vmatmul.bf16.gmra.mxu0 %v4718
      %v4831 = vpop.f32.mrf.mxu0
      %v4832 = vadd.f32 0.0, %v4831
      %v4833 = vpop.f32.mrf.mxu0
      %v4834 = vadd.f32 0.0, %v4833
      %4835 = vmatmul.bf16.gmra.mxu0 %v4719
      %v4836 = vpop.f32.mrf.mxu0
      %v4837 = vadd.f32 0.0, %v4836
      %v4838 = vpop.f32.mrf.mxu0
      %v4839 = vadd.f32 0.0, %v4838
      %4840 = vmatmul.bf16.gmra.mxu0 %v4720
      %v4841 = vpop.f32.mrf.mxu0
      %v4842 = vadd.f32 0.0, %v4841
      %v4843 = vpop.f32.mrf.mxu0
      %v4844 = vadd.f32 0.0, %v4843
      %4845 = vmatmul.bf16.gmra.mxu0 %v4721
      %v4846 = vpop.f32.mrf.mxu0
      %v4847 = vadd.f32 0.0, %v4846
      %v4848 = vpop.f32.mrf.mxu0
      %v4849 = vadd.f32 0.0, %v4848
      %4850 = vmatmul.bf16.gmra.mxu0 %v4722
      %v4851 = vpop.f32.mrf.mxu0
      %v4852 = vadd.f32 0.0, %v4851
      %v4853 = vpop.f32.mrf.mxu0
      %v4854 = vadd.f32 0.0, %v4853
      %4855 = vmatmul.bf16.gmra.mxu0 %v4723
      %v4856 = vpop.f32.mrf.mxu0
      %v4857 = vadd.f32 0.0, %v4856
      %v4858 = vpop.f32.mrf.mxu0
      %v4859 = vadd.f32 0.0, %v4858
      %4860 = vmatmul.bf16.gmra.mxu0 %v4724
      %v4861 = vpop.f32.mrf.mxu0
      %v4862 = vadd.f32 0.0, %v4861
      %v4863 = vpop.f32.mrf.mxu0
      %v4864 = vadd.f32 0.0, %v4863
      %4865 = vmatmul.bf16.gmra.mxu0 %v4725
      %v4866 = vpop.f32.mrf.mxu0
      %v4867 = vadd.f32 0.0, %v4866
      %v4868 = vpop.f32.mrf.mxu0
      %v4869 = vadd.f32 0.0, %v4868
      %4870 = vmatmul.bf16.gmra.mxu0 %v4726
      %v4871 = vpop.f32.mrf.mxu0
      %v4872 = vadd.f32 0.0, %v4871
      %v4873 = vpop.f32.mrf.mxu0
      %v4874 = vadd.f32 0.0, %v4873
      %4875 = vmatmul.bf16.gmra.mxu0 %v4727
      %v4876 = vpop.f32.mrf.mxu0
      %v4877 = vadd.f32 0.0, %v4876
      %v4878 = vpop.f32.mrf.mxu0
      %v4879 = vadd.f32 0.0, %v4878
      %4880 = vdwg.mxu0
      %v4881 = vadd.f32 %v4648, %v4802
      %v4882 = vadd.f32 %v4649, %v4804
      %v4883 = vadd.f32 %v4650, %v4807
      %v4884 = vadd.f32 %v4651, %v4809
      %v4885 = vadd.f32 %v4652, %v4812
      %v4886 = vadd.f32 %v4653, %v4814
      %v4887 = vadd.f32 %v4654, %v4817
      %v4888 = vadd.f32 %v4655, %v4819
      %v4889 = vadd.f32 %v4656, %v4822
      %v4890 = vadd.f32 %v4657, %v4824
      %v4891 = vadd.f32 %v4658, %v4827
      %v4892 = vadd.f32 %v4659, %v4829
      %v4893 = vadd.f32 %v4660, %v4832
      %v4894 = vadd.f32 %v4661, %v4834
      %v4895 = vadd.f32 %v4662, %v4837
      %v4896 = vadd.f32 %v4663, %v4839
      %v4897 = vadd.f32 %v4664, %v4842
      %v4898 = vadd.f32 %v4665, %v4844
      %v4899 = vadd.f32 %v4666, %v4847
      %v4900 = vadd.f32 %v4667, %v4849
      %v4901 = vadd.f32 %v4668, %v4852
      %v4902 = vadd.f32 %v4669, %v4854
      %v4903 = vadd.f32 %v4670, %v4857
      %v4904 = vadd.f32 %v4671, %v4859
      %v4905 = vadd.f32 %v4672, %v4862
      %v4906 = vadd.f32 %v4673, %v4864
      %v4907 = vadd.f32 %v4674, %v4867
      %v4908 = vadd.f32 %v4675, %v4869
      %v4909 = vadd.f32 %v4676, %v4872
      %v4910 = vadd.f32 %v4677, %v4874
      %v4911 = vadd.f32 %v4678, %v4877
      %v4912 = vadd.f32 %v4679, %v4879
      %v4914 = vperm.slane %v2878, 0
      %v4916 = vadd.f32 %v4881, %v4914
      %v4917 = vadd.f32 %v4882, %v4914
      %v4918 = vadd.f32 %v4883, %v4914
      %v4919 = vadd.f32 %v4884, %v4914
      %v4920 = vadd.f32 %v4885, %v4914
      %v4921 = vadd.f32 %v4886, %v4914
      %v4922 = vadd.f32 %v4887, %v4914
      %v4923 = vadd.f32 %v4888, %v4914
      %v4924 = vadd.f32 %v4889, %v4914
      %v4925 = vadd.f32 %v4890, %v4914
      %v4926 = vadd.f32 %v4891, %v4914
      %v4927 = vadd.f32 %v4892, %v4914
      %v4928 = vadd.f32 %v4893, %v4914
      %v4929 = vadd.f32 %v4894, %v4914
      %v4930 = vadd.f32 %v4895, %v4914
      %v4931 = vadd.f32 %v4896, %v4914
      %v4932 = vadd.f32 %v4897, %v4914
      %v4933 = vadd.f32 %v4898, %v4914
      %v4934 = vadd.f32 %v4899, %v4914
      %v4935 = vadd.f32 %v4900, %v4914
      %v4936 = vadd.f32 %v4901, %v4914
      %v4937 = vadd.f32 %v4902, %v4914
      %v4938 = vadd.f32 %v4903, %v4914
      %v4939 = vadd.f32 %v4904, %v4914
      %v4940 = vadd.f32 %v4905, %v4914
      %v4941 = vadd.f32 %v4906, %v4914
      %v4942 = vadd.f32 %v4907, %v4914
      %v4943 = vadd.f32 %v4908, %v4914
      %v4944 = vadd.f32 %v4909, %v4914
      %v4945 = vadd.f32 %v4910, %v4914
      %v4946 = vadd.f32 %v4911, %v4914
      %v4947 = vadd.f32 %v4912, %v4914
      %v4948 = vmax.f32 %v4916, 0.0
      %v4949 = vmax.f32 %v4917, 0.0
      %v4950 = vmax.f32 %v4918, 0.0
      %v4951 = vmax.f32 %v4919, 0.0
      %v4952 = vmax.f32 %v4920, 0.0
      %v4953 = vmax.f32 %v4921, 0.0
      %v4954 = vmax.f32 %v4922, 0.0
      %v4955 = vmax.f32 %v4923, 0.0
      %v4956 = vmax.f32 %v4924, 0.0
      %v4957 = vmax.f32 %v4925, 0.0
      %v4958 = vmax.f32 %v4926, 0.0
      %v4959 = vmax.f32 %v4927, 0.0
      %v4960 = vmax.f32 %v4928, 0.0
      %v4961 = vmax.f32 %v4929, 0.0
      %v4962 = vmax.f32 %v4930, 0.0
      %v4963 = vmax.f32 %v4931, 0.0
      %v4964 = vmax.f32 %v4932, 0.0
      %v4965 = vmax.f32 %v4933, 0.0
      %v4966 = vmax.f32 %v4934, 0.0
      %v4967 = vmax.f32 %v4935, 0.0
      %v4968 = vmax.f32 %v4936, 0.0
      %v4969 = vmax.f32 %v4937, 0.0
      %v4970 = vmax.f32 %v4938, 0.0
      %v4971 = vmax.f32 %v4939, 0.0
      %v4972 = vmax.f32 %v4940, 0.0
      %v4973 = vmax.f32 %v4941, 0.0
      %v4974 = vmax.f32 %v4942, 0.0
      %v4975 = vmax.f32 %v4943, 0.0
      %v4976 = vmax.f32 %v4944, 0.0
      %v4977 = vmax.f32 %v4945, 0.0
      %v4978 = vmax.f32 %v4946, 0.0
      %v4979 = vmax.f32 %v4947, 0.0
      %4980 = vst [vmem:[%s271] sm:$0xff] %v4948
      %4981 = vst [vmem:[%s271 + $0x8] sm:$0xff] %v4949
      %4982 = vst [vmem:[%s271 + $0x10] sm:$0xff] %v4950
      %4983 = vst [vmem:[%s271 + $0x18] sm:$0xff] %v4951
      %4984 = vst [vmem:[%s271 + $0x20] sm:$0xff] %v4952
      %4985 = vst [vmem:[%s271 + $0x28] sm:$0xff] %v4953
      %4986 = vst [vmem:[%s271 + $0x30] sm:$0xff] %v4954
      %4987 = vst [vmem:[%s271 + $0x38] sm:$0xff] %v4955
      %4988 = vst [vmem:[%s271 + $0x40] sm:$0xff] %v4956
      %4989 = vst [vmem:[%s271 + $0x48] sm:$0xff] %v4957
      %4990 = vst [vmem:[%s271 + $0x50] sm:$0xff] %v4958
      %4991 = vst [vmem:[%s271 + $0x58] sm:$0xff] %v4959
      %4992 = vst [vmem:[%s271 + $0x60] sm:$0xff] %v4960
      %4993 = vst [vmem:[%s271 + $0x68] sm:$0xff] %v4961
      %4994 = vst [vmem:[%s271 + $0x70] sm:$0xff] %v4962
      %4995 = vst [vmem:[%s271 + $0x78] sm:$0xff] %v4963
      %4996 = vst [vmem:[%s271 + $0x80] sm:$0xff] %v4964
      %4997 = vst [vmem:[%s271 + $0x88] sm:$0xff] %v4965
      %4998 = vst [vmem:[%s271 + $0x90] sm:$0xff] %v4966
      %4999 = vst [vmem:[%s271 + $0x98] sm:$0xff] %v4967
      %5000 = vst [vmem:[%s271 + $0xa0] sm:$0xff] %v4968
      %5001 = vst [vmem:[%s271 + $0xa8] sm:$0xff] %v4969
      %5002 = vst [vmem:[%s271 + $0xb0] sm:$0xff] %v4970
      %5003 = vst [vmem:[%s271 + $0xb8] sm:$0xff] %v4971
      %5004 = vst [vmem:[%s271 + $0xc0] sm:$0xff] %v4972
      %5005 = vst [vmem:[%s271 + $0xc8] sm:$0xff] %v4973
      %5006 = vst [vmem:[%s271 + $0xd0] sm:$0xff] %v4974
      %5007 = vst [vmem:[%s271 + $0xd8] sm:$0xff] %v4975
      %5008 = vst [vmem:[%s271 + $0xe0] sm:$0xff] %v4976
      %5009 = vst [vmem:[%s271 + $0xe8] sm:$0xff] %v4977
      %5010 = vst [vmem:[%s271 + $0xf0] sm:$0xff] %v4978
      %5011 = vst [vmem:[%s271 + $0xf8] sm:$0xff] %v4979
      %p5012 = scmp.lt.s32.totalorder %s17, 1
      %s5013 = scalar_select %p5012, %s17, 1
      %s5014 = smul.addr %s5013, 32
      %s5015 = smul.addr %s5014, 8
      %s5016 = scalar_lea.vmem %s6, %s5015
      // Predicated region
      $region45: #{up_forward.1} parent=43 // pred_check
        %p5017 = pneg %p171
      $region46: #{up_forward.1} parent=43 // pred_check_branch
        %5019 = sbr.rel (%p5017) target = $region48
      $region47: #{up_forward.1} parent=43 // pred_region
        _
      $region48: #{up_forward.1} parent=43 // pred_fallthru
        _
    $region44: #{up_forward.1} parent=5 // pred_fallthru
      _
    %p5020 = scmp.le.s32.totalorder 2, %s12
    // Predicated region
    $region49: #{up_forward.1} parent=5 // pred_check
      %p5021 = pneg %p5020
    $region50: #{up_forward.1} parent=5 // pred_check_branch
      %5023 = sbr.rel (%p5021) target = $region52
    $region51: #{up_forward.1} parent=5 // pred_region
      %s5024 = ssub.s32 %s12, 2
      // Predicated region
      $region53: #{up_forward.1} parent=51 // pred_check
        %p5025 = pneg %p177
      $region54: #{up_forward.1} parent=51 // pred_check_branch
        %5027 = sbr.rel (%p5025) target = $region56
      $region55: #{up_forward.1} parent=51 // pred_region
        %p5028 = scmp.lt.s32.totalorder %s18, 1
        %s5029 = scalar_select %p5028, %s18, 1
        %s5030 = smul.addr %s5029, 32
        %s5031 = smul.addr %s5030, 8
        %s5032 = scalar_lea.vmem %s6, %s5031
      $region56: #{up_forward.1} parent=51 // pred_fallthru
        _
    $region52: #{up_forward.1} parent=5 // pred_fallthru
      _
  $region6: #{up_forward.1} parent=0 // loop_footer
    %s16 = sadd.s32 1, %s12
  $region7: #{up_forward.1} parent=0 // loop_footer_branch
    %11 = sbr.rel target = $region3
  $region8: #{up_forward.1} parent=0 // loop_exit
    _

</llo_original>
